<compile_context>
chip_gen: v7x
topology: tpu7x:2x2x1
jax: 0.10.0
libtpu: 0.0.40
codegen_flags: <defaults>
</compile_context>

<pallas_src>
import functools

import jax
import jax.numpy as jnp
from jax.experimental import pallas as pl
from jax.experimental.pallas import tpu as pltpu

LANE = 128


def _round_up(x, m):
    return ((x + m - 1) // m) * m


def _pick_tile(n, max_tile=512, align=8):
    """Largest divisor of n that is a multiple of `align` and <= max_tile.

    Callers always pass n that is a multiple of `align` (batch is padded), so
    at least `align` is found and we never fall back to a VMEM-blowing full
    dimension for large n.  For small n (<= max_tile) the full dim is legal.
    """
    if n <= max_tile:
        return n
    t = (max_tile // align) * align
    while t >= align:
        if n % t == 0:
            return t
        t -= align
    return n


def _pick_time_chunk(t, max_chunk=16):
    """Largest divisor of T that is <= max_chunk (worst case 1)."""
    if t <= max_chunk:
        return t
    for c in range(max_chunk, 0, -1):
        if t % c == 0:
            return c
    return 1


# --------------------- input projection (hoisted matmul) --------------------
def _input_proj_kernel(x_ref, w_ref, b_ref, out_ref):
    acc = jnp.dot(x_ref[...].astype(jnp.bfloat16), w_ref[...],
                  preferred_element_type=jnp.float32)
    out_ref[...] = (acc + b_ref[...]).astype(out_ref.dtype)


def input_projection(x2d, w_cat, bias_cat):
    """x2d: (M, nIn); w_cat: (nIn, 8Hp) bf16; bias_cat: (1, 8Hp) f32.

    Returns (M, 8Hp) bf16 gate pre-activations, forward direction in lanes
    [0:4Hp], backward in [4Hp:8Hp].  x is read from HBM once.
    """
    M, nIn = x2d.shape
    G2 = w_cat.shape[1]
    tm = _pick_tile(M, max_tile=512)
    return pl.pallas_call(
        _input_proj_kernel,
        out_shape=jax.ShapeDtypeStruct((M, G2), jnp.bfloat16),
        grid=(M // tm,),
        in_specs=[
            pl.BlockSpec((tm, nIn), lambda m: (m, 0)),
            pl.BlockSpec((nIn, G2), lambda m: (0, 0)),
            pl.BlockSpec((1, G2), lambda m: (0, 0)),
        ],
        out_specs=pl.BlockSpec((tm, G2), lambda m: (m, 0)),
        compiler_params=pltpu.CompilerParams(
            dimension_semantics=("parallel",)),
    )(x2d, w_cat, bias_cat)


# ------------------------- recurrent (sequential) kernel ---------------------
def _bilstm_recurrent_kernel(gates_ref, whh_ref, out_ref, h_sc, c_sc, *, TC, Hp):
    # grid = (direction, batch_tile, time_chunk); the time-chunk axis is
    # "arbitrary" so h/c scratch carries the recurrence across chunks.
    is_bwd = pl.program_id(0) == 1

    @pl.when(pl.program_id(2) == 0)
    def _():
        h_sc[...] = jnp.zeros_like(h_sc)
        c_sc[...] = jnp.zeros_like(c_sc)

    def step(t, carry):
        # backward direction: reversed local time (chunk order is reversed in
        # the index_map, so (chunk, local) together walk T-1 .. 0).
        tt = jnp.where(is_bwd, TC - 1 - t, t)
        g = gates_ref[tt].astype(jnp.float32) + jnp.dot(
            h_sc[...].astype(jnp.bfloat16), whh_ref[...],
            preferred_element_type=jnp.float32)
        # Gate columns were reordered to (i, f, o, g) at prep time: one
        # contiguous sigmoid (written as tanh -> single EUP push) over 3*Hp
        # lanes, one tanh over the last Hp lanes.
        s = 0.5 * jnp.tanh(0.5 * g[:, :3 * Hp]) + 0.5
        i_g = s[:, 0 * Hp:1 * Hp]
        f_g = s[:, 1 * Hp:2 * Hp]
        o_g = s[:, 2 * Hp:3 * Hp]
        g_g = jnp.tanh(g[:, 3 * Hp:4 * Hp])
        c_new = f_g * c_sc[...] + i_g * g_g
        h_new = o_g * jnp.tanh(c_new)
        c_sc[...] = c_new
        h_sc[...] = h_new
        out_ref[tt] = h_new.astype(out_ref.dtype)
        return carry

    # unroll: gives the scheduler visibility across the short in-chunk loop.
    jax.lax.fori_loop(0, TC, step, 0, unroll=True)


def bilstm_recurrence(gates, w_hh_p):
    """gates: (T, Bp, 8Hp) bf16; w_hh_p: (2, Hp, 4Hp) bf16.

    Returns hidden states (T, Bp, 2Hp) bf16 with forward in lanes [0:Hp] and
    backward in [Hp:2Hp] (so the downstream concat is free).
    """
    T, Bp, G2 = gates.shape
    G = G2 // 2
    Hp = G // 4
    tb = _pick_tile(Bp, max_tile=256)
    tc_len = _pick_time_chunk(T, max_chunk=16)
    n_chunks = T // tc_len

    def time_block(d, c):
        # forward: chunk c; backward: chunk n_chunks-1-c (pure int arithmetic).
        return (1 - d) * c + d * (n_chunks - 1 - c)

    kernel = functools.partial(_bilstm_recurrent_kernel, TC=tc_len, Hp=Hp)
    return pl.pallas_call(
        kernel,
        out_shape=jax.ShapeDtypeStruct((T, Bp, 2 * Hp), jnp.bfloat16),
        grid=(2, Bp // tb, n_chunks),
        in_specs=[
            pl.BlockSpec((tc_len, tb, G),
                         lambda d, b, c: (time_block(d, c), b, d)),
            pl.BlockSpec((None, Hp, G), lambda d, b, c: (d, 0, 0)),
        ],
        out_specs=pl.BlockSpec((tc_len, tb, Hp),
                               lambda d, b, c: (time_block(d, c), b, d)),
        scratch_shapes=[
            pltpu.VMEM((tb, Hp), jnp.float32),  # h state (f32)
            pltpu.VMEM((tb, Hp), jnp.float32),  # c state (f32)
        ],
        compiler_params=pltpu.CompilerParams(
            dimension_semantics=("parallel", "parallel", "arbitrary"),
            vmem_limit_bytes=48 * 1024 * 1024),
    )(gates, w_hh_p)


# ------------------ fused concat + Linear embedding kernel -------------------
def _embed_kernel(h_ref, w_ref, b_ref, out_ref):
    acc = jnp.dot(h_ref[...], w_ref[...], preferred_element_type=jnp.float32)
    out_ref[...] = (acc + b_ref[...]).astype(out_ref.dtype)


def fused_embedding(hs, w_cat, b_p, out_dtype):
    """hs: (M, 2Hp) bf16; w_cat: (2Hp, nOutP) bf16; b_p: (1, nOutP) f32.

    Single K=2Hp matmul (concat already free in the lane layout); nOutP is a
    multiple of 128 so the output store is lane-dense.
    """
    M, K = hs.shape
    nOutP = w_cat.shape[1]
    tm = _pick_tile(M, max_tile=512)
    return pl.pallas_call(
        _embed_kernel,
        out_shape=jax.ShapeDtypeStruct((M, nOutP), out_dtype),
        grid=(M // tm,),
        in_specs=[
            pl.BlockSpec((tm, K), lambda m: (m, 0)),
            pl.BlockSpec((K, nOutP), lambda m: (0, 0)),
            pl.BlockSpec((1, nOutP), lambda m: (0, 0)),
        ],
        out_specs=pl.BlockSpec((tm, nOutP), lambda m: (m, 0)),
        compiler_params=pltpu.CompilerParams(
            dimension_semantics=("parallel",)),
    )(hs, w_cat, b_p)


# ----------------------------- parameter prep --------------------------------
def prepare_params(params):
    """Pad each gate to Hp=round_up(H,128) lanes, reorder gates (i,f,g,o) ->
    (i,f,o,g), fold biases, concat direction weights, pad nOut to 128, and
    pre-cast matmul weights to bf16."""
    H = params["w_hh_f"].shape[1]
    nOut = params["w_emb"].shape[0]
    Hp = _round_up(H, LANE)
    nOutP = _round_up(nOut, LANE)

    def gate_pad(w):  # (4H, X), rows stacked (i,f,g,o) -> (4Hp, X) as (i,f,o,g)
        X = w.shape[1]
        w4 = w.reshape(4, H, X)
        w4 = jnp.stack([w4[0], w4[1], w4[3], w4[2]])
        w4 = jnp.pad(w4, ((0, 0), (0, Hp - H), (0, 0)))
        return w4.reshape(4 * Hp, X)

    def direction(w_ih, w_hh, b_ih, b_hh):
        w_ih_p = gate_pad(w_ih).T                                    # (nIn, 4Hp)
        w_hh_p = jnp.pad(gate_pad(w_hh), ((0, 0), (0, Hp - H))).T    # (Hp, 4Hp)
        b = (b_ih + b_hh).reshape(4, H)
        b = jnp.stack([b[0], b[1], b[3], b[2]])
        b = jnp.pad(b, ((0, 0), (0, Hp - H))).reshape(1, 4 * Hp)     # (1, 4Hp)
        return w_ih_p, w_hh_p, b

    wf, uf, bf = direction(params["w_ih_f"], params["w_hh_f"],
                           params["b_ih_f"], params["b_hh_f"])
    wb, ub, bb = direction(params["w_ih_b"], params["w_hh_b"],
                           params["b_ih_b"], params["b_hh_b"])

    w_emb = params["w_emb"]                                          # (nOut, 2H)
    w1 = jnp.pad(w_emb[:, :H].T, ((0, Hp - H), (0, nOutP - nOut)))   # (Hp, nOutP)
    w2 = jnp.pad(w_emb[:, H:].T, ((0, Hp - H), (0, nOutP - nOut)))   # (Hp, nOutP)

    return dict(
        w_ih=jnp.concatenate([wf, wb], axis=1).astype(jnp.bfloat16),   # (nIn, 8Hp)
        bias=jnp.concatenate([bf, bb], axis=1),                        # (1, 8Hp) f32
        w_hh=jnp.stack([uf, ub]).astype(jnp.bfloat16),                 # (2, Hp, 4Hp)
        w_emb=jnp.concatenate([w1, w2], axis=0).astype(jnp.bfloat16),  # (2Hp, nOutP)
        b_emb=jnp.pad(params["b_emb"], (0, nOutP - nOut)).reshape(1, nOutP),
        Hp=Hp, nOut=nOut, nOutP=nOutP,
    )


# ------------------------- module forward (glue) -----------------------------
def bidirectional_lstm_forward(x, params):
    """Matches BidirectionalLSTM.forward: x (T, B, nIn) -> (T, B, nOut)."""
    T, B, nIn = x.shape
    prep = prepare_params(params)
    Hp, nOut, nOutP = prep["Hp"], prep["nOut"], prep["nOutP"]

    # Pad batch to a multiple of 8 so every row/batch tile is 8-aligned.
    Bp = _round_up(B, 8)
    if Bp != B:
        x = jnp.pad(x, ((0, 0), (0, Bp - B), (0, 0)))

    x2d = x.reshape(T * Bp, nIn)                                      # free reshape
    gates2d = input_projection(x2d, prep["w_ih"], prep["bias"])       # (M, 8Hp) bf16
    gates = gates2d.reshape(T, Bp, 8 * Hp)                            # free reshape

    hidden = bilstm_recurrence(gates, prep["w_hh"])                   # (T, Bp, 2Hp) bf16
    hs = hidden.reshape(T * Bp, 2 * Hp)                               # free reshape

    out2d = fused_embedding(hs, prep["w_emb"], prep["b_emb"], x.dtype)  # (M, nOutP)
    out = out2d.reshape(T, Bp, nOutP)[:, :B, :nOut]
    return out


# ----------------------------- reference (checks) ----------------------------
def _lstm_ref(x, w_ih, w_hh, b_ih, b_hh):
    H = w_hh.shape[1]
    B = x.shape[1]

    def step(carry, x_t):
        h, c = carry
        gates = x_t @ w_ih.T + b_ih + h @ w_hh.T + b_hh
        i, f, g, o = jnp.split(gates, 4, axis=-1)
        i = jax.nn.sigmoid(i)
        f = jax.nn.sigmoid(f)
        g = jnp.tanh(g)
        o = jax.nn.sigmoid(o)
        c = f * c + i * g
        h = o * jnp.tanh(c)
        return (h, c), h

    init = (jnp.zeros((B, H), x.dtype), jnp.zeros((B, H), x.dtype))
    _, hs = jax.lax.scan(step, init, x)
    return hs


def _ref_forward(x, params):
    with jax.default_matmul_precision("highest"):
        ref_f = _lstm_ref(x, params["w_ih_f"], params["w_hh_f"],
                          params["b_ih_f"], params["b_hh_f"])
        ref_b = _lstm_ref(x[::-1], params["w_ih_b"], params["w_hh_b"],
                          params["b_ih_b"], params["b_hh_b"])[::-1]
        rec = jnp.concatenate([ref_f, ref_b], axis=-1)
        T, B, h2 = rec.shape
        out = rec.reshape(T * B, h2) @ params["w_emb"].T + params["b_emb"]
        return out.reshape(T, B, -1)


# ----------------------------- parameter init ---------------------------------
def init_params(key, nIn, nHidden, nOut):
    ks = jax.random.split(key, 10)
    k = 1.0 / (nHidden ** 0.5)

    def u(kk, shape):
        return jax.random.uniform(kk, shape, jnp.float32, -k, k)

    return dict(
        w_ih_f=u(ks[0], (4 * nHidden, nIn)),
        w_hh_f=u(ks[1], (4 * nHidden, nHidden)),
        b_ih_f=u(ks[2], (4 * nHidden,)),
        b_hh_f=u(ks[3], (4 * nHidden,)),
        w_ih_b=u(ks[4], (4 * nHidden, nIn)),
        w_hh_b=u(ks[5], (4 * nHidden, nHidden)),
        b_ih_b=u(ks[6], (4 * nHidden,)),
        b_hh_b=u(ks[7], (4 * nHidden,)),
        w_emb=u(ks[8], (nOut, 2 * nHidden)),
        b_emb=u(ks[9], (nOut,)),
    )


if __name__ == "__main__":
    T, B, nIn, nHidden, nOut = 8, 2, 16, 32, 16

    key = jax.random.PRNGKey(0)
    kx, kp = jax.random.split(key)
    x = jax.random.normal(kx, (T, B, nIn), jnp.float32)
    params = init_params(kp, nIn, nHidden, nOut)

    fwd = jax.jit(bidirectional_lstm_forward)
    out = jax.block_until_ready(fwd(x, params))

    ref = _ref_forward(x, params)
    assert out.shape == (T, B, nOut), out.shape
    # bf16 gate/hidden/weight storage (f32 state + accumulation) -> loosened
    # tolerance vs. the f32 reference.
    err = float(jnp.max(jnp.abs(out - ref)))
    assert err < 3e-2, err

    print("KERNEL_OK")
</pallas_src>

<mosaic_0001>
module attributes {stable_mosaic.version = 11 : i64} {
  func.func @_input_proj_kernel(%arg0: i32, %arg1: memref<64x16xf32, #tpu.memory_space<vmem>>, %arg2: memref<16x1024xbf16, #tpu.memory_space<vmem>>, %arg3: memref<1x1024xf32, #tpu.memory_space<vmem>>, %arg4: memref<64x1024xbf16, #tpu.memory_space<vmem>>) attributes {dimension_semantics = [#tpu.dimension_semantics<parallel>], iteration_bounds = array<i64: 1>, scalar_prefetch = 0 : i64, scratch_operands = 0 : i64, tpu.core_type = #tpu.core_type<tc>, window_params = [{transform_indices = @transform_0, window_bounds = array<i64: 64, 16>}, {pipeline_mode = #tpu.pipeline_mode<synchronous>, transform_indices = @transform_1, window_bounds = array<i64: 16, 1024>}, {pipeline_mode = #tpu.pipeline_mode<synchronous>, transform_indices = @transform_2, window_bounds = array<i64: 1, 1024>}, {transform_indices = @transform_3, window_bounds = array<i64: 64, 1024>}]} {
    %c0 = arith.constant 0 : index
    %c0_0 = arith.constant 0 : index
    %0 = vector.load %arg1[%c0, %c0_0] : memref<64x16xf32, #tpu.memory_space<vmem>>, vector<64x16xf32>
    %1 = arith.truncf %0 : vector<64x16xf32> to vector<64x16xbf16>
    %c0_1 = arith.constant 0 : index
    %c0_2 = arith.constant 0 : index
    %2 = vector.load %arg2[%c0_1, %c0_2] : memref<16x1024xbf16, #tpu.memory_space<vmem>>, vector<16x1024xbf16>
    %cst = arith.constant dense<0.000000e+00> : vector<64x1024xf32>
    %3 = tpu.matmul %1, %2, %cst {dimension_numbers = #tpu.dot_dimension_numbers<[1], [0], [0], [1], [0, 0, 1, 1], [], []>} : vector<64x16xbf16>, vector<16x1024xbf16>, vector<64x1024xf32> -> vector<64x1024xf32>
    %c0_3 = arith.constant 0 : index
    %c0_4 = arith.constant 0 : index
    %4 = vector.load %arg3[%c0_3, %c0_4] : memref<1x1024xf32, #tpu.memory_space<vmem>>, vector<1x1024xf32>
    %5 = vector.broadcast %4 : vector<1x1024xf32> to vector<64x1024xf32>
    %6 = arith.addf %3, %5 : vector<64x1024xf32>
    %7 = arith.truncf %6 : vector<64x1024xf32> to vector<64x1024xbf16>
    %c0_5 = arith.constant 0 : index
    %c0_6 = arith.constant 0 : index
    %8 = vector.load %arg4[%c0_5, %c0_6] : memref<64x1024xbf16, #tpu.memory_space<vmem>>, vector<64x1024xbf16>
    tpu.vector_store %arg4[%c0_5, %c0_6], %7 {strides = array<i32>} : memref<64x1024xbf16, #tpu.memory_space<vmem>>, vector<64x1024xbf16>,
    return
  }
  func.func @transform_0(%arg0: i32) -> (i32, i32) {
    %c0_i32 = arith.constant 0 : i32
    %c0_i32_0 = arith.constant 0 : i32
    return %arg0, %c0_i32 : i32, i32
  }
  func.func @transform_1(%arg0: i32) -> (i32, i32) {
    %c0_i32 = arith.constant 0 : i32
    %c0_i32_0 = arith.constant 0 : i32
    %c0_i32_1 = arith.constant 0 : i32
    return %c0_i32, %c0_i32_0 : i32, i32
  }
  func.func @transform_2(%arg0: i32) -> (i32, i32) {
    %c0_i32 = arith.constant 0 : i32
    %c0_i32_0 = arith.constant 0 : i32
    %c0_i32_1 = arith.constant 0 : i32
    return %c0_i32, %c0_i32_0 : i32, i32
  }
  func.func @transform_3(%arg0: i32) -> (i32, i32) {
    %c0_i32 = arith.constant 0 : i32
    %c0_i32_0 = arith.constant 0 : i32
    return %arg0, %c0_i32 : i32, i32
  }
}

module attributes {stable_mosaic.version = 11 : i64} {
  func.func @_bilstm_recurrent_kernel(%arg0: i32, %arg1: i32, %arg2: i32, %arg3: memref<8x8x512xbf16, #tpu.memory_space<vmem>>, %arg4: memref<1x128x512xbf16, #tpu.memory_space<vmem>>, %arg5: memref<8x8x128xbf16, #tpu.memory_space<vmem>>, %arg6: memref<8x128xf32, #tpu.memory_space<vmem>>, %arg7: memref<8x128xf32, #tpu.memory_space<vmem>>) attributes {dimension_semantics = [#tpu.dimension_semantics<parallel>, #tpu.dimension_semantics<parallel>, #tpu.dimension_semantics<arbitrary>], iteration_bounds = array<i64: 2, 1, 1>, scalar_prefetch = 0 : i64, scratch_operands = 2 : i64, tpu.core_type = #tpu.core_type<tc>, window_params = [{transform_indices = @transform_0, window_bounds = array<i64: 8, 8, 512>}, {transform_indices = @transform_1, window_bounds = array<i64: 1, 128, 512>}, {transform_indices = @transform_2, window_bounds = array<i64: 8, 8, 128>}]} {
    %c1_i32 = arith.constant 1 : i32
    %0 = arith.cmpi eq, %arg0, %c1_i32 : i32
    %c0_i32 = arith.constant 0 : i32
    %1 = arith.cmpi eq, %arg2, %c0_i32 : i32
    %2 = arith.extui %1 : i1 to i32
    %c0_i32_0 = arith.constant 0 : i32
    %3 = arith.cmpi ne, %2, %c0_i32_0 : i32
    scf.if %3 {
      %cst_161 = arith.constant 0.000000e+00 : f32
      %308 = vector.broadcast %cst_161 : f32 to vector<8x128xf32>
      %c0_162 = arith.constant 0 : index
      %c0_163 = arith.constant 0 : index
      %309 = vector.load %arg6[%c0_162, %c0_163] : memref<8x128xf32, #tpu.memory_space<vmem>>, vector<8x128xf32>
      tpu.vector_store %arg6[%c0_162, %c0_163], %308 {strides = array<i32>} : memref<8x128xf32, #tpu.memory_space<vmem>>, vector<8x128xf32>,
      %cst_164 = arith.constant 0.000000e+00 : f32
      %310 = vector.broadcast %cst_164 : f32 to vector<8x128xf32>
      %c0_165 = arith.constant 0 : index
      %c0_166 = arith.constant 0 : index
      %311 = vector.load %arg7[%c0_165, %c0_166] : memref<8x128xf32, #tpu.memory_space<vmem>>, vector<8x128xf32>
      tpu.vector_store %arg7[%c0_165, %c0_166], %310 {strides = array<i32>} : memref<8x128xf32, #tpu.memory_space<vmem>>, vector<8x128xf32>,
    } else {
    }
    %c0_i32_1 = arith.constant 0 : i32
    %c7_i32 = arith.constant 7 : i32
    %4 = arith.subi %c7_i32, %c0_i32_1 : i32
    %5 = arith.select %0, %4, %c0_i32_1 : i32
    %6 = arith.index_cast %5 : i32 to index
    %c0 = arith.constant 0 : index
    %c0_2 = arith.constant 0 : index
    %7 = vector.load %arg3[%6, %c0, %c0_2] : memref<8x8x512xbf16, #tpu.memory_space<vmem>>, vector<1x8x512xbf16>
    %8 = vector.shape_cast %7 : vector<1x8x512xbf16> to vector<8x512xbf16>
    %9 = arith.extf %8 : vector<8x512xbf16> to vector<8x512xf32>
    %c0_3 = arith.constant 0 : index
    %c0_4 = arith.constant 0 : index
    %10 = vector.load %arg6[%c0_3, %c0_4] : memref<8x128xf32, #tpu.memory_space<vmem>>, vector<8x128xf32>
    %11 = arith.truncf %10 : vector<8x128xf32> to vector<8x128xbf16>
    %c0_5 = arith.constant 0 : index
    %c0_6 = arith.constant 0 : index
    %c0_7 = arith.constant 0 : index
    %12 = vector.load %arg4[%c0_5, %c0_6, %c0_7] : memref<1x128x512xbf16, #tpu.memory_space<vmem>>, vector<1x128x512xbf16>
    %13 = vector.shape_cast %12 : vector<1x128x512xbf16> to vector<128x512xbf16>
    %cst = arith.constant dense<0.000000e+00> : vector<8x512xf32>
    %14 = tpu.matmul %11, %13, %cst {dimension_numbers = #tpu.dot_dimension_numbers<[1], [0], [0], [1], [0, 0, 1, 1], [], []>} : vector<8x128xbf16>, vector<128x512xbf16>, vector<8x512xf32> -> vector<8x512xf32>
    %15 = arith.addf %9, %14 : vector<8x512xf32>
    %16 = vector.extract_strided_slice %15 {offsets = [0, 0], sizes = [8, 384], strides = [1, 1]} : vector<8x512xf32> to vector<8x384xf32>
    %cst_8 = arith.constant 5.000000e-01 : f32
    %17 = vector.broadcast %cst_8 : f32 to vector<8x384xf32>
    %18 = arith.mulf %17, %16 : vector<8x384xf32>
    %19 = math.tanh %18 : vector<8x384xf32>
    %cst_9 = arith.constant 5.000000e-01 : f32
    %20 = vector.broadcast %cst_9 : f32 to vector<8x384xf32>
    %21 = arith.mulf %20, %19 : vector<8x384xf32>
    %cst_10 = arith.constant 5.000000e-01 : f32
    %22 = vector.broadcast %cst_10 : f32 to vector<8x384xf32>
    %23 = arith.addf %21, %22 : vector<8x384xf32>
    %24 = vector.extract_strided_slice %23 {offsets = [0, 0], sizes = [8, 128], strides = [1, 1]} : vector<8x384xf32> to vector<8x128xf32>
    %25 = vector.extract_strided_slice %23 {offsets = [0, 128], sizes = [8, 128], strides = [1, 1]} : vector<8x384xf32> to vector<8x128xf32>
    %26 = vector.extract_strided_slice %23 {offsets = [0, 256], sizes = [8, 128], strides = [1, 1]} : vector<8x384xf32> to vector<8x128xf32>
    %27 = vector.extract_strided_slice %15 {offsets = [0, 384], sizes = [8, 128], strides = [1, 1]} : vector<8x512xf32> to vector<8x128xf32>
    %28 = math.tanh %27 : vector<8x128xf32>
    %c0_11 = arith.constant 0 : index
    %c0_12 = arith.constant 0 : index
    %29 = vector.load %arg7[%c0_11, %c0_12] : memref<8x128xf32, #tpu.memory_space<vmem>>, vector<8x128xf32>
    %30 = arith.mulf %25, %29 : vector<8x128xf32>
    %31 = arith.mulf %24, %28 : vector<8x128xf32>
    %32 = arith.addf %30, %31 : vector<8x128xf32>
    %33 = math.tanh %32 : vector<8x128xf32>
    %34 = arith.mulf %26, %33 : vector<8x128xf32>
    %c0_13 = arith.constant 0 : index
    %c0_14 = arith.constant 0 : index
    %35 = vector.load %arg7[%c0_13, %c0_14] : memref<8x128xf32, #tpu.memory_space<vmem>>, vector<8x128xf32>
    tpu.vector_store %arg7[%c0_13, %c0_14], %32 {strides = array<i32>} : memref<8x128xf32, #tpu.memory_space<vmem>>, vector<8x128xf32>,
    %c0_15 = arith.constant 0 : index
    %c0_16 = arith.constant 0 : index
    %36 = vector.load %arg6[%c0_15, %c0_16] : memref<8x128xf32, #tpu.memory_space<vmem>>, vector<8x128xf32>
    tpu.vector_store %arg6[%c0_15, %c0_16], %34 {strides = array<i32>} : memref<8x128xf32, #tpu.memory_space<vmem>>, vector<8x128xf32>,
    %37 = arith.truncf %34 : vector<8x128xf32> to vector<8x128xbf16>
    %38 = arith.index_cast %5 : i32 to index
    %c0_17 = arith.constant 0 : index
    %c0_18 = arith.constant 0 : index
    %39 = vector.load %arg5[%38, %c0_17, %c0_18] : memref<8x8x128xbf16, #tpu.memory_space<vmem>>, vector<1x8x128xbf16>
    %40 = vector.shape_cast %39 : vector<1x8x128xbf16> to vector<8x128xbf16>
    %41 = vector.shape_cast %37 : vector<8x128xbf16> to vector<1x8x128xbf16>
    tpu.vector_store %arg5[%38, %c0_17, %c0_18], %41 {strides = array<i32>} : memref<8x8x128xbf16, #tpu.memory_space<vmem>>, vector<1x8x128xbf16>,
    %c1_i32_19 = arith.constant 1 : i32
    %c7_i32_20 = arith.constant 7 : i32
    %42 = arith.subi %c7_i32_20, %c1_i32_19 : i32
    %43 = arith.select %0, %42, %c1_i32_19 : i32
    %44 = arith.index_cast %43 : i32 to index
    %c0_21 = arith.constant 0 : index
    %c0_22 = arith.constant 0 : index
    %45 = vector.load %arg3[%44, %c0_21, %c0_22] : memref<8x8x512xbf16, #tpu.memory_space<vmem>>, vector<1x8x512xbf16>
    %46 = vector.shape_cast %45 : vector<1x8x512xbf16> to vector<8x512xbf16>
    %47 = arith.extf %46 : vector<8x512xbf16> to vector<8x512xf32>
    %c0_23 = arith.constant 0 : index
    %c0_24 = arith.constant 0 : index
    %48 = vector.load %arg6[%c0_23, %c0_24] : memref<8x128xf32, #tpu.memory_space<vmem>>, vector<8x128xf32>
    %49 = arith.truncf %48 : vector<8x128xf32> to vector<8x128xbf16>
    %c0_25 = arith.constant 0 : index
    %c0_26 = arith.constant 0 : index
    %c0_27 = arith.constant 0 : index
    %50 = vector.load %arg4[%c0_25, %c0_26, %c0_27] : memref<1x128x512xbf16, #tpu.memory_space<vmem>>, vector<1x128x512xbf16>
    %51 = vector.shape_cast %50 : vector<1x128x512xbf16> to vector<128x512xbf16>
    %cst_28 = arith.constant dense<0.000000e+00> : vector<8x512xf32>
    %52 = tpu.matmul %49, %51, %cst_28 {dimension_numbers = #tpu.dot_dimension_numbers<[1], [0], [0], [1], [0, 0, 1, 1], [], []>} : vector<8x128xbf16>, vector<128x512xbf16>, vector<8x512xf32> -> vector<8x512xf32>
    %53 = arith.addf %47, %52 : vector<8x512xf32>
    %54 = vector.extract_strided_slice %53 {offsets = [0, 0], sizes = [8, 384], strides = [1, 1]} : vector<8x512xf32> to vector<8x384xf32>
    %cst_29 = arith.constant 5.000000e-01 : f32
    %55 = vector.broadcast %cst_29 : f32 to vector<8x384xf32>
    %56 = arith.mulf %55, %54 : vector<8x384xf32>
    %57 = math.tanh %56 : vector<8x384xf32>
    %cst_30 = arith.constant 5.000000e-01 : f32
    %58 = vector.broadcast %cst_30 : f32 to vector<8x384xf32>
    %59 = arith.mulf %58, %57 : vector<8x384xf32>
    %cst_31 = arith.constant 5.000000e-01 : f32
    %60 = vector.broadcast %cst_31 : f32 to vector<8x384xf32>
    %61 = arith.addf %59, %60 : vector<8x384xf32>
    %62 = vector.extract_strided_slice %61 {offsets = [0, 0], sizes = [8, 128], strides = [1, 1]} : vector<8x384xf32> to vector<8x128xf32>
    %63 = vector.extract_strided_slice %61 {offsets = [0, 128], sizes = [8, 128], strides = [1, 1]} : vector<8x384xf32> to vector<8x128xf32>
    %64 = vector.extract_strided_slice %61 {offsets = [0, 256], sizes = [8, 128], strides = [1, 1]} : vector<8x384xf32> to vector<8x128xf32>
    %65 = vector.extract_strided_slice %53 {offsets = [0, 384], sizes = [8, 128], strides = [1, 1]} : vector<8x512xf32> to vector<8x128xf32>
    %66 = math.tanh %65 : vector<8x128xf32>
    %c0_32 = arith.constant 0 : index
    %c0_33 = arith.constant 0 : index
    %67 = vector.load %arg7[%c0_32, %c0_33] : memref<8x128xf32, #tpu.memory_space<vmem>>, vector<8x128xf32>
    %68 = arith.mulf %63, %67 : vector<8x128xf32>
    %69 = arith.mulf %62, %66 : vector<8x128xf32>
    %70 = arith.addf %68, %69 : vector<8x128xf32>
    %71 = math.tanh %70 : vector<8x128xf32>
    %72 = arith.mulf %64, %71 : vector<8x128xf32>
    %c0_34 = arith.constant 0 : index
    %c0_35 = arith.constant 0 : index
    %73 = vector.load %arg7[%c0_34, %c0_35] : memref<8x128xf32, #tpu.memory_space<vmem>>, vector<8x128xf32>
    tpu.vector_store %arg7[%c0_34, %c0_35], %70 {strides = array<i32>} : memref<8x128xf32, #tpu.memory_space<vmem>>, vector<8x128xf32>,
    %c0_36 = arith.constant 0 : index
    %c0_37 = arith.constant 0 : index
    %74 = vector.load %arg6[%c0_36, %c0_37] : memref<8x128xf32, #tpu.memory_space<vmem>>, vector<8x128xf32>
    tpu.vector_store %arg6[%c0_36, %c0_37], %72 {strides = array<i32>} : memref<8x128xf32, #tpu.memory_space<vmem>>, vector<8x128xf32>,
    %75 = arith.truncf %72 : vector<8x128xf32> to vector<8x128xbf16>
    %76 = arith.index_cast %43 : i32 to index
    %c0_38 = arith.constant 0 : index
    %c0_39 = arith.constant 0 : index
    %77 = vector.load %arg5[%76, %c0_38, %c0_39] : memref<8x8x128xbf16, #tpu.memory_space<vmem>>, vector<1x8x128xbf16>
    %78 = vector.shape_cast %77 : vector<1x8x128xbf16> to vector<8x128xbf16>
    %79 = vector.shape_cast %75 : vector<8x128xbf16> to vector<1x8x128xbf16>
    tpu.vector_store %arg5[%76, %c0_38, %c0_39], %79 {strides = array<i32>} : memref<8x8x128xbf16, #tpu.memory_space<vmem>>, vector<1x8x128xbf16>,
    %c2_i32 = arith.constant 2 : i32
    %c7_i32_40 = arith.constant 7 : i32
    %80 = arith.subi %c7_i32_40, %c2_i32 : i32
    %81 = arith.select %0, %80, %c2_i32 : i32
    %82 = arith.index_cast %81 : i32 to index
    %c0_41 = arith.constant 0 : index
    %c0_42 = arith.constant 0 : index
    %83 = vector.load %arg3[%82, %c0_41, %c0_42] : memref<8x8x512xbf16, #tpu.memory_space<vmem>>, vector<1x8x512xbf16>
    %84 = vector.shape_cast %83 : vector<1x8x512xbf16> to vector<8x512xbf16>
    %85 = arith.extf %84 : vector<8x512xbf16> to vector<8x512xf32>
    %c0_43 = arith.constant 0 : index
    %c0_44 = arith.constant 0 : index
    %86 = vector.load %arg6[%c0_43, %c0_44] : memref<8x128xf32, #tpu.memory_space<vmem>>, vector<8x128xf32>
    %87 = arith.truncf %86 : vector<8x128xf32> to vector<8x128xbf16>
    %c0_45 = arith.constant 0 : index
    %c0_46 = arith.constant 0 : index
    %c0_47 = arith.constant 0 : index
    %88 = vector.load %arg4[%c0_45, %c0_46, %c0_47] : memref<1x128x512xbf16, #tpu.memory_space<vmem>>, vector<1x128x512xbf16>
    %89 = vector.shape_cast %88 : vector<1x128x512xbf16> to vector<128x512xbf16>
    %cst_48 = arith.constant dense<0.000000e+00> : vector<8x512xf32>
    %90 = tpu.matmul %87, %89, %cst_48 {dimension_numbers = #tpu.dot_dimension_numbers<[1], [0], [0], [1], [0, 0, 1, 1], [], []>} : vector<8x128xbf16>, vector<128x512xbf16>, vector<8x512xf32> -> vector<8x512xf32>
    %91 = arith.addf %85, %90 : vector<8x512xf32>
    %92 = vector.extract_strided_slice %91 {offsets = [0, 0], sizes = [8, 384], strides = [1, 1]} : vector<8x512xf32> to vector<8x384xf32>
    %cst_49 = arith.constant 5.000000e-01 : f32
    %93 = vector.broadcast %cst_49 : f32 to vector<8x384xf32>
    %94 = arith.mulf %93, %92 : vector<8x384xf32>
    %95 = math.tanh %94 : vector<8x384xf32>
    %cst_50 = arith.constant 5.000000e-01 : f32
    %96 = vector.broadcast %cst_50 : f32 to vector<8x384xf32>
    %97 = arith.mulf %96, %95 : vector<8x384xf32>
    %cst_51 = arith.constant 5.000000e-01 : f32
    %98 = vector.broadcast %cst_51 : f32 to vector<8x384xf32>
    %99 = arith.addf %97, %98 : vector<8x384xf32>
    %100 = vector.extract_strided_slice %99 {offsets = [0, 0], sizes = [8, 128], strides = [1, 1]} : vector<8x384xf32> to vector<8x128xf32>
    %101 = vector.extract_strided_slice %99 {offsets = [0, 128], sizes = [8, 128], strides = [1, 1]} : vector<8x384xf32> to vector<8x128xf32>
    %102 = vector.extract_strided_slice %99 {offsets = [0, 256], sizes = [8, 128], strides = [1, 1]} : vector<8x384xf32> to vector<8x128xf32>
    %103 = vector.extract_strided_slice %91 {offsets = [0, 384], sizes = [8, 128], strides = [1, 1]} : vector<8x512xf32> to vector<8x128xf32>
    %104 = math.tanh %103 : vector<8x128xf32>
    %c0_52 = arith.constant 0 : index
    %c0_53 = arith.constant 0 : index
    %105 = vector.load %arg7[%c0_52, %c0_53] : memref<8x128xf32, #tpu.memory_space<vmem>>, vector<8x128xf32>
    %106 = arith.mulf %101, %105 : vector<8x128xf32>
    %107 = arith.mulf %100, %104 : vector<8x128xf32>
    %108 = arith.addf %106, %107 : vector<8x128xf32>
    %109 = math.tanh %108 : vector<8x128xf32>
    %110 = arith.mulf %102, %109 : vector<8x128xf32>
    %c0_54 = arith.constant 0 : index
    %c0_55 = arith.constant 0 : index
    %111 = vector.load %arg7[%c0_54, %c0_55] : memref<8x128xf32, #tpu.memory_space<vmem>>, vector<8x128xf32>
    tpu.vector_store %arg7[%c0_54, %c0_55], %108 {strides = array<i32>} : memref<8x128xf32, #tpu.memory_space<vmem>>, vector<8x128xf32>,
    %c0_56 = arith.constant 0 : index
    %c0_57 = arith.constant 0 : index
    %112 = vector.load %arg6[%c0_56, %c0_57] : memref<8x128xf32, #tpu.memory_space<vmem>>, vector<8x128xf32>
    tpu.vector_store %arg6[%c0_56, %c0_57], %110 {strides = array<i32>} : memref<8x128xf32, #tpu.memory_space<vmem>>, vector<8x128xf32>,
    %113 = arith.truncf %110 : vector<8x128xf32> to vector<8x128xbf16>
    %114 = arith.index_cast %81 : i32 to index
    %c0_58 = arith.constant 0 : index
    %c0_59 = arith.constant 0 : index
    %115 = vector.load %arg5[%114, %c0_58, %c0_59] : memref<8x8x128xbf16, #tpu.memory_space<vmem>>, vector<1x8x128xbf16>
    %116 = vector.shape_cast %115 : vector<1x8x128xbf16> to vector<8x128xbf16>
    %117 = vector.shape_cast %113 : vector<8x128xbf16> to vector<1x8x128xbf16>
    tpu.vector_store %arg5[%114, %c0_58, %c0_59], %117 {strides = array<i32>} : memref<8x8x128xbf16, #tpu.memory_space<vmem>>, vector<1x8x128xbf16>,
    %c3_i32 = arith.constant 3 : i32
    %c7_i32_60 = arith.constant 7 : i32
    %118 = arith.subi %c7_i32_60, %c3_i32 : i32
    %119 = arith.select %0, %118, %c3_i32 : i32
    %120 = arith.index_cast %119 : i32 to index
    %c0_61 = arith.constant 0 : index
    %c0_62 = arith.constant 0 : index
    %121 = vector.load %arg3[%120, %c0_61, %c0_62] : memref<8x8x512xbf16, #tpu.memory_space<vmem>>, vector<1x8x512xbf16>
    %122 = vector.shape_cast %121 : vector<1x8x512xbf16> to vector<8x512xbf16>
    %123 = arith.extf %122 : vector<8x512xbf16> to vector<8x512xf32>
    %c0_63 = arith.constant 0 : index
    %c0_64 = arith.constant 0 : index
    %124 = vector.load %arg6[%c0_63, %c0_64] : memref<8x128xf32, #tpu.memory_space<vmem>>, vector<8x128xf32>
    %125 = arith.truncf %124 : vector<8x128xf32> to vector<8x128xbf16>
    %c0_65 = arith.constant 0 : index
    %c0_66 = arith.constant 0 : index
    %c0_67 = arith.constant 0 : index
    %126 = vector.load %arg4[%c0_65, %c0_66, %c0_67] : memref<1x128x512xbf16, #tpu.memory_space<vmem>>, vector<1x128x512xbf16>
    %127 = vector.shape_cast %126 : vector<1x128x512xbf16> to vector<128x512xbf16>
    %cst_68 = arith.constant dense<0.000000e+00> : vector<8x512xf32>
    %128 = tpu.matmul %125, %127, %cst_68 {dimension_numbers = #tpu.dot_dimension_numbers<[1], [0], [0], [1], [0, 0, 1, 1], [], []>} : vector<8x128xbf16>, vector<128x512xbf16>, vector<8x512xf32> -> vector<8x512xf32>
    %129 = arith.addf %123, %128 : vector<8x512xf32>
    %130 = vector.extract_strided_slice %129 {offsets = [0, 0], sizes = [8, 384], strides = [1, 1]} : vector<8x512xf32> to vector<8x384xf32>
    %cst_69 = arith.constant 5.000000e-01 : f32
    %131 = vector.broadcast %cst_69 : f32 to vector<8x384xf32>
    %132 = arith.mulf %131, %130 : vector<8x384xf32>
    %133 = math.tanh %132 : vector<8x384xf32>
    %cst_70 = arith.constant 5.000000e-01 : f32
    %134 = vector.broadcast %cst_70 : f32 to vector<8x384xf32>
    %135 = arith.mulf %134, %133 : vector<8x384xf32>
    %cst_71 = arith.constant 5.000000e-01 : f32
    %136 = vector.broadcast %cst_71 : f32 to vector<8x384xf32>
    %137 = arith.addf %135, %136 : vector<8x384xf32>
    %138 = vector.extract_strided_slice %137 {offsets = [0, 0], sizes = [8, 128], strides = [1, 1]} : vector<8x384xf32> to vector<8x128xf32>
    %139 = vector.extract_strided_slice %137 {offsets = [0, 128], sizes = [8, 128], strides = [1, 1]} : vector<8x384xf32> to vector<8x128xf32>
    %140 = vector.extract_strided_slice %137 {offsets = [0, 256], sizes = [8, 128], strides = [1, 1]} : vector<8x384xf32> to vector<8x128xf32>
    %141 = vector.extract_strided_slice %129 {offsets = [0, 384], sizes = [8, 128], strides = [1, 1]} : vector<8x512xf32> to vector<8x128xf32>
    %142 = math.tanh %141 : vector<8x128xf32>
    %c0_72 = arith.constant 0 : index
    %c0_73 = arith.constant 0 : index
    %143 = vector.load %arg7[%c0_72, %c0_73] : memref<8x128xf32, #tpu.memory_space<vmem>>, vector<8x128xf32>
    %144 = arith.mulf %139, %143 : vector<8x128xf32>
    %145 = arith.mulf %138, %142 : vector<8x128xf32>
    %146 = arith.addf %144, %145 : vector<8x128xf32>
    %147 = math.tanh %146 : vector<8x128xf32>
    %148 = arith.mulf %140, %147 : vector<8x128xf32>
    %c0_74 = arith.constant 0 : index
    %c0_75 = arith.constant 0 : index
    %149 = vector.load %arg7[%c0_74, %c0_75] : memref<8x128xf32, #tpu.memory_space<vmem>>, vector<8x128xf32>
    tpu.vector_store %arg7[%c0_74, %c0_75], %146 {strides = array<i32>} : memref<8x128xf32, #tpu.memory_space<vmem>>, vector<8x128xf32>,
    %c0_76 = arith.constant 0 : index
    %c0_77 = arith.constant 0 : index
    %150 = vector.load %arg6[%c0_76, %c0_77] : memref<8x128xf32, #tpu.memory_space<vmem>>, vector<8x128xf32>
    tpu.vector_store %arg6[%c0_76, %c0_77], %148 {strides = array<i32>} : memref<8x128xf32, #tpu.memory_space<vmem>>, vector<8x128xf32>,
    %151 = arith.truncf %148 : vector<8x128xf32> to vector<8x128xbf16>
    %152 = arith.index_cast %119 : i32 to index
    %c0_78 = arith.constant 0 : index
    %c0_79 = arith.constant 0 : index
    %153 = vector.load %arg5[%152, %c0_78, %c0_79] : memref<8x8x128xbf16, #tpu.memory_space<vmem>>, vector<1x8x128xbf16>
    %154 = vector.shape_cast %153 : vector<1x8x128xbf16> to vector<8x128xbf16>
    %155 = vector.shape_cast %151 : vector<8x128xbf16> to vector<1x8x128xbf16>
    tpu.vector_store %arg5[%152, %c0_78, %c0_79], %155 {strides = array<i32>} : memref<8x8x128xbf16, #tpu.memory_space<vmem>>, vector<1x8x128xbf16>,
    %c4_i32 = arith.constant 4 : i32
    %c7_i32_80 = arith.constant 7 : i32
    %156 = arith.subi %c7_i32_80, %c4_i32 : i32
    %157 = arith.select %0, %156, %c4_i32 : i32
    %158 = arith.index_cast %157 : i32 to index
    %c0_81 = arith.constant 0 : index
    %c0_82 = arith.constant 0 : index
    %159 = vector.load %arg3[%158, %c0_81, %c0_82] : memref<8x8x512xbf16, #tpu.memory_space<vmem>>, vector<1x8x512xbf16>
    %160 = vector.shape_cast %159 : vector<1x8x512xbf16> to vector<8x512xbf16>
    %161 = arith.extf %160 : vector<8x512xbf16> to vector<8x512xf32>
    %c0_83 = arith.constant 0 : index
    %c0_84 = arith.constant 0 : index
    %162 = vector.load %arg6[%c0_83, %c0_84] : memref<8x128xf32, #tpu.memory_space<vmem>>, vector<8x128xf32>
    %163 = arith.truncf %162 : vector<8x128xf32> to vector<8x128xbf16>
    %c0_85 = arith.constant 0 : index
    %c0_86 = arith.constant 0 : index
    %c0_87 = arith.constant 0 : index
    %164 = vector.load %arg4[%c0_85, %c0_86, %c0_87] : memref<1x128x512xbf16, #tpu.memory_space<vmem>>, vector<1x128x512xbf16>
    %165 = vector.shape_cast %164 : vector<1x128x512xbf16> to vector<128x512xbf16>
    %cst_88 = arith.constant dense<0.000000e+00> : vector<8x512xf32>
    %166 = tpu.matmul %163, %165, %cst_88 {dimension_numbers = #tpu.dot_dimension_numbers<[1], [0], [0], [1], [0, 0, 1, 1], [], []>} : vector<8x128xbf16>, vector<128x512xbf16>, vector<8x512xf32> -> vector<8x512xf32>
    %167 = arith.addf %161, %166 : vector<8x512xf32>
    %168 = vector.extract_strided_slice %167 {offsets = [0, 0], sizes = [8, 384], strides = [1, 1]} : vector<8x512xf32> to vector<8x384xf32>
    %cst_89 = arith.constant 5.000000e-01 : f32
    %169 = vector.broadcast %cst_89 : f32 to vector<8x384xf32>
    %170 = arith.mulf %169, %168 : vector<8x384xf32>
    %171 = math.tanh %170 : vector<8x384xf32>
    %cst_90 = arith.constant 5.000000e-01 : f32
    %172 = vector.broadcast %cst_90 : f32 to vector<8x384xf32>
    %173 = arith.mulf %172, %171 : vector<8x384xf32>
    %cst_91 = arith.constant 5.000000e-01 : f32
    %174 = vector.broadcast %cst_91 : f32 to vector<8x384xf32>
    %175 = arith.addf %173, %174 : vector<8x384xf32>
    %176 = vector.extract_strided_slice %175 {offsets = [0, 0], sizes = [8, 128], strides = [1, 1]} : vector<8x384xf32> to vector<8x128xf32>
    %177 = vector.extract_strided_slice %175 {offsets = [0, 128], sizes = [8, 128], strides = [1, 1]} : vector<8x384xf32> to vector<8x128xf32>
    %178 = vector.extract_strided_slice %175 {offsets = [0, 256], sizes = [8, 128], strides = [1, 1]} : vector<8x384xf32> to vector<8x128xf32>
    %179 = vector.extract_strided_slice %167 {offsets = [0, 384], sizes = [8, 128], strides = [1, 1]} : vector<8x512xf32> to vector<8x128xf32>
    %180 = math.tanh %179 : vector<8x128xf32>
    %c0_92 = arith.constant 0 : index
    %c0_93 = arith.constant 0 : index
    %181 = vector.load %arg7[%c0_92, %c0_93] : memref<8x128xf32, #tpu.memory_space<vmem>>, vector<8x128xf32>
    %182 = arith.mulf %177, %181 : vector<8x128xf32>
    %183 = arith.mulf %176, %180 : vector<8x128xf32>
    %184 = arith.addf %182, %183 : vector<8x128xf32>
    %185 = math.tanh %184 : vector<8x128xf32>
    %186 = arith.mulf %178, %185 : vector<8x128xf32>
    %c0_94 = arith.constant 0 : index
    %c0_95 = arith.constant 0 : index
    %187 = vector.load %arg7[%c0_94, %c0_95] : memref<8x128xf32, #tpu.memory_space<vmem>>, vector<8x128xf32>
    tpu.vector_store %arg7[%c0_94, %c0_95], %184 {strides = array<i32>} : memref<8x128xf32, #tpu.memory_space<vmem>>, vector<8x128xf32>,
    %c0_96 = arith.constant 0 : index
    %c0_97 = arith.constant 0 : index
    %188 = vector.load %arg6[%c0_96, %c0_97] : memref<8x128xf32, #tpu.memory_space<vmem>>, vector<8x128xf32>
    tpu.vector_store %arg6[%c0_96, %c0_97], %186 {strides = array<i32>} : memref<8x128xf32, #tpu.memory_space<vmem>>, vector<8x128xf32>,
    %189 = arith.truncf %186 : vector<8x128xf32> to vector<8x128xbf16>
    %190 = arith.index_cast %157 : i32 to index
    %c0_98 = arith.constant 0 : index
    %c0_99 = arith.constant 0 : index
    %191 = vector.load %arg5[%190, %c0_98, %c0_99] : memref<8x8x128xbf16, #tpu.memory_space<vmem>>, vector<1x8x128xbf16>
    %192 = vector.shape_cast %191 : vector<1x8x128xbf16> to vector<8x128xbf16>
    %193 = vector.shape_cast %189 : vector<8x128xbf16> to vector<1x8x128xbf16>
    tpu.vector_store %arg5[%190, %c0_98, %c0_99], %193 {strides = array<i32>} : memref<8x8x128xbf16, #tpu.memory_space<vmem>>, vector<1x8x128xbf16>,
    %c5_i32 = arith.constant 5 : i32
    %c7_i32_100 = arith.constant 7 : i32
    %194 = arith.subi %c7_i32_100, %c5_i32 : i32
    %195 = arith.select %0, %194, %c5_i32 : i32
    %196 = arith.index_cast %195 : i32 to index
    %c0_101 = arith.constant 0 : index
    %c0_102 = arith.constant 0 : index
    %197 = vector.load %arg3[%196, %c0_101, %c0_102] : memref<8x8x512xbf16, #tpu.memory_space<vmem>>, vector<1x8x512xbf16>
    %198 = vector.shape_cast %197 : vector<1x8x512xbf16> to vector<8x512xbf16>
    %199 = arith.extf %198 : vector<8x512xbf16> to vector<8x512xf32>
    %c0_103 = arith.constant 0 : index
    %c0_104 = arith.constant 0 : index
    %200 = vector.load %arg6[%c0_103, %c0_104] : memref<8x128xf32, #tpu.memory_space<vmem>>, vector<8x128xf32>
    %201 = arith.truncf %200 : vector<8x128xf32> to vector<8x128xbf16>
    %c0_105 = arith.constant 0 : index
    %c0_106 = arith.constant 0 : index
    %c0_107 = arith.constant 0 : index
    %202 = vector.load %arg4[%c0_105, %c0_106, %c0_107] : memref<1x128x512xbf16, #tpu.memory_space<vmem>>, vector<1x128x512xbf16>
    %203 = vector.shape_cast %202 : vector<1x128x512xbf16> to vector<128x512xbf16>
    %cst_108 = arith.constant dense<0.000000e+00> : vector<8x512xf32>
    %204 = tpu.matmul %201, %203, %cst_108 {dimension_numbers = #tpu.dot_dimension_numbers<[1], [0], [0], [1], [0, 0, 1, 1], [], []>} : vector<8x128xbf16>, vector<128x512xbf16>, vector<8x512xf32> -> vector<8x512xf32>
    %205 = arith.addf %199, %204 : vector<8x512xf32>
    %206 = vector.extract_strided_slice %205 {offsets = [0, 0], sizes = [8, 384], strides = [1, 1]} : vector<8x512xf32> to vector<8x384xf32>
    %cst_109 = arith.constant 5.000000e-01 : f32
    %207 = vector.broadcast %cst_109 : f32 to vector<8x384xf32>
    %208 = arith.mulf %207, %206 : vector<8x384xf32>
    %209 = math.tanh %208 : vector<8x384xf32>
    %cst_110 = arith.constant 5.000000e-01 : f32
    %210 = vector.broadcast %cst_110 : f32 to vector<8x384xf32>
    %211 = arith.mulf %210, %209 : vector<8x384xf32>
    %cst_111 = arith.constant 5.000000e-01 : f32
    %212 = vector.broadcast %cst_111 : f32 to vector<8x384xf32>
    %213 = arith.addf %211, %212 : vector<8x384xf32>
    %214 = vector.extract_strided_slice %213 {offsets = [0, 0], sizes = [8, 128], strides = [1, 1]} : vector<8x384xf32> to vector<8x128xf32>
    %215 = vector.extract_strided_slice %213 {offsets = [0, 128], sizes = [8, 128], strides = [1, 1]} : vector<8x384xf32> to vector<8x128xf32>
    %216 = vector.extract_strided_slice %213 {offsets = [0, 256], sizes = [8, 128], strides = [1, 1]} : vector<8x384xf32> to vector<8x128xf32>
    %217 = vector.extract_strided_slice %205 {offsets = [0, 384], sizes = [8, 128], strides = [1, 1]} : vector<8x512xf32> to vector<8x128xf32>
    %218 = math.tanh %217 : vector<8x128xf32>
    %c0_112 = arith.constant 0 : index
    %c0_113 = arith.constant 0 : index
    %219 = vector.load %arg7[%c0_112, %c0_113] : memref<8x128xf32, #tpu.memory_space<vmem>>, vector<8x128xf32>
    %220 = arith.mulf %215, %219 : vector<8x128xf32>
    %221 = arith.mulf %214, %218 : vector<8x128xf32>
    %222 = arith.addf %220, %221 : vector<8x128xf32>
    %223 = math.tanh %222 : vector<8x128xf32>
    %224 = arith.mulf %216, %223 : vector<8x128xf32>
    %c0_114 = arith.constant 0 : index
    %c0_115 = arith.constant 0 : index
    %225 = vector.load %arg7[%c0_114, %c0_115] : memref<8x128xf32, #tpu.memory_space<vmem>>, vector<8x128xf32>
    tpu.vector_store %arg7[%c0_114, %c0_115], %222 {strides = array<i32>} : memref<8x128xf32, #tpu.memory_space<vmem>>, vector<8x128xf32>,
    %c0_116 = arith.constant 0 : index
    %c0_117 = arith.constant 0 : index
    %226 = vector.load %arg6[%c0_116, %c0_117] : memref<8x128xf32, #tpu.memory_space<vmem>>, vector<8x128xf32>
    tpu.vector_store %arg6[%c0_116, %c0_117], %224 {strides = array<i32>} : memref<8x128xf32, #tpu.memory_space<vmem>>, vector<8x128xf32>,
    %227 = arith.truncf %224 : vector<8x128xf32> to vector<8x128xbf16>
    %228 = arith.index_cast %195 : i32 to index
    %c0_118 = arith.constant 0 : index
    %c0_119 = arith.constant 0 : index
    %229 = vector.load %arg5[%228, %c0_118, %c0_119] : memref<8x8x128xbf16, #tpu.memory_space<vmem>>, vector<1x8x128xbf16>
    %230 = vector.shape_cast %229 : vector<1x8x128xbf16> to vector<8x128xbf16>
    %231 = vector.shape_cast %227 : vector<8x128xbf16> to vector<1x8x128xbf16>
    tpu.vector_store %arg5[%228, %c0_118, %c0_119], %231 {strides = array<i32>} : memref<8x8x128xbf16, #tpu.memory_space<vmem>>, vector<1x8x128xbf16>,
    %c6_i32 = arith.constant 6 : i32
    %c7_i32_120 = arith.constant 7 : i32
    %232 = arith.subi %c7_i32_120, %c6_i32 : i32
    %233 = arith.select %0, %232, %c6_i32 : i32
    %234 = arith.index_cast %233 : i32 to index
    %c0_121 = arith.constant 0 : index
    %c0_122 = arith.constant 0 : index
    %235 = vector.load %arg3[%234, %c0_121, %c0_122] : memref<8x8x512xbf16, #tpu.memory_space<vmem>>, vector<1x8x512xbf16>
    %236 = vector.shape_cast %235 : vector<1x8x512xbf16> to vector<8x512xbf16>
    %237 = arith.extf %236 : vector<8x512xbf16> to vector<8x512xf32>
    %c0_123 = arith.constant 0 : index
    %c0_124 = arith.constant 0 : index
    %238 = vector.load %arg6[%c0_123, %c0_124] : memref<8x128xf32, #tpu.memory_space<vmem>>, vector<8x128xf32>
    %239 = arith.truncf %238 : vector<8x128xf32> to vector<8x128xbf16>
    %c0_125 = arith.constant 0 : index
    %c0_126 = arith.constant 0 : index
    %c0_127 = arith.constant 0 : index
    %240 = vector.load %arg4[%c0_125, %c0_126, %c0_127] : memref<1x128x512xbf16, #tpu.memory_space<vmem>>, vector<1x128x512xbf16>
    %241 = vector.shape_cast %240 : vector<1x128x512xbf16> to vector<128x512xbf16>
    %cst_128 = arith.constant dense<0.000000e+00> : vector<8x512xf32>
    %242 = tpu.matmul %239, %241, %cst_128 {dimension_numbers = #tpu.dot_dimension_numbers<[1], [0], [0], [1], [0, 0, 1, 1], [], []>} : vector<8x128xbf16>, vector<128x512xbf16>, vector<8x512xf32> -> vector<8x512xf32>
    %243 = arith.addf %237, %242 : vector<8x512xf32>
    %244 = vector.extract_strided_slice %243 {offsets = [0, 0], sizes = [8, 384], strides = [1, 1]} : vector<8x512xf32> to vector<8x384xf32>
    %cst_129 = arith.constant 5.000000e-01 : f32
    %245 = vector.broadcast %cst_129 : f32 to vector<8x384xf32>
    %246 = arith.mulf %245, %244 : vector<8x384xf32>
    %247 = math.tanh %246 : vector<8x384xf32>
    %cst_130 = arith.constant 5.000000e-01 : f32
    %248 = vector.broadcast %cst_130 : f32 to vector<8x384xf32>
    %249 = arith.mulf %248, %247 : vector<8x384xf32>
    %cst_131 = arith.constant 5.000000e-01 : f32
    %250 = vector.broadcast %cst_131 : f32 to vector<8x384xf32>
    %251 = arith.addf %249, %250 : vector<8x384xf32>
    %252 = vector.extract_strided_slice %251 {offsets = [0, 0], sizes = [8, 128], strides = [1, 1]} : vector<8x384xf32> to vector<8x128xf32>
    %253 = vector.extract_strided_slice %251 {offsets = [0, 128], sizes = [8, 128], strides = [1, 1]} : vector<8x384xf32> to vector<8x128xf32>
    %254 = vector.extract_strided_slice %251 {offsets = [0, 256], sizes = [8, 128], strides = [1, 1]} : vector<8x384xf32> to vector<8x128xf32>
    %255 = vector.extract_strided_slice %243 {offsets = [0, 384], sizes = [8, 128], strides = [1, 1]} : vector<8x512xf32> to vector<8x128xf32>
    %256 = math.tanh %255 : vector<8x128xf32>
    %c0_132 = arith.constant 0 : index
    %c0_133 = arith.constant 0 : index
    %257 = vector.load %arg7[%c0_132, %c0_133] : memref<8x128xf32, #tpu.memory_space<vmem>>, vector<8x128xf32>
    %258 = arith.mulf %253, %257 : vector<8x128xf32>
    %259 = arith.mulf %252, %256 : vector<8x128xf32>
    %260 = arith.addf %258, %259 : vector<8x128xf32>
    %261 = math.tanh %260 : vector<8x128xf32>
    %262 = arith.mulf %254, %261 : vector<8x128xf32>
    %c0_134 = arith.constant 0 : index
    %c0_135 = arith.constant 0 : index
    %263 = vector.load %arg7[%c0_134, %c0_135] : memref<8x128xf32, #tpu.memory_space<vmem>>, vector<8x128xf32>
    tpu.vector_store %arg7[%c0_134, %c0_135], %260 {strides = array<i32>} : memref<8x128xf32, #tpu.memory_space<vmem>>, vector<8x128xf32>,
    %c0_136 = arith.constant 0 : index
    %c0_137 = arith.constant 0 : index
    %264 = vector.load %arg6[%c0_136, %c0_137] : memref<8x128xf32, #tpu.memory_space<vmem>>, vector<8x128xf32>
    tpu.vector_store %arg6[%c0_136, %c0_137], %262 {strides = array<i32>} : memref<8x128xf32, #tpu.memory_space<vmem>>, vector<8x128xf32>,
    %265 = arith.truncf %262 : vector<8x128xf32> to vector<8x128xbf16>
    %266 = arith.index_cast %233 : i32 to index
    %c0_138 = arith.constant 0 : index
    %c0_139 = arith.constant 0 : index
    %267 = vector.load %arg5[%266, %c0_138, %c0_139] : memref<8x8x128xbf16, #tpu.memory_space<vmem>>, vector<1x8x128xbf16>
    %268 = vector.shape_cast %267 : vector<1x8x128xbf16> to vector<8x128xbf16>
    %269 = vector.shape_cast %265 : vector<8x128xbf16> to vector<1x8x128xbf16>
    tpu.vector_store %arg5[%266, %c0_138, %c0_139], %269 {strides = array<i32>} : memref<8x8x128xbf16, #tpu.memory_space<vmem>>, vector<1x8x128xbf16>,
    %c7_i32_140 = arith.constant 7 : i32
    %c7_i32_141 = arith.constant 7 : i32
    %270 = arith.subi %c7_i32_141, %c7_i32_140 : i32
    %271 = arith.select %0, %270, %c7_i32_140 : i32
    %272 = arith.index_cast %271 : i32 to index
    %c0_142 = arith.constant 0 : index
    %c0_143 = arith.constant 0 : index
    %273 = vector.load %arg3[%272, %c0_142, %c0_143] : memref<8x8x512xbf16, #tpu.memory_space<vmem>>, vector<1x8x512xbf16>
    %274 = vector.shape_cast %273 : vector<1x8x512xbf16> to vector<8x512xbf16>
    %275 = arith.extf %274 : vector<8x512xbf16> to vector<8x512xf32>
    %c0_144 = arith.constant 0 : index
    %c0_145 = arith.constant 0 : index
    %276 = vector.load %arg6[%c0_144, %c0_145] : memref<8x128xf32, #tpu.memory_space<vmem>>, vector<8x128xf32>
    %277 = arith.truncf %276 : vector<8x128xf32> to vector<8x128xbf16>
    %c0_146 = arith.constant 0 : index
    %c0_147 = arith.constant 0 : index
    %c0_148 = arith.constant 0 : index
    %278 = vector.load %arg4[%c0_146, %c0_147, %c0_148] : memref<1x128x512xbf16, #tpu.memory_space<vmem>>, vector<1x128x512xbf16>
    %279 = vector.shape_cast %278 : vector<1x128x512xbf16> to vector<128x512xbf16>
    %cst_149 = arith.constant dense<0.000000e+00> : vector<8x512xf32>
    %280 = tpu.matmul %277, %279, %cst_149 {dimension_numbers = #tpu.dot_dimension_numbers<[1], [0], [0], [1], [0, 0, 1, 1], [], []>} : vector<8x128xbf16>, vector<128x512xbf16>, vector<8x512xf32> -> vector<8x512xf32>
    %281 = arith.addf %275, %280 : vector<8x512xf32>
    %282 = vector.extract_strided_slice %281 {offsets = [0, 0], sizes = [8, 384], strides = [1, 1]} : vector<8x512xf32> to vector<8x384xf32>
    %cst_150 = arith.constant 5.000000e-01 : f32
    %283 = vector.broadcast %cst_150 : f32 to vector<8x384xf32>
    %284 = arith.mulf %283, %282 : vector<8x384xf32>
    %285 = math.tanh %284 : vector<8x384xf32>
    %cst_151 = arith.constant 5.000000e-01 : f32
    %286 = vector.broadcast %cst_151 : f32 to vector<8x384xf32>
    %287 = arith.mulf %286, %285 : vector<8x384xf32>
    %cst_152 = arith.constant 5.000000e-01 : f32
    %288 = vector.broadcast %cst_152 : f32 to vector<8x384xf32>
    %289 = arith.addf %287, %288 : vector<8x384xf32>
    %290 = vector.extract_strided_slice %289 {offsets = [0, 0], sizes = [8, 128], strides = [1, 1]} : vector<8x384xf32> to vector<8x128xf32>
    %291 = vector.extract_strided_slice %289 {offsets = [0, 128], sizes = [8, 128], strides = [1, 1]} : vector<8x384xf32> to vector<8x128xf32>
    %292 = vector.extract_strided_slice %289 {offsets = [0, 256], sizes = [8, 128], strides = [1, 1]} : vector<8x384xf32> to vector<8x128xf32>
    %293 = vector.extract_strided_slice %281 {offsets = [0, 384], sizes = [8, 128], strides = [1, 1]} : vector<8x512xf32> to vector<8x128xf32>
    %294 = math.tanh %293 : vector<8x128xf32>
    %c0_153 = arith.constant 0 : index
    %c0_154 = arith.constant 0 : index
    %295 = vector.load %arg7[%c0_153, %c0_154] : memref<8x128xf32, #tpu.memory_space<vmem>>, vector<8x128xf32>
    %296 = arith.mulf %291, %295 : vector<8x128xf32>
    %297 = arith.mulf %290, %294 : vector<8x128xf32>
    %298 = arith.addf %296, %297 : vector<8x128xf32>
    %299 = math.tanh %298 : vector<8x128xf32>
    %300 = arith.mulf %292, %299 : vector<8x128xf32>
    %c0_155 = arith.constant 0 : index
    %c0_156 = arith.constant 0 : index
    %301 = vector.load %arg7[%c0_155, %c0_156] : memref<8x128xf32, #tpu.memory_space<vmem>>, vector<8x128xf32>
    tpu.vector_store %arg7[%c0_155, %c0_156], %298 {strides = array<i32>} : memref<8x128xf32, #tpu.memory_space<vmem>>, vector<8x128xf32>,
    %c0_157 = arith.constant 0 : index
    %c0_158 = arith.constant 0 : index
    %302 = vector.load %arg6[%c0_157, %c0_158] : memref<8x128xf32, #tpu.memory_space<vmem>>, vector<8x128xf32>
    tpu.vector_store %arg6[%c0_157, %c0_158], %300 {strides = array<i32>} : memref<8x128xf32, #tpu.memory_space<vmem>>, vector<8x128xf32>,
    %303 = arith.truncf %300 : vector<8x128xf32> to vector<8x128xbf16>
    %304 = arith.index_cast %271 : i32 to index
    %c0_159 = arith.constant 0 : index
    %c0_160 = arith.constant 0 : index
    %305 = vector.load %arg5[%304, %c0_159, %c0_160] : memref<8x8x128xbf16, #tpu.memory_space<vmem>>, vector<1x8x128xbf16>
    %306 = vector.shape_cast %305 : vector<1x8x128xbf16> to vector<8x128xbf16>
    %307 = vector.shape_cast %303 : vector<8x128xbf16> to vector<1x8x128xbf16>
    tpu.vector_store %arg5[%304, %c0_159, %c0_160], %307 {strides = array<i32>} : memref<8x8x128xbf16, #tpu.memory_space<vmem>>, vector<1x8x128xbf16>,
    %c8_i32 = arith.constant 8 : i32
    return
  }
  func.func @transform_0(%arg0: i32, %arg1: i32, %arg2: i32) -> (i32, i32, i32) {
    %c1_i32 = arith.constant 1 : i32
    %0 = arith.subi %c1_i32, %arg0 : i32
    %1 = arith.muli %0, %arg2 : i32
    %c0_i32 = arith.constant 0 : i32
    %2 = arith.subi %c0_i32, %arg2 : i32
    %3 = arith.muli %arg0, %2 : i32
    %4 = arith.addi %1, %3 : i32
    %c0_i32_0 = arith.constant 0 : i32
    return %4, %arg1, %arg0 : i32, i32, i32
  }
  func.func @transform_1(%arg0: i32, %arg1: i32, %arg2: i32) -> (i32, i32, i32) {
    %c0_i32 = arith.constant 0 : i32
    %c0_i32_0 = arith.constant 0 : i32
    %c0_i32_1 = arith.constant 0 : i32
    return %arg0, %c0_i32, %c0_i32_0 : i32, i32, i32
  }
  func.func @transform_2(%arg0: i32, %arg1: i32, %arg2: i32) -> (i32, i32, i32) {
    %c1_i32 = arith.constant 1 : i32
    %0 = arith.subi %c1_i32, %arg0 : i32
    %1 = arith.muli %0, %arg2 : i32
    %c0_i32 = arith.constant 0 : i32
    %2 = arith.subi %c0_i32, %arg2 : i32
    %3 = arith.muli %arg0, %2 : i32
    %4 = arith.addi %1, %3 : i32
    %c0_i32_0 = arith.constant 0 : i32
    return %4, %arg1, %arg0 : i32, i32, i32
  }
}

module attributes {stable_mosaic.version = 11 : i64} {
  func.func @_embed_kernel(%arg0: i32, %arg1: memref<64x256xbf16, #tpu.memory_space<vmem>>, %arg2: memref<256x128xbf16, #tpu.memory_space<vmem>>, %arg3: memref<1x128xf32, #tpu.memory_space<vmem>>, %arg4: memref<64x128xf32, #tpu.memory_space<vmem>>) attributes {dimension_semantics = [#tpu.dimension_semantics<parallel>], iteration_bounds = array<i64: 1>, scalar_prefetch = 0 : i64, scratch_operands = 0 : i64, tpu.core_type = #tpu.core_type<tc>, window_params = [{transform_indices = @transform_0, window_bounds = array<i64: 64, 256>}, {pipeline_mode = #tpu.pipeline_mode<synchronous>, transform_indices = @transform_1, window_bounds = array<i64: 256, 128>}, {pipeline_mode = #tpu.pipeline_mode<synchronous>, transform_indices = @transform_2, window_bounds = array<i64: 1, 128>}, {transform_indices = @transform_3, window_bounds = array<i64: 64, 128>}]} {
    %c0 = arith.constant 0 : index
    %c0_0 = arith.constant 0 : index
    %0 = vector.load %arg1[%c0, %c0_0] : memref<64x256xbf16, #tpu.memory_space<vmem>>, vector<64x256xbf16>
    %c0_1 = arith.constant 0 : index
    %c0_2 = arith.constant 0 : index
    %1 = vector.load %arg2[%c0_1, %c0_2] : memref<256x128xbf16, #tpu.memory_space<vmem>>, vector<256x128xbf16>
    %cst = arith.constant dense<0.000000e+00> : vector<64x128xf32>
    %2 = tpu.matmul %0, %1, %cst {dimension_numbers = #tpu.dot_dimension_numbers<[1], [0], [0], [1], [0, 0, 1, 1], [], []>} : vector<64x256xbf16>, vector<256x128xbf16>, vector<64x128xf32> -> vector<64x128xf32>
    %c0_3 = arith.constant 0 : index
    %c0_4 = arith.constant 0 : index
    %3 = vector.load %arg3[%c0_3, %c0_4] : memref<1x128xf32, #tpu.memory_space<vmem>>, vector<1x128xf32>
    %4 = vector.broadcast %3 : vector<1x128xf32> to vector<64x128xf32>
    %5 = arith.addf %2, %4 : vector<64x128xf32>
    %c0_5 = arith.constant 0 : index
    %c0_6 = arith.constant 0 : index
    %6 = vector.load %arg4[%c0_5, %c0_6] : memref<64x128xf32, #tpu.memory_space<vmem>>, vector<64x128xf32>
    tpu.vector_store %arg4[%c0_5, %c0_6], %5 {strides = array<i32>} : memref<64x128xf32, #tpu.memory_space<vmem>>, vector<64x128xf32>,
    return
  }
  func.func @transform_0(%arg0: i32) -> (i32, i32) {
    %c0_i32 = arith.constant 0 : i32
    %c0_i32_0 = arith.constant 0 : i32
    return %arg0, %c0_i32 : i32, i32
  }
  func.func @transform_1(%arg0: i32) -> (i32, i32) {
    %c0_i32 = arith.constant 0 : i32
    %c0_i32_0 = arith.constant 0 : i32
    %c0_i32_1 = arith.constant 0 : i32
    return %c0_i32, %c0_i32_0 : i32, i32
  }
  func.func @transform_2(%arg0: i32) -> (i32, i32) {
    %c0_i32 = arith.constant 0 : i32
    %c0_i32_0 = arith.constant 0 : i32
    %c0_i32_1 = arith.constant 0 : i32
    return %c0_i32, %c0_i32_0 : i32, i32
  }
  func.func @transform_3(%arg0: i32) -> (i32, i32) {
    %c0_i32 = arith.constant 0 : i32
    %c0_i32_0 = arith.constant 0 : i32
    return %arg0, %c0_i32 : i32, i32
  }
}

</mosaic_0001>

<llo_original>
// kernel: bidirectional_lstm_forward.3
$region0: #{bidirectional_lstm_forward.3}
  #allocation0 [shape = 'u32[]', space=smem, size = 0x4, offset = 0x4, fixed_abs, tag = 'smem constant byte address 0x4 - core index']
  #allocation1 [shape = 'u32[144,128]{1,0:T(1,128)}', space=vmem, size = 0x12000, scoped, tag = 'internal scratch']
  %s0 = inlined_call_operand.vmem [shape: f32[64,16], index: 0, kind: input, shape index: {}]
  %s1 = inlined_call_operand.vmem [shape: bf16[16,1024], index: 1, kind: input, shape index: {}]
  %s2 = inlined_call_operand.vmem [shape: f32[1,1024], index: 2, kind: input, shape index: {}]
  %s3 = inlined_call_operand.vmem [shape: bf16[64,1024], index: 3, kind: output, shape index: {}]
  %s4 = sld [smem:[#allocation0]]
  $region22: #{bidirectional_lstm_forward.3} parent=0
    _
  %s6 = ssub.s32 1, %s4
  %s7 = scalar_select 0, %s6, %s4
  // Predicated region
  $region2: #{bidirectional_lstm_forward.3} parent=0 // pred_check
    _
  $region3: #{bidirectional_lstm_forward.3} parent=0 // pred_check_branch
    %9 = sbr.rel (0) target = $region5
  $region4: #{bidirectional_lstm_forward.3} parent=0 // pred_region
    _
  $region5: #{bidirectional_lstm_forward.3} parent=0 // pred_fallthru
    _
  // Predicated region
  $region6: #{bidirectional_lstm_forward.3} parent=0 // pred_check
    _
  $region7: #{bidirectional_lstm_forward.3} parent=0 // pred_check_branch
    %11 = sbr.rel (0) target = $region9
  $region8: #{bidirectional_lstm_forward.3} parent=0 // pred_region
    _
  $region9: #{bidirectional_lstm_forward.3} parent=0 // pred_fallthru
    _
  // Predicated region
  $region10: #{bidirectional_lstm_forward.3} parent=0 // pred_check
    _
  $region11: #{bidirectional_lstm_forward.3} parent=0 // pred_check_branch
    %13 = sbr.rel (0) target = $region13
  $region12: #{bidirectional_lstm_forward.3} parent=0 // pred_region
    _
  $region13: #{bidirectional_lstm_forward.3} parent=0 // pred_fallthru
    _
  %v15 = vld [vmem:[%s0] sm:$0xff]
  %v16 = vld [vmem:[%s0 + $0x8] sm:$0xff]
  %v17 = vld [vmem:[%s0 + $0x10] sm:$0xff]
  %v18 = vld [vmem:[%s0 + $0x18] sm:$0xff]
  %v19 = vld [vmem:[%s0 + $0x20] sm:$0xff]
  %v20 = vld [vmem:[%s0 + $0x28] sm:$0xff]
  %v21 = vld [vmem:[%s0 + $0x30] sm:$0xff]
  %v22 = vld [vmem:[%s0 + $0x38] sm:$0xff]
  %v23 = vpack.c.bf16 %v16, %v15
  %v24 = vpack.c.bf16 %v18, %v17
  %v25 = vpack.c.bf16 %v20, %v19
  %v26 = vpack.c.bf16 %v22, %v21
  %v27 = vld [vmem:[%s1] sm:$0xff]
  %v28 = vld [vmem:[%s1 + $0x8] sm:$0xff]
  %v29 = vld [vmem:[%s1 + $0x10] sm:$0xff]
  %v30 = vld [vmem:[%s1 + $0x18] sm:$0xff]
  %v31 = vld [vmem:[%s1 + $0x20] sm:$0xff]
  %v32 = vld [vmem:[%s1 + $0x28] sm:$0xff]
  %v33 = vld [vmem:[%s1 + $0x30] sm:$0xff]
  %v34 = vld [vmem:[%s1 + $0x38] sm:$0xff]
  %v35 = vld [vmem:[%s2] sm:$0xff]
  %v37 = vlaneseq
  %v38 = vshrl.u32 %v37, 7
  %v39 = vsub.s32 0, %v38
  %v40 = vrot.slane %v35, %v39
  %v41 = vlaneseq
  %v42 = vshrl.u32 %v41, 7
  %v43 = vsub.s32 1, %v42
  %v44 = vrot.slane %v35, %v43
  %v45 = vlaneseq
  %v46 = vshrl.u32 %v45, 7
  %v47 = vsub.s32 2, %v46
  %v48 = vrot.slane %v35, %v47
  %v49 = vlaneseq
  %v50 = vshrl.u32 %v49, 7
  %v51 = vsub.s32 3, %v50
  %v52 = vrot.slane %v35, %v51
  %v53 = vlaneseq
  %v54 = vshrl.u32 %v53, 7
  %v55 = vsub.s32 4, %v54
  %v56 = vrot.slane %v35, %v55
  %v57 = vlaneseq
  %v58 = vshrl.u32 %v57, 7
  %v59 = vsub.s32 5, %v58
  %v60 = vrot.slane %v35, %v59
  %v61 = vlaneseq
  %v62 = vshrl.u32 %v61, 7
  %v63 = vsub.s32 6, %v62
  %v64 = vrot.slane %v35, %v63
  %v65 = vlaneseq
  %v66 = vshrl.u32 %v65, 7
  %v67 = vsub.s32 7, %v66
  %v68 = vrot.slane %v35, %v67
  %v85 = vunpack.c.l.b16 %v27
  %v86 = vunpack.c.h.b16 %v27
  %v87 = vunpack.c.l.b16 %v28
  %v88 = vunpack.c.h.b16 %v28
  %v89 = vunpack.c.l.b16 %v29
  %v90 = vunpack.c.h.b16 %v29
  %v91 = vunpack.c.l.b16 %v30
  %v92 = vunpack.c.h.b16 %v30
  %v93 = vunpack.c.l.b16 %v31
  %v94 = vunpack.c.h.b16 %v31
  %v95 = vunpack.c.l.b16 %v32
  %v96 = vunpack.c.h.b16 %v32
  %v97 = vunpack.c.l.b16 %v33
  %v98 = vunpack.c.h.b16 %v33
  %v99 = vunpack.c.l.b16 %v34
  %v100 = vunpack.c.h.b16 %v34
  %v101 = vpack.c.b16 %v93, %v85
  %v102 = vpack.c.b16 %v94, %v86
  %v103 = vpack.c.b16 %v95, %v87
  %v104 = vpack.c.b16 %v96, %v88
  %v105 = vpack.c.b16 %v97, %v89
  %v106 = vpack.c.b16 %v98, %v90
  %v107 = vpack.c.b16 %v99, %v91
  %v108 = vpack.c.b16 %v100, %v92
  %vm117 = vcmask 130048
  %v119 = vsel %vm117, %v23, 0
  %v122 = vsel %vm117, %v24, 0
  %v125 = vsel %vm117, %v25, 0
  %v128 = vsel %vm117, %v26, 0
  %130 = vmatprep.subr.bf16.mxu0 %v102
  %131 = vmatpush1.bf16.msra.mxu0 %v101
  %132 = vmatprep.subr.bf16.mxu0 0
  %133 = vmatpush1.bf16.msra.mxu0 0
  %134 = vmatprep.subr.bf16.mxu0 0
  %135 = vmatpush1.bf16.msra.mxu0 0
  %136 = vmatprep.subr.bf16.mxu0 0
  %137 = vmatpush1.bf16.msra.mxu0 0
  %138 = vmatprep.subr.bf16.mxu0 0
  %139 = vmatpush1.bf16.msra.mxu0 0
  %140 = vmatprep.subr.bf16.mxu0 0
  %141 = vmatpush1.bf16.msra.mxu0 0
  %142 = vmatprep.subr.bf16.mxu0 0
  %143 = vmatpush1.bf16.msra.mxu0 0
  %144 = vmatprep.subr.bf16.mxu0 0
  %145 = vmatpush1.bf16.msra.mxu0 0
  %146 = vmatprep.subr.bf16.mxu0 0
  %147 = vmatpush1.bf16.msra.mxu0 0
  %148 = vmatprep.subr.bf16.mxu0 0
  %149 = vmatpush1.bf16.msra.mxu0 0
  %150 = vmatprep.subr.bf16.mxu0 0
  %151 = vmatpush1.bf16.msra.mxu0 0
  %152 = vmatprep.subr.bf16.mxu0 0
  %153 = vmatpush1.bf16.msra.mxu0 0
  %154 = vmatprep.subr.bf16.mxu0 0
  %155 = vmatpush1.bf16.msra.mxu0 0
  %156 = vmatprep.subr.bf16.mxu0 0
  %157 = vmatpush1.bf16.msra.mxu0 0
  %158 = vmatprep.subr.bf16.mxu0 0
  %159 = vmatpush1.bf16.msra.mxu0 0
  %160 = vmatprep.subr.bf16.mxu0 0
  %161 = vmatpush1.bf16.msra.mxu0 0
  %162 = vmatprep.mubr.bf16.mxu0 0
  %163 = vmatmul.mubr.bf16.gmra.mrb[0].mxu0 %v119
  %v164 = vpop.f32.mrb[0].mxu0
  %v165 = vadd.f32 %v40, %v164
  %v166 = vpop.f32.mrb[0].mxu0
  %v167 = vadd.f32 %v44, %v166
  %v168 = vpop.f32.mrb[0].mxu0
  %v169 = vadd.f32 %v40, %v168
  %v170 = vpop.f32.mrb[0].mxu0
  %v171 = vadd.f32 %v44, %v170
  %172 = vmatprep.mubr.bf16.mxu0 0
  %173 = vmatmul.mubr.bf16.gmra.mrb[0].mxu0 %v122
  %v174 = vpop.f32.mrb[0].mxu0
  %v175 = vadd.f32 %v40, %v174
  %v176 = vpop.f32.mrb[0].mxu0
  %v177 = vadd.f32 %v44, %v176
  %v178 = vpop.f32.mrb[0].mxu0
  %v179 = vadd.f32 %v40, %v178
  %v180 = vpop.f32.mrb[0].mxu0
  %v181 = vadd.f32 %v44, %v180
  %182 = vmatprep.mubr.bf16.mxu0 0
  %183 = vmatmul.mubr.bf16.gmra.mrb[0].mxu0 %v125
  %v184 = vpop.f32.mrb[0].mxu0
  %v185 = vadd.f32 %v40, %v184
  %v186 = vpop.f32.mrb[0].mxu0
  %v187 = vadd.f32 %v44, %v186
  %v188 = vpop.f32.mrb[0].mxu0
  %v189 = vadd.f32 %v40, %v188
  %v190 = vpop.f32.mrb[0].mxu0
  %v191 = vadd.f32 %v44, %v190
  %192 = vmatprep.mubr.bf16.mxu0 0
  %193 = vmatmul.mubr.bf16.gmra.mrb[0].mxu0 %v128
  %v194 = vpop.f32.mrb[0].mxu0
  %v195 = vadd.f32 %v40, %v194
  %v196 = vpop.f32.mrb[0].mxu0
  %v197 = vadd.f32 %v44, %v196
  %v198 = vpop.f32.mrb[0].mxu0
  %v199 = vadd.f32 %v40, %v198
  %v200 = vpop.f32.mrb[0].mxu0
  %v201 = vadd.f32 %v44, %v200
  %202 = vdwg.mxu0
  %203 = vmatprep.subr.bf16.mxu0 %v104
  %204 = vmatpush1.bf16.msra.mxu0 %v103
  %205 = vmatprep.subr.bf16.mxu0 0
  %206 = vmatpush1.bf16.msra.mxu0 0
  %207 = vmatprep.subr.bf16.mxu0 0
  %208 = vmatpush1.bf16.msra.mxu0 0
  %209 = vmatprep.subr.bf16.mxu0 0
  %210 = vmatpush1.bf16.msra.mxu0 0
  %211 = vmatprep.subr.bf16.mxu0 0
  %212 = vmatpush1.bf16.msra.mxu0 0
  %213 = vmatprep.subr.bf16.mxu0 0
  %214 = vmatpush1.bf16.msra.mxu0 0
  %215 = vmatprep.subr.bf16.mxu0 0
  %216 = vmatpush1.bf16.msra.mxu0 0
  %217 = vmatprep.subr.bf16.mxu0 0
  %218 = vmatpush1.bf16.msra.mxu0 0
  %219 = vmatprep.subr.bf16.mxu0 0
  %220 = vmatpush1.bf16.msra.mxu0 0
  %221 = vmatprep.subr.bf16.mxu0 0
  %222 = vmatpush1.bf16.msra.mxu0 0
  %223 = vmatprep.subr.bf16.mxu0 0
  %224 = vmatpush1.bf16.msra.mxu0 0
  %225 = vmatprep.subr.bf16.mxu0 0
  %226 = vmatpush1.bf16.msra.mxu0 0
  %227 = vmatprep.subr.bf16.mxu0 0
  %228 = vmatpush1.bf16.msra.mxu0 0
  %229 = vmatprep.subr.bf16.mxu0 0
  %230 = vmatpush1.bf16.msra.mxu0 0
  %231 = vmatprep.subr.bf16.mxu0 0
  %232 = vmatpush1.bf16.msra.mxu0 0
  %233 = vmatprep.subr.bf16.mxu0 0
  %234 = vmatpush1.bf16.msra.mxu0 0
  %235 = vmatprep.mubr.bf16.mxu0 0
  %236 = vmatmul.mubr.bf16.gmra.mrb[0].mxu0 %v119
  %v237 = vpop.f32.mrb[0].mxu0
  %v238 = vadd.f32 %v48, %v237
  %v239 = vpop.f32.mrb[0].mxu0
  %v240 = vadd.f32 %v52, %v239
  %v241 = vpop.f32.mrb[0].mxu0
  %v242 = vadd.f32 %v48, %v241
  %v243 = vpop.f32.mrb[0].mxu0
  %v244 = vadd.f32 %v52, %v243
  %245 = vmatprep.mubr.bf16.mxu0 0
  %246 = vmatmul.mubr.bf16.gmra.mrb[0].mxu0 %v122
  %v247 = vpop.f32.mrb[0].mxu0
  %v248 = vadd.f32 %v48, %v247
  %v249 = vpop.f32.mrb[0].mxu0
  %v250 = vadd.f32 %v52, %v249
  %v251 = vpop.f32.mrb[0].mxu0
  %v252 = vadd.f32 %v48, %v251
  %v253 = vpop.f32.mrb[0].mxu0
  %v254 = vadd.f32 %v52, %v253
  %255 = vmatprep.mubr.bf16.mxu0 0
  %256 = vmatmul.mubr.bf16.gmra.mrb[0].mxu0 %v125
  %v257 = vpop.f32.mrb[0].mxu0
  %v258 = vadd.f32 %v48, %v257
  %v259 = vpop.f32.mrb[0].mxu0
  %v260 = vadd.f32 %v52, %v259
  %v261 = vpop.f32.mrb[0].mxu0
  %v262 = vadd.f32 %v48, %v261
  %v263 = vpop.f32.mrb[0].mxu0
  %v264 = vadd.f32 %v52, %v263
  %265 = vmatprep.mubr.bf16.mxu0 0
  %266 = vmatmul.mubr.bf16.gmra.mrb[0].mxu0 %v128
  %v267 = vpop.f32.mrb[0].mxu0
  %v268 = vadd.f32 %v48, %v267
  %v269 = vpop.f32.mrb[0].mxu0
  %v270 = vadd.f32 %v52, %v269
  %v271 = vpop.f32.mrb[0].mxu0
  %v272 = vadd.f32 %v48, %v271
  %v273 = vpop.f32.mrb[0].mxu0
  %v274 = vadd.f32 %v52, %v273
  %275 = vdwg.mxu0
  %276 = vmatprep.subr.bf16.mxu0 %v106
  %277 = vmatpush1.bf16.msra.mxu0 %v105
  %278 = vmatprep.subr.bf16.mxu0 0
  %279 = vmatpush1.bf16.msra.mxu0 0
  %280 = vmatprep.subr.bf16.mxu0 0
  %281 = vmatpush1.bf16.msra.mxu0 0
  %282 = vmatprep.subr.bf16.mxu0 0
  %283 = vmatpush1.bf16.msra.mxu0 0
  %284 = vmatprep.subr.bf16.mxu0 0
  %285 = vmatpush1.bf16.msra.mxu0 0
  %286 = vmatprep.subr.bf16.mxu0 0
  %287 = vmatpush1.bf16.msra.mxu0 0
  %288 = vmatprep.subr.bf16.mxu0 0
  %289 = vmatpush1.bf16.msra.mxu0 0
  %290 = vmatprep.subr.bf16.mxu0 0
  %291 = vmatpush1.bf16.msra.mxu0 0
  %292 = vmatprep.subr.bf16.mxu0 0
  %293 = vmatpush1.bf16.msra.mxu0 0
  %294 = vmatprep.subr.bf16.mxu0 0
  %295 = vmatpush1.bf16.msra.mxu0 0
  %296 = vmatprep.subr.bf16.mxu0 0
  %297 = vmatpush1.bf16.msra.mxu0 0
  %298 = vmatprep.subr.bf16.mxu0 0
  %299 = vmatpush1.bf16.msra.mxu0 0
  %300 = vmatprep.subr.bf16.mxu0 0
  %301 = vmatpush1.bf16.msra.mxu0 0
  %302 = vmatprep.subr.bf16.mxu0 0
  %303 = vmatpush1.bf16.msra.mxu0 0
  %304 = vmatprep.subr.bf16.mxu0 0
  %305 = vmatpush1.bf16.msra.mxu0 0
  %306 = vmatprep.subr.bf16.mxu0 0
  %307 = vmatpush1.bf16.msra.mxu0 0
  %308 = vmatprep.mubr.bf16.mxu0 0
  %309 = vmatmul.mubr.bf16.gmra.mrb[0].mxu0 %v119
  %v310 = vpop.f32.mrb[0].mxu0
  %v311 = vadd.f32 %v56, %v310
  %v312 = vpop.f32.mrb[0].mxu0
  %v313 = vadd.f32 %v60, %v312
  %v314 = vpop.f32.mrb[0].mxu0
  %v315 = vadd.f32 %v56, %v314
  %v316 = vpop.f32.mrb[0].mxu0
  %v317 = vadd.f32 %v60, %v316
  %318 = vmatprep.mubr.bf16.mxu0 0
  %319 = vmatmul.mubr.bf16.gmra.mrb[0].mxu0 %v122
  %v320 = vpop.f32.mrb[0].mxu0
  %v321 = vadd.f32 %v56, %v320
  %v322 = vpop.f32.mrb[0].mxu0
  %v323 = vadd.f32 %v60, %v322
  %v324 = vpop.f32.mrb[0].mxu0
  %v325 = vadd.f32 %v56, %v324
  %v326 = vpop.f32.mrb[0].mxu0
  %v327 = vadd.f32 %v60, %v326
  %328 = vmatprep.mubr.bf16.mxu0 0
  %329 = vmatmul.mubr.bf16.gmra.mrb[0].mxu0 %v125
  %v330 = vpop.f32.mrb[0].mxu0
  %v331 = vadd.f32 %v56, %v330
  %v332 = vpop.f32.mrb[0].mxu0
  %v333 = vadd.f32 %v60, %v332
  %v334 = vpop.f32.mrb[0].mxu0
  %v335 = vadd.f32 %v56, %v334
  %v336 = vpop.f32.mrb[0].mxu0
  %v337 = vadd.f32 %v60, %v336
  %338 = vmatprep.mubr.bf16.mxu0 0
  %339 = vmatmul.mubr.bf16.gmra.mrb[0].mxu0 %v128
  %v340 = vpop.f32.mrb[0].mxu0
  %v341 = vadd.f32 %v56, %v340
  %v342 = vpop.f32.mrb[0].mxu0
  %v343 = vadd.f32 %v60, %v342
  %v344 = vpop.f32.mrb[0].mxu0
  %v345 = vadd.f32 %v56, %v344
  %v346 = vpop.f32.mrb[0].mxu0
  %v347 = vadd.f32 %v60, %v346
  %348 = vdwg.mxu0
  %349 = vmatprep.subr.bf16.mxu0 %v108
  %350 = vmatpush1.bf16.msra.mxu0 %v107
  %351 = vmatprep.subr.bf16.mxu0 0
  %352 = vmatpush1.bf16.msra.mxu0 0
  %353 = vmatprep.subr.bf16.mxu0 0
  %354 = vmatpush1.bf16.msra.mxu0 0
  %355 = vmatprep.subr.bf16.mxu0 0
  %356 = vmatpush1.bf16.msra.mxu0 0
  %357 = vmatprep.subr.bf16.mxu0 0
  %358 = vmatpush1.bf16.msra.mxu0 0
  %359 = vmatprep.subr.bf16.mxu0 0
  %360 = vmatpush1.bf16.msra.mxu0 0
  %361 = vmatprep.subr.bf16.mxu0 0
  %362 = vmatpush1.bf16.msra.mxu0 0
  %363 = vmatprep.subr.bf16.mxu0 0
  %364 = vmatpush1.bf16.msra.mxu0 0
  %365 = vmatprep.subr.bf16.mxu0 0
  %366 = vmatpush1.bf16.msra.mxu0 0
  %367 = vmatprep.subr.bf16.mxu0 0
  %368 = vmatpush1.bf16.msra.mxu0 0
  %369 = vmatprep.subr.bf16.mxu0 0
  %370 = vmatpush1.bf16.msra.mxu0 0
  %371 = vmatprep.subr.bf16.mxu0 0
  %372 = vmatpush1.bf16.msra.mxu0 0
  %373 = vmatprep.subr.bf16.mxu0 0
  %374 = vmatpush1.bf16.msra.mxu0 0
  %375 = vmatprep.subr.bf16.mxu0 0
  %376 = vmatpush1.bf16.msra.mxu0 0
  %377 = vmatprep.subr.bf16.mxu0 0
  %378 = vmatpush1.bf16.msra.mxu0 0
  %379 = vmatprep.subr.bf16.mxu0 0
  %380 = vmatpush1.bf16.msra.mxu0 0
  %381 = vmatprep.mubr.bf16.mxu0 0
  %382 = vmatmul.mubr.bf16.gmra.mrb[0].mxu0 %v119
  %v383 = vpop.f32.mrb[0].mxu0
  %v384 = vadd.f32 %v64, %v383
  %v385 = vpop.f32.mrb[0].mxu0
  %v386 = vadd.f32 %v68, %v385
  %v387 = vpop.f32.mrb[0].mxu0
  %v388 = vadd.f32 %v64, %v387
  %v389 = vpop.f32.mrb[0].mxu0
  %v390 = vadd.f32 %v68, %v389
  %391 = vmatprep.mubr.bf16.mxu0 0
  %392 = vmatmul.mubr.bf16.gmra.mrb[0].mxu0 %v122
  %v393 = vpop.f32.mrb[0].mxu0
  %v394 = vadd.f32 %v64, %v393
  %v395 = vpop.f32.mrb[0].mxu0
  %v396 = vadd.f32 %v68, %v395
  %v397 = vpop.f32.mrb[0].mxu0
  %v398 = vadd.f32 %v64, %v397
  %v399 = vpop.f32.mrb[0].mxu0
  %v400 = vadd.f32 %v68, %v399
  %401 = vmatprep.mubr.bf16.mxu0 0
  %402 = vmatmul.mubr.bf16.gmra.mrb[0].mxu0 %v125
  %v403 = vpop.f32.mrb[0].mxu0
  %v404 = vadd.f32 %v64, %v403
  %v405 = vpop.f32.mrb[0].mxu0
  %v406 = vadd.f32 %v68, %v405
  %v407 = vpop.f32.mrb[0].mxu0
  %v408 = vadd.f32 %v64, %v407
  %v409 = vpop.f32.mrb[0].mxu0
  %v410 = vadd.f32 %v68, %v409
  %411 = vmatprep.mubr.bf16.mxu0 0
  %412 = vmatmul.mubr.bf16.gmra.mrb[0].mxu0 %v128
  %v413 = vpop.f32.mrb[0].mxu0
  %v414 = vadd.f32 %v64, %v413
  %v415 = vpop.f32.mrb[0].mxu0
  %v416 = vadd.f32 %v68, %v415
  %v417 = vpop.f32.mrb[0].mxu0
  %v418 = vadd.f32 %v64, %v417
  %v419 = vpop.f32.mrb[0].mxu0
  %v420 = vadd.f32 %v68, %v419
  %421 = vdwg.mxu0
  %v422 = vpack.c.bf16 %v169, %v165
  %v423 = vpack.c.bf16 %v171, %v167
  %v424 = vpack.c.bf16 %v242, %v238
  %v425 = vpack.c.bf16 %v244, %v240
  %v426 = vpack.c.bf16 %v315, %v311
  %v427 = vpack.c.bf16 %v317, %v313
  %v428 = vpack.c.bf16 %v388, %v384
  %v429 = vpack.c.bf16 %v390, %v386
  %v430 = vpack.c.bf16 %v179, %v175
  %v431 = vpack.c.bf16 %v181, %v177
  %v432 = vpack.c.bf16 %v252, %v248
  %v433 = vpack.c.bf16 %v254, %v250
  %v434 = vpack.c.bf16 %v325, %v321
  %v435 = vpack.c.bf16 %v327, %v323
  %v436 = vpack.c.bf16 %v398, %v394
  %v437 = vpack.c.bf16 %v400, %v396
  %v438 = vpack.c.bf16 %v189, %v185
  %v439 = vpack.c.bf16 %v191, %v187
  %v440 = vpack.c.bf16 %v262, %v258
  %v441 = vpack.c.bf16 %v264, %v260
  %v442 = vpack.c.bf16 %v335, %v331
  %v443 = vpack.c.bf16 %v337, %v333
  %v444 = vpack.c.bf16 %v408, %v404
  %v445 = vpack.c.bf16 %v410, %v406
  %v446 = vpack.c.bf16 %v199, %v195
  %v447 = vpack.c.bf16 %v201, %v197
  %v448 = vpack.c.bf16 %v272, %v268
  %v449 = vpack.c.bf16 %v274, %v270
  %v450 = vpack.c.bf16 %v345, %v341
  %v451 = vpack.c.bf16 %v347, %v343
  %v452 = vpack.c.bf16 %v418, %v414
  %v453 = vpack.c.bf16 %v420, %v416
  %v486 = vunpack.c.l.b16 %v422
  %v487 = vunpack.c.l.b16 %v423
  %v488 = vunpack.c.l.b16 %v424
  %v489 = vunpack.c.l.b16 %v425
  %v490 = vunpack.c.l.b16 %v426
  %v491 = vunpack.c.l.b16 %v427
  %v492 = vunpack.c.l.b16 %v428
  %v493 = vunpack.c.l.b16 %v429
  %v494 = vunpack.c.h.b16 %v422
  %v495 = vunpack.c.h.b16 %v423
  %v496 = vunpack.c.h.b16 %v424
  %v497 = vunpack.c.h.b16 %v425
  %v498 = vunpack.c.h.b16 %v426
  %v499 = vunpack.c.h.b16 %v427
  %v500 = vunpack.c.h.b16 %v428
  %v501 = vunpack.c.h.b16 %v429
  %v502 = vunpack.c.l.b16 %v430
  %v503 = vunpack.c.l.b16 %v431
  %v504 = vunpack.c.l.b16 %v432
  %v505 = vunpack.c.l.b16 %v433
  %v506 = vunpack.c.l.b16 %v434
  %v507 = vunpack.c.l.b16 %v435
  %v508 = vunpack.c.l.b16 %v436
  %v509 = vunpack.c.l.b16 %v437
  %v510 = vunpack.c.h.b16 %v430
  %v511 = vunpack.c.h.b16 %v431
  %v512 = vunpack.c.h.b16 %v432
  %v513 = vunpack.c.h.b16 %v433
  %v514 = vunpack.c.h.b16 %v434
  %v515 = vunpack.c.h.b16 %v435
  %v516 = vunpack.c.h.b16 %v436
  %v517 = vunpack.c.h.b16 %v437
  %v518 = vunpack.c.l.b16 %v438
  %v519 = vunpack.c.l.b16 %v439
  %v520 = vunpack.c.l.b16 %v440
  %v521 = vunpack.c.l.b16 %v441
  %v522 = vunpack.c.l.b16 %v442
  %v523 = vunpack.c.l.b16 %v443
  %v524 = vunpack.c.l.b16 %v444
  %v525 = vunpack.c.l.b16 %v445
  %v526 = vunpack.c.h.b16 %v438
  %v527 = vunpack.c.h.b16 %v439
  %v528 = vunpack.c.h.b16 %v440
  %v529 = vunpack.c.h.b16 %v441
  %v530 = vunpack.c.h.b16 %v442
  %v531 = vunpack.c.h.b16 %v443
  %v532 = vunpack.c.h.b16 %v444
  %v533 = vunpack.c.h.b16 %v445
  %v534 = vunpack.c.l.b16 %v446
  %v535 = vunpack.c.l.b16 %v447
  %v536 = vunpack.c.l.b16 %v448
  %v537 = vunpack.c.l.b16 %v449
  %v538 = vunpack.c.l.b16 %v450
  %v539 = vunpack.c.l.b16 %v451
  %v540 = vunpack.c.l.b16 %v452
  %v541 = vunpack.c.l.b16 %v453
  %v542 = vunpack.c.h.b16 %v446
  %v543 = vunpack.c.h.b16 %v447
  %v544 = vunpack.c.h.b16 %v448
  %v545 = vunpack.c.h.b16 %v449
  %v546 = vunpack.c.h.b16 %v450
  %v547 = vunpack.c.h.b16 %v451
  %v548 = vunpack.c.h.b16 %v452
  %v549 = vunpack.c.h.b16 %v453
  %v550 = vpack.c.b16 %v487, %v486
  %v551 = vpack.c.b16 %v489, %v488
  %v552 = vpack.c.b16 %v491, %v490
  %v553 = vpack.c.b16 %v493, %v492
  %v554 = vpack.c.b16 %v495, %v494
  %v555 = vpack.c.b16 %v497, %v496
  %v556 = vpack.c.b16 %v499, %v498
  %v557 = vpack.c.b16 %v501, %v500
  %v558 = vpack.c.b16 %v503, %v502
  %v559 = vpack.c.b16 %v505, %v504
  %v560 = vpack.c.b16 %v507, %v506
  %v561 = vpack.c.b16 %v509, %v508
  %v562 = vpack.c.b16 %v511, %v510
  %v563 = vpack.c.b16 %v513, %v512
  %v564 = vpack.c.b16 %v515, %v514
  %v565 = vpack.c.b16 %v517, %v516
  %v566 = vpack.c.b16 %v519, %v518
  %v567 = vpack.c.b16 %v521, %v520
  %v568 = vpack.c.b16 %v523, %v522
  %v569 = vpack.c.b16 %v525, %v524
  %v570 = vpack.c.b16 %v527, %v526
  %v571 = vpack.c.b16 %v529, %v528
  %v572 = vpack.c.b16 %v531, %v530
  %v573 = vpack.c.b16 %v533, %v532
  %v574 = vpack.c.b16 %v535, %v534
  %v575 = vpack.c.b16 %v537, %v536
  %v576 = vpack.c.b16 %v539, %v538
  %v577 = vpack.c.b16 %v541, %v540
  %v578 = vpack.c.b16 %v543, %v542
  %v579 = vpack.c.b16 %v545, %v544
  %v580 = vpack.c.b16 %v547, %v546
  %v581 = vpack.c.b16 %v549, %v548
  %614 = vst [vmem:[%s3] sm:$0xff] %v550
  %615 = vst [vmem:[%s3 + $0x8] sm:$0xff] %v551
  %616 = vst [vmem:[%s3 + $0x10] sm:$0xff] %v552
  %617 = vst [vmem:[%s3 + $0x18] sm:$0xff] %v553
  %618 = vst [vmem:[%s3 + $0x20] sm:$0xff] %v554
  %619 = vst [vmem:[%s3 + $0x28] sm:$0xff] %v555
  %620 = vst [vmem:[%s3 + $0x30] sm:$0xff] %v556
  %621 = vst [vmem:[%s3 + $0x38] sm:$0xff] %v557
  %622 = vst [vmem:[%s3 + $0x40] sm:$0xff] %v558
  %623 = vst [vmem:[%s3 + $0x48] sm:$0xff] %v559
  %624 = vst [vmem:[%s3 + $0x50] sm:$0xff] %v560
  %625 = vst [vmem:[%s3 + $0x58] sm:$0xff] %v561
  %626 = vst [vmem:[%s3 + $0x60] sm:$0xff] %v562
  %627 = vst [vmem:[%s3 + $0x68] sm:$0xff] %v563
  %628 = vst [vmem:[%s3 + $0x70] sm:$0xff] %v564
  %629 = vst [vmem:[%s3 + $0x78] sm:$0xff] %v565
  %630 = vst [vmem:[%s3 + $0x80] sm:$0xff] %v566
  %631 = vst [vmem:[%s3 + $0x88] sm:$0xff] %v567
  %632 = vst [vmem:[%s3 + $0x90] sm:$0xff] %v568
  %633 = vst [vmem:[%s3 + $0x98] sm:$0xff] %v569
  %634 = vst [vmem:[%s3 + $0xa0] sm:$0xff] %v570
  %635 = vst [vmem:[%s3 + $0xa8] sm:$0xff] %v571
  %636 = vst [vmem:[%s3 + $0xb0] sm:$0xff] %v572
  %637 = vst [vmem:[%s3 + $0xb8] sm:$0xff] %v573
  %638 = vst [vmem:[%s3 + $0xc0] sm:$0xff] %v574
  %639 = vst [vmem:[%s3 + $0xc8] sm:$0xff] %v575
  %640 = vst [vmem:[%s3 + $0xd0] sm:$0xff] %v576
  %641 = vst [vmem:[%s3 + $0xd8] sm:$0xff] %v577
  %642 = vst [vmem:[%s3 + $0xe0] sm:$0xff] %v578
  %643 = vst [vmem:[%s3 + $0xe8] sm:$0xff] %v579
  %644 = vst [vmem:[%s3 + $0xf0] sm:$0xff] %v580
  %645 = vst [vmem:[%s3 + $0xf8] sm:$0xff] %v581
  // Predicated region
  $region14: #{bidirectional_lstm_forward.3} parent=0 // pred_check
    _
  $region15: #{bidirectional_lstm_forward.3} parent=0 // pred_check_branch
    %647 = sbr.rel (0) target = $region17
  $region16: #{bidirectional_lstm_forward.3} parent=0 // pred_region
    _
  $region17: #{bidirectional_lstm_forward.3} parent=0 // pred_fallthru
    _
  // Predicated region
  $region18: #{bidirectional_lstm_forward.3} parent=0 // pred_check
    _
  $region19: #{bidirectional_lstm_forward.3} parent=0 // pred_check_branch
    %649 = sbr.rel (0) target = $region21
  $region20: #{bidirectional_lstm_forward.3} parent=0 // pred_region
    _
  $region21: #{bidirectional_lstm_forward.3} parent=0 // pred_fallthru
    _

// kernel: bidirectional_lstm_forward.5
$region0: #{bidirectional_lstm_forward.5}
  #allocation0 [shape = 'u32[]', space=smem, size = 0x4, offset = 0x4, fixed_abs, tag = 'smem constant byte address 0x4 - core index']
  #allocation1 [shape = 'u32[144,128]{1,0:T(1,128)}', space=vmem, size = 0x12000, scoped, tag = 'internal scratch']
  %s0 = inlined_call_operand.vmem [shape: bf16[64,256], index: 0, kind: input, shape index: {}]
  %s1 = inlined_call_operand.vmem [shape: bf16[256,128], index: 1, kind: input, shape index: {}]
  %s2 = inlined_call_operand.vmem [shape: f32[1,128], index: 2, kind: input, shape index: {}]
  %s3 = inlined_call_operand.vmem [shape: f32[64,128], index: 3, kind: output, shape index: {}]
  %s4 = sld [smem:[#allocation0]]
  $region22: #{bidirectional_lstm_forward.5} parent=0
    _
  %s6 = ssub.s32 1, %s4
  %s7 = scalar_select 0, %s6, %s4
  // Predicated region
  $region2: #{bidirectional_lstm_forward.5} parent=0 // pred_check
    _
  $region3: #{bidirectional_lstm_forward.5} parent=0 // pred_check_branch
    %9 = sbr.rel (0) target = $region5
  $region4: #{bidirectional_lstm_forward.5} parent=0 // pred_region
    _
  $region5: #{bidirectional_lstm_forward.5} parent=0 // pred_fallthru
    _
  // Predicated region
  $region6: #{bidirectional_lstm_forward.5} parent=0 // pred_check
    _
  $region7: #{bidirectional_lstm_forward.5} parent=0 // pred_check_branch
    %11 = sbr.rel (0) target = $region9
  $region8: #{bidirectional_lstm_forward.5} parent=0 // pred_region
    _
  $region9: #{bidirectional_lstm_forward.5} parent=0 // pred_fallthru
    _
  // Predicated region
  $region10: #{bidirectional_lstm_forward.5} parent=0 // pred_check
    _
  $region11: #{bidirectional_lstm_forward.5} parent=0 // pred_check_branch
    %13 = sbr.rel (0) target = $region13
  $region12: #{bidirectional_lstm_forward.5} parent=0 // pred_region
    _
  $region13: #{bidirectional_lstm_forward.5} parent=0 // pred_fallthru
    _
  %v15 = vld [vmem:[%s0] sm:$0xff]
  %v16 = vld [vmem:[%s0 + $0x8] sm:$0xff]
  %v17 = vld [vmem:[%s0 + $0x10] sm:$0xff]
  %v18 = vld [vmem:[%s0 + $0x18] sm:$0xff]
  %v19 = vld [vmem:[%s0 + $0x20] sm:$0xff]
  %v20 = vld [vmem:[%s0 + $0x28] sm:$0xff]
  %v21 = vld [vmem:[%s0 + $0x30] sm:$0xff]
  %v22 = vld [vmem:[%s0 + $0x38] sm:$0xff]
  %v23 = vld [vmem:[%s1] sm:$0xf]
  %v24 = vld [vmem:[%s1 + $0x4] sm:$0xf]
  %v25 = vld [vmem:[%s1 + $0x8] sm:$0xf]
  %v26 = vld [vmem:[%s1 + $0xc] sm:$0xf]
  %v27 = vld [vmem:[%s1 + $0x10] sm:$0xf]
  %v28 = vld [vmem:[%s1 + $0x14] sm:$0xf]
  %v29 = vld [vmem:[%s1 + $0x18] sm:$0xf]
  %v30 = vld [vmem:[%s1 + $0x1c] sm:$0xf]
  %v31 = vld [vmem:[%s1 + $0x20] sm:$0xf]
  %v32 = vld [vmem:[%s1 + $0x24] sm:$0xf]
  %v33 = vld [vmem:[%s1 + $0x28] sm:$0xf]
  %v34 = vld [vmem:[%s1 + $0x2c] sm:$0xf]
  %v35 = vld [vmem:[%s1 + $0x30] sm:$0xf]
  %v36 = vld [vmem:[%s1 + $0x34] sm:$0xf]
  %v37 = vld [vmem:[%s1 + $0x38] sm:$0xf]
  %v38 = vld [vmem:[%s1 + $0x3c] sm:$0xf]
  %v39 = vld [vmem:[%s1 + $0x40] sm:$0xf]
  %v40 = vld [vmem:[%s1 + $0x44] sm:$0xf]
  %v41 = vld [vmem:[%s1 + $0x48] sm:$0xf]
  %v42 = vld [vmem:[%s1 + $0x4c] sm:$0xf]
  %v43 = vld [vmem:[%s1 + $0x50] sm:$0xf]
  %v44 = vld [vmem:[%s1 + $0x54] sm:$0xf]
  %v45 = vld [vmem:[%s1 + $0x58] sm:$0xf]
  %v46 = vld [vmem:[%s1 + $0x5c] sm:$0xf]
  %v47 = vld [vmem:[%s1 + $0x60] sm:$0xf]
  %v48 = vld [vmem:[%s1 + $0x64] sm:$0xf]
  %v49 = vld [vmem:[%s1 + $0x68] sm:$0xf]
  %v50 = vld [vmem:[%s1 + $0x6c] sm:$0xf]
  %v51 = vld [vmem:[%s1 + $0x70] sm:$0xf]
  %v52 = vld [vmem:[%s1 + $0x74] sm:$0xf]
  %v53 = vld [vmem:[%s1 + $0x78] sm:$0xf]
  %v54 = vld [vmem:[%s1 + $0x7c] sm:$0xf]
  %v55 = vld [vmem:[%s2] sm:$0x1]
  %v57 = vlaneseq
  %v58 = vshrl.u32 %v57, 7
  %v59 = vsub.s32 0, %v58
  %v60 = vrot.slane %v55, %v59
  %v70 = vunpack.c.l.b16 %v15
  %v71 = vunpack.c.h.b16 %v15
  %v72 = vunpack.c.l.b16 %v16
  %v73 = vunpack.c.h.b16 %v16
  %v74 = vunpack.c.l.b16 %v17
  %v75 = vunpack.c.h.b16 %v17
  %v76 = vunpack.c.l.b16 %v18
  %v77 = vunpack.c.h.b16 %v18
  %v78 = vunpack.c.l.b16 %v19
  %v79 = vunpack.c.h.b16 %v19
  %v80 = vunpack.c.l.b16 %v20
  %v81 = vunpack.c.h.b16 %v20
  %v82 = vunpack.c.l.b16 %v21
  %v83 = vunpack.c.h.b16 %v21
  %v84 = vunpack.c.l.b16 %v22
  %v85 = vunpack.c.h.b16 %v22
  %v86 = vpack.c.b16 %v72, %v70
  %v87 = vpack.c.b16 %v73, %v71
  %v88 = vpack.c.b16 %v76, %v74
  %v89 = vpack.c.b16 %v77, %v75
  %v90 = vpack.c.b16 %v80, %v78
  %v91 = vpack.c.b16 %v81, %v79
  %v92 = vpack.c.b16 %v84, %v82
  %v93 = vpack.c.b16 %v85, %v83
  %v134 = vunpack.c.l.b16 %v23
  %v135 = vunpack.c.l.b16 %v24
  %v136 = vunpack.c.l.b16 %v25
  %v137 = vunpack.c.l.b16 %v26
  %v138 = vunpack.c.l.b16 %v27
  %v139 = vunpack.c.l.b16 %v28
  %v140 = vunpack.c.l.b16 %v29
  %v141 = vunpack.c.l.b16 %v30
  %v142 = vunpack.c.l.b16 %v31
  %v143 = vunpack.c.l.b16 %v32
  %v144 = vunpack.c.l.b16 %v33
  %v145 = vunpack.c.l.b16 %v34
  %v146 = vunpack.c.l.b16 %v35
  %v147 = vunpack.c.l.b16 %v36
  %v148 = vunpack.c.l.b16 %v37
  %v149 = vunpack.c.l.b16 %v38
  %v150 = vunpack.c.l.b16 %v39
  %v151 = vunpack.c.l.b16 %v40
  %v152 = vunpack.c.l.b16 %v41
  %v153 = vunpack.c.l.b16 %v42
  %v154 = vunpack.c.l.b16 %v43
  %v155 = vunpack.c.l.b16 %v44
  %v156 = vunpack.c.l.b16 %v45
  %v157 = vunpack.c.l.b16 %v46
  %v158 = vunpack.c.l.b16 %v47
  %v159 = vunpack.c.l.b16 %v48
  %v160 = vunpack.c.l.b16 %v49
  %v161 = vunpack.c.l.b16 %v50
  %v162 = vunpack.c.l.b16 %v51
  %v163 = vunpack.c.l.b16 %v52
  %v164 = vunpack.c.l.b16 %v53
  %v165 = vunpack.c.l.b16 %v54
  %v166 = vpack.c.b16 %v135, %v134
  %v167 = vpack.c.b16 %v137, %v136
  %v168 = vpack.c.b16 %v139, %v138
  %v169 = vpack.c.b16 %v141, %v140
  %v170 = vpack.c.b16 %v143, %v142
  %v171 = vpack.c.b16 %v145, %v144
  %v172 = vpack.c.b16 %v147, %v146
  %v173 = vpack.c.b16 %v149, %v148
  %v174 = vpack.c.b16 %v151, %v150
  %v175 = vpack.c.b16 %v153, %v152
  %v176 = vpack.c.b16 %v155, %v154
  %v177 = vpack.c.b16 %v157, %v156
  %v178 = vpack.c.b16 %v159, %v158
  %v179 = vpack.c.b16 %v161, %v160
  %v180 = vpack.c.b16 %v163, %v162
  %v181 = vpack.c.b16 %v165, %v164
  %198 = vmatprep.subr.bf16.mxu0 0
  %199 = vmatpush1.bf16.msra.mxu0 %v166
  %200 = vmatprep.subr.bf16.mxu0 0
  %201 = vmatpush1.bf16.msra.mxu0 %v167
  %202 = vmatprep.subr.bf16.mxu0 0
  %203 = vmatpush1.bf16.msra.mxu0 %v168
  %204 = vmatprep.subr.bf16.mxu0 0
  %205 = vmatpush1.bf16.msra.mxu0 %v169
  %206 = vmatprep.subr.bf16.mxu0 0
  %207 = vmatpush1.bf16.msra.mxu0 %v170
  %208 = vmatprep.subr.bf16.mxu0 0
  %209 = vmatpush1.bf16.msra.mxu0 %v171
  %210 = vmatprep.subr.bf16.mxu0 0
  %211 = vmatpush1.bf16.msra.mxu0 %v172
  %212 = vmatprep.subr.bf16.mxu0 0
  %213 = vmatpush1.bf16.msra.mxu0 %v173
  %214 = vmatprep.subr.bf16.mxu0 0
  %215 = vmatpush1.bf16.msra.mxu0 %v174
  %216 = vmatprep.subr.bf16.mxu0 0
  %217 = vmatpush1.bf16.msra.mxu0 %v175
  %218 = vmatprep.subr.bf16.mxu0 0
  %219 = vmatpush1.bf16.msra.mxu0 %v176
  %220 = vmatprep.subr.bf16.mxu0 0
  %221 = vmatpush1.bf16.msra.mxu0 %v177
  %222 = vmatprep.subr.bf16.mxu0 0
  %223 = vmatpush1.bf16.msra.mxu0 %v178
  %224 = vmatprep.subr.bf16.mxu0 0
  %225 = vmatpush1.bf16.msra.mxu0 %v179
  %226 = vmatprep.subr.bf16.mxu0 0
  %227 = vmatpush1.bf16.msra.mxu0 %v180
  %228 = vmatprep.subr.bf16.mxu0 0
  %229 = vmatpush1.bf16.msra.mxu0 %v181
  %230 = vmatprep.mubr.bf16.mxu0 %v87
  %231 = vmatmul.mubr.bf16.gmra.mrb[0].mxu0 %v86
  %v232 = vpop.f32.mrb[0].mxu0
  %v233 = vadd.f32 %v60, %v232
  %v234 = vpop.f32.mrb[0].mxu0
  %v235 = vpop.f32.mrb[0].mxu0
  %v236 = vadd.f32 %v60, %v235
  %v237 = vpop.f32.mrb[0].mxu0
  %238 = vmatprep.mubr.bf16.mxu0 %v89
  %239 = vmatmul.mubr.bf16.gmra.mrb[0].mxu0 %v88
  %v240 = vpop.f32.mrb[0].mxu0
  %v241 = vadd.f32 %v60, %v240
  %v242 = vpop.f32.mrb[0].mxu0
  %v243 = vpop.f32.mrb[0].mxu0
  %v244 = vadd.f32 %v60, %v243
  %v245 = vpop.f32.mrb[0].mxu0
  %246 = vmatprep.mubr.bf16.mxu0 %v91
  %247 = vmatmul.mubr.bf16.gmra.mrb[0].mxu0 %v90
  %v248 = vpop.f32.mrb[0].mxu0
  %v249 = vadd.f32 %v60, %v248
  %v250 = vpop.f32.mrb[0].mxu0
  %v251 = vpop.f32.mrb[0].mxu0
  %v252 = vadd.f32 %v60, %v251
  %v253 = vpop.f32.mrb[0].mxu0
  %254 = vmatprep.mubr.bf16.mxu0 %v93
  %255 = vmatmul.mubr.bf16.gmra.mrb[0].mxu0 %v92
  %v256 = vpop.f32.mrb[0].mxu0
  %v257 = vadd.f32 %v60, %v256
  %v258 = vpop.f32.mrb[0].mxu0
  %v259 = vpop.f32.mrb[0].mxu0
  %v260 = vadd.f32 %v60, %v259
  %v261 = vpop.f32.mrb[0].mxu0
  %262 = vdwg.mxu0
  %263 = vst [vmem:[%s3] sm:$0xff] %v233
  %264 = vst [vmem:[%s3 + $0x8] sm:$0xff] %v236
  %265 = vst [vmem:[%s3 + $0x10] sm:$0xff] %v241
  %266 = vst [vmem:[%s3 + $0x18] sm:$0xff] %v244
  %267 = vst [vmem:[%s3 + $0x20] sm:$0xff] %v249
  %268 = vst [vmem:[%s3 + $0x28] sm:$0xff] %v252
  %269 = vst [vmem:[%s3 + $0x30] sm:$0xff] %v257
  %270 = vst [vmem:[%s3 + $0x38] sm:$0xff] %v260
  // Predicated region
  $region14: #{bidirectional_lstm_forward.5} parent=0 // pred_check
    _
  $region15: #{bidirectional_lstm_forward.5} parent=0 // pred_check_branch
    %272 = sbr.rel (0) target = $region17
  $region16: #{bidirectional_lstm_forward.5} parent=0 // pred_region
    _
  $region17: #{bidirectional_lstm_forward.5} parent=0 // pred_fallthru
    _
  // Predicated region
  $region18: #{bidirectional_lstm_forward.5} parent=0 // pred_check
    _
  $region19: #{bidirectional_lstm_forward.5} parent=0 // pred_check_branch
    %274 = sbr.rel (0) target = $region21
  $region20: #{bidirectional_lstm_forward.5} parent=0 // pred_region
    _
  $region21: #{bidirectional_lstm_forward.5} parent=0 // pred_fallthru
    _

// kernel: bidirectional_lstm_forward.4
$region0: #{bidirectional_lstm_forward.4}
  #allocation0 [shape = 'u32[]', space=smem, size = 0x4, offset = 0x4, fixed_abs, tag = 'smem constant byte address 0x4 - core index']
  #allocation1 [shape = 'u32[144,128]{1,0:T(1,128)}', space=vmem, size = 0x12000, scoped, tag = 'internal scratch']
  #allocation2 [shape = 'f32[8,128]{1,0:T(8,128)}', space=vmem, size = 0x1000, scoped, tag = 'scratch operand']
  #allocation3 [shape = 'f32[8,128]{1,0:T(8,128)}', space=vmem, size = 0x1000, scoped, tag = 'scratch operand']
  %s0 = inlined_call_operand.vmem [shape: bf16[8,8,1024], index: 0, kind: input, shape index: {}]
  %s1 = inlined_call_operand.vmem [shape: bf16[2,128,512], index: 1, kind: input, shape index: {}]
  %s2 = inlined_call_operand.vmem [shape: bf16[8,8,256], index: 2, kind: output, shape index: {}]
  %s3 = sld [smem:[#allocation0]]
  $region105: #{bidirectional_lstm_forward.4} parent=0
    _
  %s5 = ssub.s32 1, %s3
  %s6 = scalar_select 0, %s5, %s3
  $region1: #{bidirectional_lstm_forward.4} parent=0
    #allocation4 [shape = 'u8[131072]{0}', space=vmem, size = 0x20000, scoped, tag = 'input window, operand 0']
    #allocation5 [shape = 'u8[32768]{0}', space=vmem, size = 0x8000, scoped, tag = 'output window, operand 0']
    loop: start=0, step=1, limit=4
    $region2: #{bidirectional_lstm_forward.4} parent=1 // loop_pre_header
      _
    $region3: #{bidirectional_lstm_forward.4} parent=1 // loop_header
      %s8 = sphi 0, %s12
      %p9 = scmp.ge.s32.totalorder %s8, 4
      %s15 = sphi 0, %s34
      %s16 = sphi 0, %s30
      %s17 = sphi 0, %s26
      %s18 = sphi 0, %s15
      %s19 = sphi 0, %s16
      %s20 = sphi 0, %s17
      %s21 = sphi 0, %s18
      %s22 = sphi 0, %s19
      %s23 = sphi 0, %s20
      %s51 = sphi 0, %s53
      %s54 = sphi 0, %s51
      %s55 = sphi 0, %s54
      %s71 = sphi 0, %s55
      %s77 = sphi 0, %s79
      %s80 = sphi 0, %s77
      %s81 = sphi 0, %s80
      %s97 = sphi 0, %s81
      %s117 = sphi 0, %s119
      %s120 = sphi 0, %s117
      %s121 = sphi 0, %s120
      %s137 = sphi 0, %s121
    $region4: #{bidirectional_lstm_forward.4} parent=1 // loop_header_branch
      %11 = sbr.rel (%p9) target = $region8
    $region5: #{bidirectional_lstm_forward.4} parent=1 // loop_body
      %s13 = ssub.s32 %s8, 1
      %s14 = ssub.s32 %s8, 2
      %s24 = sadd.s32 1, %s17
      %p25 = scmp.ge.s32.totalorder %s24, 1
      %s26 = scalar_select %p25, 0, %s24
      %s27 = sadd.s32 1, %s16
      %s28 = scalar_select %p25, %s27, %s16
      %p29 = scmp.ge.s32.totalorder %s28, 1
      %s30 = scalar_select %p29, 0, %s28
      %s31 = sadd.s32 1, %s15
      %s32 = scalar_select %p29, %s31, %s15
      %p33 = scmp.ge.s32.totalorder %s32, 2
      %s34 = scalar_select %p33, 0, %s32
      %s35 = ssub.s32 1, %s15
      %s36 = smul.u32 %s35, %s17
      %s37 = ssub.s32 0, %s17
      %s38 = smul.u32 %s15, %s37
      %s39 = sadd.s32 %s36, %s38
      %s40 = ssub.s32 1, %s34
      %s41 = smul.u32 %s40, %s26
      %s42 = ssub.s32 0, %s26
      %s43 = smul.u32 %s34, %s42
      %s44 = sadd.s32 %s41, %s43
      %s45 = ssub.s32 %s39, %s44
      %s46 = ssub.s32 %s16, %s30
      %s47 = sor.u32 %s45, %s46
      %s48 = ssub.s32 %s15, %s34
      %s49 = sor.u32 %s47, %s48
      %p50 = scmp.eq.s32.totalorder %s49, 0
      %s52 = sadd.s32 %s51, 1
      %s53 = scalar_select %p50, %s51, %s52
      %p56 = pneg %p50
      %p57 = scmp.eq.s32.totalorder %s8, 1
      %p58 = por %p56, %p57
      %p59 = scmp.ne.s32.totalorder %s51, %s54
      %p60 = scmp.eq.s32.totalorder %s8, 0
      %p61 = por %p59, %p60
      %p62 = scmp.ne.s32.totalorder %s51, %s54
      %p63 = scmp.eq.s32.totalorder %s13, 1
      %p64 = por %p62, %p63
      %p65 = scmp.ne.s32.totalorder %s54, %s55
      %p66 = scmp.eq.s32.totalorder %s13, 0
      %p67 = por %p65, %p66
      %p68 = scmp.ne.s32.totalorder %s54, %s55
      %p69 = scmp.eq.s32.totalorder %s14, 1
      %p70 = por %p68, %p69
      %p72 = scmp.ne.s32.totalorder %s55, %s71
      %p73 = scmp.eq.s32.totalorder %s14, 0
      %p74 = por %p72, %p73
      %s75 = ssub.s32 %s15, %s34
      %p76 = scmp.eq.s32.totalorder %s75, 0
      %s78 = sadd.s32 %s77, 1
      %s79 = scalar_select %p76, %s77, %s78
      %p82 = pneg %p76
      %p83 = scmp.eq.s32.totalorder %s8, 1
      %p84 = por %p82, %p83
      %p85 = scmp.ne.s32.totalorder %s77, %s80
      %p86 = scmp.eq.s32.totalorder %s8, 0
      %p87 = por %p85, %p86
      %p88 = scmp.ne.s32.totalorder %s77, %s80
      %p89 = scmp.eq.s32.totalorder %s13, 1
      %p90 = por %p88, %p89
      %p91 = scmp.ne.s32.totalorder %s80, %s81
      %p92 = scmp.eq.s32.totalorder %s13, 0
      %p93 = por %p91, %p92
      %p94 = scmp.ne.s32.totalorder %s80, %s81
      %p95 = scmp.eq.s32.totalorder %s14, 1
      %p96 = por %p94, %p95
      %p98 = scmp.ne.s32.totalorder %s81, %s97
      %p99 = scmp.eq.s32.totalorder %s14, 0
      %p100 = por %p98, %p99
      %s101 = ssub.s32 1, %s15
      %s102 = smul.u32 %s101, %s17
      %s103 = ssub.s32 0, %s17
      %s104 = smul.u32 %s15, %s103
      %s105 = sadd.s32 %s102, %s104
      %s106 = ssub.s32 1, %s34
      %s107 = smul.u32 %s106, %s26
      %s108 = ssub.s32 0, %s26
      %s109 = smul.u32 %s34, %s108
      %s110 = sadd.s32 %s107, %s109
      %s111 = ssub.s32 %s105, %s110
      %s112 = ssub.s32 %s16, %s30
      %s113 = sor.u32 %s111, %s112
      %s114 = ssub.s32 %s15, %s34
      %s115 = sor.u32 %s113, %s114
      %p116 = scmp.eq.s32.totalorder %s115, 0
      %s118 = sadd.s32 %s117, 1
      %s119 = scalar_select %p116, %s117, %s118
      %p122 = pneg %p116
      %p123 = scmp.eq.s32.totalorder %s8, 1
      %p124 = por %p122, %p123
      %p125 = scmp.ne.s32.totalorder %s117, %s120
      %p126 = scmp.eq.s32.totalorder %s8, 0
      %p127 = por %p125, %p126
      %p128 = scmp.ne.s32.totalorder %s117, %s120
      %p129 = scmp.eq.s32.totalorder %s13, 1
      %p130 = por %p128, %p129
      %p131 = scmp.ne.s32.totalorder %s120, %s121
      %p132 = scmp.eq.s32.totalorder %s13, 0
      %p133 = por %p131, %p132
      %p134 = scmp.ne.s32.totalorder %s120, %s121
      %p135 = scmp.eq.s32.totalorder %s14, 1
      %p136 = por %p134, %p135
      %p138 = scmp.ne.s32.totalorder %s121, %s137
      %p139 = scmp.eq.s32.totalorder %s14, 0
      %p140 = por %p138, %p139
      %p141 = scmp.le.s32.totalorder 1, %s8
      %p142 = scmp.lt.s32.totalorder %s8, 3
      %p143 = pnand %p141, %p142
      %p144 = pneg %p143
      // Predicated region
      $region9: #{bidirectional_lstm_forward.4} parent=5 // pred_check
        _
      $region10: #{bidirectional_lstm_forward.4} parent=5 // pred_check_branch
        %146 = sbr.rel (%p143) target = $region12
      $region11: #{bidirectional_lstm_forward.4} parent=5 // pred_region
        %s147 = ssub.s32 %s8, 1
      $region12: #{bidirectional_lstm_forward.4} parent=5 // pred_fallthru
        _
      %p148 = scmp.lt.s32.totalorder %s8, 2
      // Predicated region
      $region13: #{bidirectional_lstm_forward.4} parent=5 // pred_check
        %p149 = pneg %p148
      $region14: #{bidirectional_lstm_forward.4} parent=5 // pred_check_branch
        %151 = sbr.rel (%p149) target = $region16
      $region15: #{bidirectional_lstm_forward.4} parent=5 // pred_region
        // Predicated region
        $region17: #{bidirectional_lstm_forward.4} parent=15 // pred_check
          %p152 = pneg %p61
        $region18: #{bidirectional_lstm_forward.4} parent=15 // pred_check_branch
          %154 = sbr.rel (%p152) target = $region20
        $region19: #{bidirectional_lstm_forward.4} parent=15 // pred_region
          %s155 = sand.u32 %s51, 1
          %s156 = sand.u32 %s51, 1
          %s157 = smul.addr %s156, 128
          %s158 = scalar_lea.vmem [#allocation4], %s157
          %s159 = ssub.s32 1, %s15
          %s160 = smul.u32 %s159, %s17
          %s161 = ssub.s32 0, %s17
          %s162 = smul.u32 %s15, %s161
          %s163 = sadd.s32 %s160, %s162
          %s164 = smul.u32 8, %s163
          %s165 = smul.u32 4, %s15
          %s166 = smul.addr %s16, 8
          %s167 = sadd.s32 %s165, %s166
          %s168 = smul.addr %s164, 8
          %s169 = sadd.s32 %s167, %s168
          %s170 = smul.addr %s169, 4
          %s171 = scalar_lea.vmem %s0, %s170
          // Predicated region
          $region21: #{bidirectional_lstm_forward.4} parent=19 // pred_check
            _
          $region22: #{bidirectional_lstm_forward.4} parent=19 // pred_check_branch
            %173 = sbr.rel (0) target = $region24
          $region23: #{bidirectional_lstm_forward.4} parent=19 // pred_region
            // Predicated region
            $region25: #{bidirectional_lstm_forward.4} parent=23 // pred_check
              _
            $region26: #{bidirectional_lstm_forward.4} parent=23 // pred_check_branch
              %175 = sbr.rel (0) target = $region28
            $region27: #{bidirectional_lstm_forward.4} parent=23 // pred_region
              loop: start=0, step=1, limit=1
              $region29: #{bidirectional_lstm_forward.4} parent=27 // loop_pre_header
                _
              $region30: #{bidirectional_lstm_forward.4} parent=27 // loop_header
                %s177 = sphi 0, %s181
                %p178 = scmp.ge.s32.totalorder %s177, 1
                %s182 = sphi %s171, %s171
                %s183 = sphi %s158, %s158
              $region31: #{bidirectional_lstm_forward.4} parent=27 // loop_header_branch
                %180 = sbr.rel (%p178) target = $region35
              $region32: #{bidirectional_lstm_forward.4} parent=27 // loop_body
                %v184 = vld [vmem:[%s182] sm:$0xff]
                %185 = vst [vmem:[%s183] sm:$0xff] %v184
                %v186 = vld [vmem:[%s182 + $0x8] sm:$0xff]
                %187 = vst [vmem:[%s183 + $0x8] sm:$0xff] %v186
                %v188 = vld [vmem:[%s182 + $0x20] sm:$0xff]
                %189 = vst [vmem:[%s183 + $0x10] sm:$0xff] %v188
                %v190 = vld [vmem:[%s182 + $0x28] sm:$0xff]
                %191 = vst [vmem:[%s183 + $0x18] sm:$0xff] %v190
                %v192 = vld [vmem:[%s182 + $0x40] sm:$0xff]
                %193 = vst [vmem:[%s183 + $0x20] sm:$0xff] %v192
                %v194 = vld [vmem:[%s182 + $0x48] sm:$0xff]
                %195 = vst [vmem:[%s183 + $0x28] sm:$0xff] %v194
                %v196 = vld [vmem:[%s182 + $0x60] sm:$0xff]
                %197 = vst [vmem:[%s183 + $0x30] sm:$0xff] %v196
                %v198 = vld [vmem:[%s182 + $0x68] sm:$0xff]
                %199 = vst [vmem:[%s183 + $0x38] sm:$0xff] %v198
                %v200 = vld [vmem:[%s182 + $0x80] sm:$0xff]
                %201 = vst [vmem:[%s183 + $0x40] sm:$0xff] %v200
                %v202 = vld [vmem:[%s182 + $0x88] sm:$0xff]
                %203 = vst [vmem:[%s183 + $0x48] sm:$0xff] %v202
                %v204 = vld [vmem:[%s182 + $0xa0] sm:$0xff]
                %205 = vst [vmem:[%s183 + $0x50] sm:$0xff] %v204
                %v206 = vld [vmem:[%s182 + $0xa8] sm:$0xff]
                %207 = vst [vmem:[%s183 + $0x58] sm:$0xff] %v206
                %v208 = vld [vmem:[%s182 + $0xc0] sm:$0xff]
                %209 = vst [vmem:[%s183 + $0x60] sm:$0xff] %v208
                %v210 = vld [vmem:[%s182 + $0xc8] sm:$0xff]
                %211 = vst [vmem:[%s183 + $0x68] sm:$0xff] %v210
                %v212 = vld [vmem:[%s182 + $0xe0] sm:$0xff]
                %213 = vst [vmem:[%s183 + $0x70] sm:$0xff] %v212
                %v214 = vld [vmem:[%s182 + $0xe8] sm:$0xff]
                %215 = vst [vmem:[%s183 + $0x78] sm:$0xff] %v214
              $region33: #{bidirectional_lstm_forward.4} parent=27 // loop_footer
                %s181 = sadd.s32 1, %s177
              $region34: #{bidirectional_lstm_forward.4} parent=27 // loop_footer_branch
                %176 = sbr.rel target = $region30
              $region35: #{bidirectional_lstm_forward.4} parent=27 // loop_exit
                _
            $region28: #{bidirectional_lstm_forward.4} parent=23 // pred_fallthru
              _
            // Predicated region
            $region36: #{bidirectional_lstm_forward.4} parent=23 // pred_check
              _
            $region37: #{bidirectional_lstm_forward.4} parent=23 // pred_check_branch
              %217 = sbr.rel target = $region39
            $region38: #{bidirectional_lstm_forward.4} parent=23 // pred_region
              _
            $region39: #{bidirectional_lstm_forward.4} parent=23 // pred_fallthru
              _
          $region24: #{bidirectional_lstm_forward.4} parent=19 // pred_fallthru
            _
          %218 = vnop
        $region20: #{bidirectional_lstm_forward.4} parent=15 // pred_fallthru
          _
        // Predicated region
        $region40: #{bidirectional_lstm_forward.4} parent=15 // pred_check
          %p219 = pneg %p87
        $region41: #{bidirectional_lstm_forward.4} parent=15 // pred_check_branch
          %221 = sbr.rel (%p219) target = $region43
        $region42: #{bidirectional_lstm_forward.4} parent=15 // pred_region
          %p222 = scmp.lt.s32.totalorder %s15, 1
          %s223 = scalar_select %p222, %s15, 1
          %s224 = smul.addr %s223, 64
          %s225 = smul.addr %s224, 4
          %s226 = scalar_lea.vmem %s1, %s225
        $region43: #{bidirectional_lstm_forward.4} parent=15 // pred_fallthru
          _
      $region16: #{bidirectional_lstm_forward.4} parent=5 // pred_fallthru
        _
      %p227 = scmp.le.s32.totalorder 1, %s8
      %p228 = scmp.lt.s32.totalorder %s8, 3
      %p229 = pnand %p227, %p228
      %p230 = pneg %p229
      // Predicated region
      $region44: #{bidirectional_lstm_forward.4} parent=5 // pred_check
        _
      $region45: #{bidirectional_lstm_forward.4} parent=5 // pred_check_branch
        %232 = sbr.rel (%p229) target = $region47
      $region46: #{bidirectional_lstm_forward.4} parent=5 // pred_region
        %s233 = ssub.s32 %s8, 1
        %s234 = sand.u32 %s54, 1
        %s235 = sand.u32 %s54, 1
        %s236 = smul.addr %s235, 128
        %s237 = scalar_lea.vmem [#allocation4], %s236
        // Predicated region
        $region48: #{bidirectional_lstm_forward.4} parent=46 // pred_check
          %p238 = pneg %p67
        $region49: #{bidirectional_lstm_forward.4} parent=46 // pred_check_branch
          %240 = sbr.rel (%p238) target = $region51
        $region50: #{bidirectional_lstm_forward.4} parent=46 // pred_region
          _
        $region51: #{bidirectional_lstm_forward.4} parent=46 // pred_fallthru
          _
        %s241 = sand.u32 %s54, 1
        %s242 = sand.u32 %s54, 1
        %s243 = smul.addr %s242, 128
        %s244 = scalar_lea.vmem [#allocation4], %s243
        %p245 = pneg %p67
        %p246 = pneg %p64
        %p247 = scmp.lt.s32.totalorder %s18, 1
        %s248 = scalar_select %p247, %s18, 1
        %s249 = smul.addr %s248, 64
        %s250 = smul.addr %s249, 4
        %s251 = scalar_lea.vmem %s1, %s250
        %p252 = pneg %p93
        %p253 = pneg %p90
        %p254 = pneg %p133
        %p255 = pneg %p130
        %s256 = sand.u32 %s120, 1
        %s257 = sand.u32 %s120, 1
        %s258 = smul.addr %s257, 32
        %s259 = scalar_lea.vmem [#allocation5], %s258
        %s260 = ssub.s32 1, %s18
        %s261 = smul.u32 %s260, %s20
        %s262 = ssub.s32 0, %s20
        %s263 = smul.u32 %s18, %s262
        %s264 = sadd.s32 %s261, %s263
        %s265 = smul.u32 8, %s264
        %s266 = smul.u32 4, %s18
        %p267 = scmp.lt.s32.totalorder %s18, 1
        %s268 = scalar_select %p267, %s18, 1
        %s269 = smul.addr %s268, 64
        %s270 = smul.addr %s269, 4
        %s271 = scalar_lea.vmem %s1, %s270
        %s272 = ssub.s32 1, %s18
        %s273 = smul.u32 %s272, %s20
        %s274 = ssub.s32 0, %s20
        %s275 = smul.u32 %s18, %s274
        %s276 = sadd.s32 %s273, %s275
        %s277 = smul.u32 8, %s276
        %p279 = scmp.eq.s32.totalorder %s18, 1
        %p280 = scmp.eq.s32.totalorder %s20, 0
        // Predicated region
        $region52: #{bidirectional_lstm_forward.4} parent=46 // pred_check
          %p281 = pneg %p280
        $region53: #{bidirectional_lstm_forward.4} parent=46 // pred_check_branch
          %283 = sbr.rel (%p281) target = $region55
        $region54: #{bidirectional_lstm_forward.4} parent=46 // pred_region
          %284 = vst [vmem:[#allocation2] sm:$0xff] 0.0
          %285 = vst [vmem:[#allocation3] sm:$0xff] 0.0
        $region55: #{bidirectional_lstm_forward.4} parent=46 // pred_fallthru
          _
        %s286 = scalar_select %p279, 7, 0
        %s287 = smul.u32 %s286, 4
        %s288 = smul.addr %s287, 4
        %s289 = scalar_lea.vmem %s237, %s288 [#allocation4]
        %v290 = vld [vmem:[%s289] sm:$0xff]
        %v291 = vld [vmem:[%s289 + $0x8] sm:$0xff]
        %v292 = vunpack.c.l.bf16 %v290
        %v293 = vunpack.c.h.bf16 %v290
        %v294 = vunpack.c.l.bf16 %v291
        %v295 = vunpack.c.h.bf16 %v291
        %v296 = vld [vmem:[#allocation2] sm:$0xff]
        %v297 = vpack.c.bf16 %v296, %v296
        %v298 = vld [vmem:[%s271] sm:$0xff]
        %v299 = vld [vmem:[%s271 + $0x8] sm:$0xff]
        %v300 = vld [vmem:[%s271 + $0x10] sm:$0xff]
        %v301 = vld [vmem:[%s271 + $0x18] sm:$0xff]
        %v302 = vld [vmem:[%s271 + $0x20] sm:$0xff]
        %v303 = vld [vmem:[%s271 + $0x28] sm:$0xff]
        %v304 = vld [vmem:[%s271 + $0x30] sm:$0xff]
        %v305 = vld [vmem:[%s271 + $0x38] sm:$0xff]
        %v306 = vld [vmem:[%s271 + $0x40] sm:$0xff]
        %v307 = vld [vmem:[%s271 + $0x48] sm:$0xff]
        %v308 = vld [vmem:[%s271 + $0x50] sm:$0xff]
        %v309 = vld [vmem:[%s271 + $0x58] sm:$0xff]
        %v310 = vld [vmem:[%s271 + $0x60] sm:$0xff]
        %v311 = vld [vmem:[%s271 + $0x68] sm:$0xff]
        %v312 = vld [vmem:[%s271 + $0x70] sm:$0xff]
        %v313 = vld [vmem:[%s271 + $0x78] sm:$0xff]
        %v314 = vld [vmem:[%s271 + $0x80] sm:$0xff]
        %v315 = vld [vmem:[%s271 + $0x88] sm:$0xff]
        %v316 = vld [vmem:[%s271 + $0x90] sm:$0xff]
        %v317 = vld [vmem:[%s271 + $0x98] sm:$0xff]
        %v318 = vld [vmem:[%s271 + $0xa0] sm:$0xff]
        %v319 = vld [vmem:[%s271 + $0xa8] sm:$0xff]
        %v320 = vld [vmem:[%s271 + $0xb0] sm:$0xff]
        %v321 = vld [vmem:[%s271 + $0xb8] sm:$0xff]
        %v322 = vld [vmem:[%s271 + $0xc0] sm:$0xff]
        %v323 = vld [vmem:[%s271 + $0xc8] sm:$0xff]
        %v324 = vld [vmem:[%s271 + $0xd0] sm:$0xff]
        %v325 = vld [vmem:[%s271 + $0xd8] sm:$0xff]
        %v326 = vld [vmem:[%s271 + $0xe0] sm:$0xff]
        %v327 = vld [vmem:[%s271 + $0xe8] sm:$0xff]
        %v328 = vld [vmem:[%s271 + $0xf0] sm:$0xff]
        %v329 = vld [vmem:[%s271 + $0xf8] sm:$0xff]
        %v362 = vunpack.c.l.b16 %v298
        %v363 = vunpack.c.h.b16 %v298
        %v364 = vunpack.c.l.b16 %v299
        %v365 = vunpack.c.h.b16 %v299
        %v366 = vunpack.c.l.b16 %v300
        %v367 = vunpack.c.h.b16 %v300
        %v368 = vunpack.c.l.b16 %v301
        %v369 = vunpack.c.h.b16 %v301
        %v370 = vunpack.c.l.b16 %v302
        %v371 = vunpack.c.h.b16 %v302
        %v372 = vunpack.c.l.b16 %v303
        %v373 = vunpack.c.h.b16 %v303
        %v374 = vunpack.c.l.b16 %v304
        %v375 = vunpack.c.h.b16 %v304
        %v376 = vunpack.c.l.b16 %v305
        %v377 = vunpack.c.h.b16 %v305
        %v378 = vunpack.c.l.b16 %v306
        %v379 = vunpack.c.h.b16 %v306
        %v380 = vunpack.c.l.b16 %v307
        %v381 = vunpack.c.h.b16 %v307
        %v382 = vunpack.c.l.b16 %v308
        %v383 = vunpack.c.h.b16 %v308
        %v384 = vunpack.c.l.b16 %v309
        %v385 = vunpack.c.h.b16 %v309
        %v386 = vunpack.c.l.b16 %v310
        %v387 = vunpack.c.h.b16 %v310
        %v388 = vunpack.c.l.b16 %v311
        %v389 = vunpack.c.h.b16 %v311
        %v390 = vunpack.c.l.b16 %v312
        %v391 = vunpack.c.h.b16 %v312
        %v392 = vunpack.c.l.b16 %v313
        %v393 = vunpack.c.h.b16 %v313
        %v394 = vunpack.c.l.b16 %v314
        %v395 = vunpack.c.h.b16 %v314
        %v396 = vunpack.c.l.b16 %v315
        %v397 = vunpack.c.h.b16 %v315
        %v398 = vunpack.c.l.b16 %v316
        %v399 = vunpack.c.h.b16 %v316
        %v400 = vunpack.c.l.b16 %v317
        %v401 = vunpack.c.h.b16 %v317
        %v402 = vunpack.c.l.b16 %v318
        %v403 = vunpack.c.h.b16 %v318
        %v404 = vunpack.c.l.b16 %v319
        %v405 = vunpack.c.h.b16 %v319
        %v406 = vunpack.c.l.b16 %v320
        %v407 = vunpack.c.h.b16 %v320
        %v408 = vunpack.c.l.b16 %v321
        %v409 = vunpack.c.h.b16 %v321
        %v410 = vunpack.c.l.b16 %v322
        %v411 = vunpack.c.h.b16 %v322
        %v412 = vunpack.c.l.b16 %v323
        %v413 = vunpack.c.h.b16 %v323
        %v414 = vunpack.c.l.b16 %v324
        %v415 = vunpack.c.h.b16 %v324
        %v416 = vunpack.c.l.b16 %v325
        %v417 = vunpack.c.h.b16 %v325
        %v418 = vunpack.c.l.b16 %v326
        %v419 = vunpack.c.h.b16 %v326
        %v420 = vunpack.c.l.b16 %v327
        %v421 = vunpack.c.h.b16 %v327
        %v422 = vunpack.c.l.b16 %v328
        %v423 = vunpack.c.h.b16 %v328
        %v424 = vunpack.c.l.b16 %v329
        %v425 = vunpack.c.h.b16 %v329
        %v426 = vpack.c.b16 %v366, %v362
        %v427 = vpack.c.b16 %v367, %v363
        %v428 = vpack.c.b16 %v368, %v364
        %v429 = vpack.c.b16 %v369, %v365
        %v430 = vpack.c.b16 %v374, %v370
        %v431 = vpack.c.b16 %v375, %v371
        %v432 = vpack.c.b16 %v376, %v372
        %v433 = vpack.c.b16 %v377, %v373
        %v434 = vpack.c.b16 %v382, %v378
        %v435 = vpack.c.b16 %v383, %v379
        %v436 = vpack.c.b16 %v384, %v380
        %v437 = vpack.c.b16 %v385, %v381
        %v438 = vpack.c.b16 %v390, %v386
        %v439 = vpack.c.b16 %v391, %v387
        %v440 = vpack.c.b16 %v392, %v388
        %v441 = vpack.c.b16 %v393, %v389
        %v442 = vpack.c.b16 %v398, %v394
        %v443 = vpack.c.b16 %v399, %v395
        %v444 = vpack.c.b16 %v400, %v396
        %v445 = vpack.c.b16 %v401, %v397
        %v446 = vpack.c.b16 %v406, %v402
        %v447 = vpack.c.b16 %v407, %v403
        %v448 = vpack.c.b16 %v408, %v404
        %v449 = vpack.c.b16 %v409, %v405
        %v450 = vpack.c.b16 %v414, %v410
        %v451 = vpack.c.b16 %v415, %v411
        %v452 = vpack.c.b16 %v416, %v412
        %v453 = vpack.c.b16 %v417, %v413
        %v454 = vpack.c.b16 %v422, %v418
        %v455 = vpack.c.b16 %v423, %v419
        %v456 = vpack.c.b16 %v424, %v420
        %v457 = vpack.c.b16 %v425, %v421
        %490 = vmatprep.subr.bf16.mxu0 %v427
        %491 = vmatpush1.bf16.msra.mxu0 %v426
        %492 = vmatprep.subr.bf16.mxu0 %v431
        %493 = vmatpush1.bf16.msra.mxu0 %v430
        %494 = vmatprep.subr.bf16.mxu0 %v435
        %495 = vmatpush1.bf16.msra.mxu0 %v434
        %496 = vmatprep.subr.bf16.mxu0 %v439
        %497 = vmatpush1.bf16.msra.mxu0 %v438
        %498 = vmatprep.subr.bf16.mxu0 %v443
        %499 = vmatpush1.bf16.msra.mxu0 %v442
        %500 = vmatprep.subr.bf16.mxu0 %v447
        %501 = vmatpush1.bf16.msra.mxu0 %v446
        %502 = vmatprep.subr.bf16.mxu0 %v451
        %503 = vmatpush1.bf16.msra.mxu0 %v450
        %504 = vmatprep.subr.bf16.mxu0 %v455
        %505 = vmatpush1.bf16.msra.mxu0 %v454
        %506 = vmatprep.subr.bf16.mxu0 0
        %507 = vmatpush1.bf16.msra.mxu0 0
        %508 = vmatprep.subr.bf16.mxu0 0
        %509 = vmatpush1.bf16.msra.mxu0 0
        %510 = vmatprep.subr.bf16.mxu0 0
        %511 = vmatpush1.bf16.msra.mxu0 0
        %512 = vmatprep.subr.bf16.mxu0 0
        %513 = vmatpush1.bf16.msra.mxu0 0
        %514 = vmatprep.subr.bf16.mxu0 0
        %515 = vmatpush1.bf16.msra.mxu0 0
        %516 = vmatprep.subr.bf16.mxu0 0
        %517 = vmatpush1.bf16.msra.mxu0 0
        %518 = vmatprep.subr.bf16.mxu0 0
        %519 = vmatpush1.bf16.msra.mxu0 0
        %520 = vmatprep.subr.bf16.mxu0 0
        %521 = vmatpush1.bf16.msra.mxu0 0
        %522 = vmatprep.mubr.bf16.mxu0 0
        %523 = vmatmul.mubr.bf16.gmra.mrb[0].mxu0 %v297
        %v524 = vpop.f32.mrb[0].mxu0
        %v525 = vadd.f32 0.0, %v524
        %v526 = vpop.f32.mrb[0].mxu0
        %v527 = vadd.f32 0.0, %v526
        %v528 = vpop.f32.mrb[0].mxu0
        %v529 = vpop.f32.mrb[0].mxu0
        %530 = vdwg.mxu0
        %531 = vmatprep.subr.bf16.mxu0 %v429
        %532 = vmatpush1.bf16.msra.mxu0 %v428
        %533 = vmatprep.subr.bf16.mxu0 %v433
        %534 = vmatpush1.bf16.msra.mxu0 %v432
        %535 = vmatprep.subr.bf16.mxu0 %v437
        %536 = vmatpush1.bf16.msra.mxu0 %v436
        %537 = vmatprep.subr.bf16.mxu0 %v441
        %538 = vmatpush1.bf16.msra.mxu0 %v440
        %539 = vmatprep.subr.bf16.mxu0 %v445
        %540 = vmatpush1.bf16.msra.mxu0 %v444
        %541 = vmatprep.subr.bf16.mxu0 %v449
        %542 = vmatpush1.bf16.msra.mxu0 %v448
        %543 = vmatprep.subr.bf16.mxu0 %v453
        %544 = vmatpush1.bf16.msra.mxu0 %v452
        %545 = vmatprep.subr.bf16.mxu0 %v457
        %546 = vmatpush1.bf16.msra.mxu0 %v456
        %547 = vmatprep.subr.bf16.mxu0 0
        %548 = vmatpush1.bf16.msra.mxu0 0
        %549 = vmatprep.subr.bf16.mxu0 0
        %550 = vmatpush1.bf16.msra.mxu0 0
        %551 = vmatprep.subr.bf16.mxu0 0
        %552 = vmatpush1.bf16.msra.mxu0 0
        %553 = vmatprep.subr.bf16.mxu0 0
        %554 = vmatpush1.bf16.msra.mxu0 0
        %555 = vmatprep.subr.bf16.mxu0 0
        %556 = vmatpush1.bf16.msra.mxu0 0
        %557 = vmatprep.subr.bf16.mxu0 0
        %558 = vmatpush1.bf16.msra.mxu0 0
        %559 = vmatprep.subr.bf16.mxu0 0
        %560 = vmatpush1.bf16.msra.mxu0 0
        %561 = vmatprep.subr.bf16.mxu0 0
        %562 = vmatpush1.bf16.msra.mxu0 0
        %563 = vmatprep.mubr.bf16.mxu0 0
        %564 = vmatmul.mubr.bf16.gmra.mrb[0].mxu0 %v297
        %v565 = vpop.f32.mrb[0].mxu0
        %v566 = vadd.f32 0.0, %v565
        %v567 = vpop.f32.mrb[0].mxu0
        %v568 = vadd.f32 0.0, %v567
        %v569 = vpop.f32.mrb[0].mxu0
        %v570 = vpop.f32.mrb[0].mxu0
        %571 = vdwg.mxu0
        %v572 = vadd.f32 %v292, %v525
        %v573 = vadd.f32 %v293, %v527
        %v574 = vadd.f32 %v294, %v566
        %v575 = vadd.f32 %v295, %v568
        %v576 = vmul.f32 %v572, 0.5
        %v577 = vmul.f32 %v573, 0.5
        %v578 = vmul.f32 %v574, 0.5
        %v579 = vtanh.pop %v576
        %v580 = vtanh.pop %v577
        %v581 = vtanh.pop %v578
        %v582 = vmul.f32 %v579, 0.5
        %v583 = vmul.f32 %v580, 0.5
        %v584 = vmul.f32 %v581, 0.5
        %v585 = vadd.f32 %v582, 0.5
        %v586 = vadd.f32 %v583, 0.5
        %v587 = vadd.f32 %v584, 0.5
        %v588 = vtanh.pop %v575
        %v589 = vld [vmem:[#allocation3] sm:$0xff]
        %v590 = vmul.f32 %v586, %v589
        %v591 = vmul.f32 %v585, %v588
        %v592 = vadd.f32 %v590, %v591
        %v593 = vtanh.pop %v592
        %v594 = vmul.f32 %v587, %v593
        %595 = vst [vmem:[#allocation3] sm:$0xff] %v592
        %596 = vst [vmem:[#allocation2] sm:$0xff] %v594
        %v597 = vpack.c.bf16 %v594, %v594
        %s598 = smul.addr %s286, 4
        %s599 = scalar_lea.vmem %s259, %s598 [#allocation5]
        %600 = vst [vmem:[%s599] sm:$0xf] %v597
        %s601 = scalar_select %p279, 6, 1
        %s602 = smul.u32 %s601, 4
        %s603 = smul.addr %s602, 4
        %s604 = scalar_lea.vmem %s237, %s603 [#allocation4]
        %v605 = vld [vmem:[%s604] sm:$0xff]
        %v606 = vld [vmem:[%s604 + $0x8] sm:$0xff]
        %v607 = vunpack.c.l.bf16 %v605
        %v608 = vunpack.c.h.bf16 %v605
        %v609 = vunpack.c.l.bf16 %v606
        %v610 = vunpack.c.h.bf16 %v606
        %v611 = vld [vmem:[#allocation2] sm:$0xff]
        %v612 = vpack.c.bf16 %v611, %v611
        %v613 = vld [vmem:[%s271] sm:$0xff]
        %v614 = vld [vmem:[%s271 + $0x8] sm:$0xff]
        %v615 = vld [vmem:[%s271 + $0x10] sm:$0xff]
        %v616 = vld [vmem:[%s271 + $0x18] sm:$0xff]
        %v617 = vld [vmem:[%s271 + $0x20] sm:$0xff]
        %v618 = vld [vmem:[%s271 + $0x28] sm:$0xff]
        %v619 = vld [vmem:[%s271 + $0x30] sm:$0xff]
        %v620 = vld [vmem:[%s271 + $0x38] sm:$0xff]
        %v621 = vld [vmem:[%s271 + $0x40] sm:$0xff]
        %v622 = vld [vmem:[%s271 + $0x48] sm:$0xff]
        %v623 = vld [vmem:[%s271 + $0x50] sm:$0xff]
        %v624 = vld [vmem:[%s271 + $0x58] sm:$0xff]
        %v625 = vld [vmem:[%s271 + $0x60] sm:$0xff]
        %v626 = vld [vmem:[%s271 + $0x68] sm:$0xff]
        %v627 = vld [vmem:[%s271 + $0x70] sm:$0xff]
        %v628 = vld [vmem:[%s271 + $0x78] sm:$0xff]
        %v629 = vld [vmem:[%s271 + $0x80] sm:$0xff]
        %v630 = vld [vmem:[%s271 + $0x88] sm:$0xff]
        %v631 = vld [vmem:[%s271 + $0x90] sm:$0xff]
        %v632 = vld [vmem:[%s271 + $0x98] sm:$0xff]
        %v633 = vld [vmem:[%s271 + $0xa0] sm:$0xff]
        %v634 = vld [vmem:[%s271 + $0xa8] sm:$0xff]
        %v635 = vld [vmem:[%s271 + $0xb0] sm:$0xff]
        %v636 = vld [vmem:[%s271 + $0xb8] sm:$0xff]
        %v637 = vld [vmem:[%s271 + $0xc0] sm:$0xff]
        %v638 = vld [vmem:[%s271 + $0xc8] sm:$0xff]
        %v639 = vld [vmem:[%s271 + $0xd0] sm:$0xff]
        %v640 = vld [vmem:[%s271 + $0xd8] sm:$0xff]
        %v641 = vld [vmem:[%s271 + $0xe0] sm:$0xff]
        %v642 = vld [vmem:[%s271 + $0xe8] sm:$0xff]
        %v643 = vld [vmem:[%s271 + $0xf0] sm:$0xff]
        %v644 = vld [vmem:[%s271 + $0xf8] sm:$0xff]
        %v677 = vunpack.c.l.b16 %v613
        %v678 = vunpack.c.h.b16 %v613
        %v679 = vunpack.c.l.b16 %v614
        %v680 = vunpack.c.h.b16 %v614
        %v681 = vunpack.c.l.b16 %v615
        %v682 = vunpack.c.h.b16 %v615
        %v683 = vunpack.c.l.b16 %v616
        %v684 = vunpack.c.h.b16 %v616
        %v685 = vunpack.c.l.b16 %v617
        %v686 = vunpack.c.h.b16 %v617
        %v687 = vunpack.c.l.b16 %v618
        %v688 = vunpack.c.h.b16 %v618
        %v689 = vunpack.c.l.b16 %v619
        %v690 = vunpack.c.h.b16 %v619
        %v691 = vunpack.c.l.b16 %v620
        %v692 = vunpack.c.h.b16 %v620
        %v693 = vunpack.c.l.b16 %v621
        %v694 = vunpack.c.h.b16 %v621
        %v695 = vunpack.c.l.b16 %v622
        %v696 = vunpack.c.h.b16 %v622
        %v697 = vunpack.c.l.b16 %v623
        %v698 = vunpack.c.h.b16 %v623
        %v699 = vunpack.c.l.b16 %v624
        %v700 = vunpack.c.h.b16 %v624
        %v701 = vunpack.c.l.b16 %v625
        %v702 = vunpack.c.h.b16 %v625
        %v703 = vunpack.c.l.b16 %v626
        %v704 = vunpack.c.h.b16 %v626
        %v705 = vunpack.c.l.b16 %v627
        %v706 = vunpack.c.h.b16 %v627
        %v707 = vunpack.c.l.b16 %v628
        %v708 = vunpack.c.h.b16 %v628
        %v709 = vunpack.c.l.b16 %v629
        %v710 = vunpack.c.h.b16 %v629
        %v711 = vunpack.c.l.b16 %v630
        %v712 = vunpack.c.h.b16 %v630
        %v713 = vunpack.c.l.b16 %v631
        %v714 = vunpack.c.h.b16 %v631
        %v715 = vunpack.c.l.b16 %v632
        %v716 = vunpack.c.h.b16 %v632
        %v717 = vunpack.c.l.b16 %v633
        %v718 = vunpack.c.h.b16 %v633
        %v719 = vunpack.c.l.b16 %v634
        %v720 = vunpack.c.h.b16 %v634
        %v721 = vunpack.c.l.b16 %v635
        %v722 = vunpack.c.h.b16 %v635
        %v723 = vunpack.c.l.b16 %v636
        %v724 = vunpack.c.h.b16 %v636
        %v725 = vunpack.c.l.b16 %v637
        %v726 = vunpack.c.h.b16 %v637
        %v727 = vunpack.c.l.b16 %v638
        %v728 = vunpack.c.h.b16 %v638
        %v729 = vunpack.c.l.b16 %v639
        %v730 = vunpack.c.h.b16 %v639
        %v731 = vunpack.c.l.b16 %v640
        %v732 = vunpack.c.h.b16 %v640
        %v733 = vunpack.c.l.b16 %v641
        %v734 = vunpack.c.h.b16 %v641
        %v735 = vunpack.c.l.b16 %v642
        %v736 = vunpack.c.h.b16 %v642
        %v737 = vunpack.c.l.b16 %v643
        %v738 = vunpack.c.h.b16 %v643
        %v739 = vunpack.c.l.b16 %v644
        %v740 = vunpack.c.h.b16 %v644
        %v741 = vpack.c.b16 %v681, %v677
        %v742 = vpack.c.b16 %v682, %v678
        %v743 = vpack.c.b16 %v683, %v679
        %v744 = vpack.c.b16 %v684, %v680
        %v745 = vpack.c.b16 %v689, %v685
        %v746 = vpack.c.b16 %v690, %v686
        %v747 = vpack.c.b16 %v691, %v687
        %v748 = vpack.c.b16 %v692, %v688
        %v749 = vpack.c.b16 %v697, %v693
        %v750 = vpack.c.b16 %v698, %v694
        %v751 = vpack.c.b16 %v699, %v695
        %v752 = vpack.c.b16 %v700, %v696
        %v753 = vpack.c.b16 %v705, %v701
        %v754 = vpack.c.b16 %v706, %v702
        %v755 = vpack.c.b16 %v707, %v703
        %v756 = vpack.c.b16 %v708, %v704
        %v757 = vpack.c.b16 %v713, %v709
        %v758 = vpack.c.b16 %v714, %v710
        %v759 = vpack.c.b16 %v715, %v711
        %v760 = vpack.c.b16 %v716, %v712
        %v761 = vpack.c.b16 %v721, %v717
        %v762 = vpack.c.b16 %v722, %v718
        %v763 = vpack.c.b16 %v723, %v719
        %v764 = vpack.c.b16 %v724, %v720
        %v765 = vpack.c.b16 %v729, %v725
        %v766 = vpack.c.b16 %v730, %v726
        %v767 = vpack.c.b16 %v731, %v727
        %v768 = vpack.c.b16 %v732, %v728
        %v769 = vpack.c.b16 %v737, %v733
        %v770 = vpack.c.b16 %v738, %v734
        %v771 = vpack.c.b16 %v739, %v735
        %v772 = vpack.c.b16 %v740, %v736
        %805 = vmatprep.subr.bf16.mxu0 %v742
        %806 = vmatpush1.bf16.msra.mxu0 %v741
        %807 = vmatprep.subr.bf16.mxu0 %v746
        %808 = vmatpush1.bf16.msra.mxu0 %v745
        %809 = vmatprep.subr.bf16.mxu0 %v750
        %810 = vmatpush1.bf16.msra.mxu0 %v749
        %811 = vmatprep.subr.bf16.mxu0 %v754
        %812 = vmatpush1.bf16.msra.mxu0 %v753
        %813 = vmatprep.subr.bf16.mxu0 %v758
        %814 = vmatpush1.bf16.msra.mxu0 %v757
        %815 = vmatprep.subr.bf16.mxu0 %v762
        %816 = vmatpush1.bf16.msra.mxu0 %v761
        %817 = vmatprep.subr.bf16.mxu0 %v766
        %818 = vmatpush1.bf16.msra.mxu0 %v765
        %819 = vmatprep.subr.bf16.mxu0 %v770
        %820 = vmatpush1.bf16.msra.mxu0 %v769
        %821 = vmatprep.subr.bf16.mxu0 0
        %822 = vmatpush1.bf16.msra.mxu0 0
        %823 = vmatprep.subr.bf16.mxu0 0
        %824 = vmatpush1.bf16.msra.mxu0 0
        %825 = vmatprep.subr.bf16.mxu0 0
        %826 = vmatpush1.bf16.msra.mxu0 0
        %827 = vmatprep.subr.bf16.mxu0 0
        %828 = vmatpush1.bf16.msra.mxu0 0
        %829 = vmatprep.subr.bf16.mxu0 0
        %830 = vmatpush1.bf16.msra.mxu0 0
        %831 = vmatprep.subr.bf16.mxu0 0
        %832 = vmatpush1.bf16.msra.mxu0 0
        %833 = vmatprep.subr.bf16.mxu0 0
        %834 = vmatpush1.bf16.msra.mxu0 0
        %835 = vmatprep.subr.bf16.mxu0 0
        %836 = vmatpush1.bf16.msra.mxu0 0
        %837 = vmatprep.mubr.bf16.mxu0 0
        %838 = vmatmul.mubr.bf16.gmra.mrb[0].mxu0 %v612
        %v839 = vpop.f32.mrb[0].mxu0
        %v840 = vadd.f32 0.0, %v839
        %v841 = vpop.f32.mrb[0].mxu0
        %v842 = vadd.f32 0.0, %v841
        %v843 = vpop.f32.mrb[0].mxu0
        %v844 = vpop.f32.mrb[0].mxu0
        %845 = vdwg.mxu0
        %846 = vmatprep.subr.bf16.mxu0 %v744
        %847 = vmatpush1.bf16.msra.mxu0 %v743
        %848 = vmatprep.subr.bf16.mxu0 %v748
        %849 = vmatpush1.bf16.msra.mxu0 %v747
        %850 = vmatprep.subr.bf16.mxu0 %v752
        %851 = vmatpush1.bf16.msra.mxu0 %v751
        %852 = vmatprep.subr.bf16.mxu0 %v756
        %853 = vmatpush1.bf16.msra.mxu0 %v755
        %854 = vmatprep.subr.bf16.mxu0 %v760
        %855 = vmatpush1.bf16.msra.mxu0 %v759
        %856 = vmatprep.subr.bf16.mxu0 %v764
        %857 = vmatpush1.bf16.msra.mxu0 %v763
        %858 = vmatprep.subr.bf16.mxu0 %v768
        %859 = vmatpush1.bf16.msra.mxu0 %v767
        %860 = vmatprep.subr.bf16.mxu0 %v772
        %861 = vmatpush1.bf16.msra.mxu0 %v771
        %862 = vmatprep.subr.bf16.mxu0 0
        %863 = vmatpush1.bf16.msra.mxu0 0
        %864 = vmatprep.subr.bf16.mxu0 0
        %865 = vmatpush1.bf16.msra.mxu0 0
        %866 = vmatprep.subr.bf16.mxu0 0
        %867 = vmatpush1.bf16.msra.mxu0 0
        %868 = vmatprep.subr.bf16.mxu0 0
        %869 = vmatpush1.bf16.msra.mxu0 0
        %870 = vmatprep.subr.bf16.mxu0 0
        %871 = vmatpush1.bf16.msra.mxu0 0
        %872 = vmatprep.subr.bf16.mxu0 0
        %873 = vmatpush1.bf16.msra.mxu0 0
        %874 = vmatprep.subr.bf16.mxu0 0
        %875 = vmatpush1.bf16.msra.mxu0 0
        %876 = vmatprep.subr.bf16.mxu0 0
        %877 = vmatpush1.bf16.msra.mxu0 0
        %878 = vmatprep.mubr.bf16.mxu0 0
        %879 = vmatmul.mubr.bf16.gmra.mrb[0].mxu0 %v612
        %v880 = vpop.f32.mrb[0].mxu0
        %v881 = vadd.f32 0.0, %v880
        %v882 = vpop.f32.mrb[0].mxu0
        %v883 = vadd.f32 0.0, %v882
        %v884 = vpop.f32.mrb[0].mxu0
        %v885 = vpop.f32.mrb[0].mxu0
        %886 = vdwg.mxu0
        %v887 = vadd.f32 %v607, %v840
        %v888 = vadd.f32 %v608, %v842
        %v889 = vadd.f32 %v609, %v881
        %v890 = vadd.f32 %v610, %v883
        %v891 = vmul.f32 %v887, 0.5
        %v892 = vmul.f32 %v888, 0.5
        %v893 = vmul.f32 %v889, 0.5
        %v894 = vtanh.pop %v891
        %v895 = vtanh.pop %v892
        %v896 = vtanh.pop %v893
        %v897 = vmul.f32 %v894, 0.5
        %v898 = vmul.f32 %v895, 0.5
        %v899 = vmul.f32 %v896, 0.5
        %v900 = vadd.f32 %v897, 0.5
        %v901 = vadd.f32 %v898, 0.5
        %v902 = vadd.f32 %v899, 0.5
        %v903 = vtanh.pop %v890
        %v904 = vld [vmem:[#allocation3] sm:$0xff]
        %v905 = vmul.f32 %v901, %v904
        %v906 = vmul.f32 %v900, %v903
        %v907 = vadd.f32 %v905, %v906
        %v908 = vtanh.pop %v907
        %v909 = vmul.f32 %v902, %v908
        %910 = vst [vmem:[#allocation3] sm:$0xff] %v907
        %911 = vst [vmem:[#allocation2] sm:$0xff] %v909
        %v912 = vpack.c.bf16 %v909, %v909
        %s913 = smul.addr %s601, 4
        %s914 = scalar_lea.vmem %s259, %s913 [#allocation5]
        %915 = vst [vmem:[%s914] sm:$0xf] %v912
        %s916 = scalar_select %p279, 5, 2
        %s917 = smul.u32 %s916, 4
        %s918 = smul.addr %s917, 4
        %s919 = scalar_lea.vmem %s237, %s918 [#allocation4]
        %v920 = vld [vmem:[%s919] sm:$0xff]
        %v921 = vld [vmem:[%s919 + $0x8] sm:$0xff]
        %v922 = vunpack.c.l.bf16 %v920
        %v923 = vunpack.c.h.bf16 %v920
        %v924 = vunpack.c.l.bf16 %v921
        %v925 = vunpack.c.h.bf16 %v921
        %v926 = vld [vmem:[#allocation2] sm:$0xff]
        %v927 = vpack.c.bf16 %v926, %v926
        %v928 = vld [vmem:[%s271] sm:$0xff]
        %v929 = vld [vmem:[%s271 + $0x8] sm:$0xff]
        %v930 = vld [vmem:[%s271 + $0x10] sm:$0xff]
        %v931 = vld [vmem:[%s271 + $0x18] sm:$0xff]
        %v932 = vld [vmem:[%s271 + $0x20] sm:$0xff]
        %v933 = vld [vmem:[%s271 + $0x28] sm:$0xff]
        %v934 = vld [vmem:[%s271 + $0x30] sm:$0xff]
        %v935 = vld [vmem:[%s271 + $0x38] sm:$0xff]
        %v936 = vld [vmem:[%s271 + $0x40] sm:$0xff]
        %v937 = vld [vmem:[%s271 + $0x48] sm:$0xff]
        %v938 = vld [vmem:[%s271 + $0x50] sm:$0xff]
        %v939 = vld [vmem:[%s271 + $0x58] sm:$0xff]
        %v940 = vld [vmem:[%s271 + $0x60] sm:$0xff]
        %v941 = vld [vmem:[%s271 + $0x68] sm:$0xff]
        %v942 = vld [vmem:[%s271 + $0x70] sm:$0xff]
        %v943 = vld [vmem:[%s271 + $0x78] sm:$0xff]
        %v944 = vld [vmem:[%s271 + $0x80] sm:$0xff]
        %v945 = vld [vmem:[%s271 + $0x88] sm:$0xff]
        %v946 = vld [vmem:[%s271 + $0x90] sm:$0xff]
        %v947 = vld [vmem:[%s271 + $0x98] sm:$0xff]
        %v948 = vld [vmem:[%s271 + $0xa0] sm:$0xff]
        %v949 = vld [vmem:[%s271 + $0xa8] sm:$0xff]
        %v950 = vld [vmem:[%s271 + $0xb0] sm:$0xff]
        %v951 = vld [vmem:[%s271 + $0xb8] sm:$0xff]
        %v952 = vld [vmem:[%s271 + $0xc0] sm:$0xff]
        %v953 = vld [vmem:[%s271 + $0xc8] sm:$0xff]
        %v954 = vld [vmem:[%s271 + $0xd0] sm:$0xff]
        %v955 = vld [vmem:[%s271 + $0xd8] sm:$0xff]
        %v956 = vld [vmem:[%s271 + $0xe0] sm:$0xff]
        %v957 = vld [vmem:[%s271 + $0xe8] sm:$0xff]
        %v958 = vld [vmem:[%s271 + $0xf0] sm:$0xff]
        %v959 = vld [vmem:[%s271 + $0xf8] sm:$0xff]
        %v992 = vunpack.c.l.b16 %v928
        %v993 = vunpack.c.h.b16 %v928
        %v994 = vunpack.c.l.b16 %v929
        %v995 = vunpack.c.h.b16 %v929
        %v996 = vunpack.c.l.b16 %v930
        %v997 = vunpack.c.h.b16 %v930
        %v998 = vunpack.c.l.b16 %v931
        %v999 = vunpack.c.h.b16 %v931
        %v1000 = vunpack.c.l.b16 %v932
        %v1001 = vunpack.c.h.b16 %v932
        %v1002 = vunpack.c.l.b16 %v933
        %v1003 = vunpack.c.h.b16 %v933
        %v1004 = vunpack.c.l.b16 %v934
        %v1005 = vunpack.c.h.b16 %v934
        %v1006 = vunpack.c.l.b16 %v935
        %v1007 = vunpack.c.h.b16 %v935
        %v1008 = vunpack.c.l.b16 %v936
        %v1009 = vunpack.c.h.b16 %v936
        %v1010 = vunpack.c.l.b16 %v937
        %v1011 = vunpack.c.h.b16 %v937
        %v1012 = vunpack.c.l.b16 %v938
        %v1013 = vunpack.c.h.b16 %v938
        %v1014 = vunpack.c.l.b16 %v939
        %v1015 = vunpack.c.h.b16 %v939
        %v1016 = vunpack.c.l.b16 %v940
        %v1017 = vunpack.c.h.b16 %v940
        %v1018 = vunpack.c.l.b16 %v941
        %v1019 = vunpack.c.h.b16 %v941
        %v1020 = vunpack.c.l.b16 %v942
        %v1021 = vunpack.c.h.b16 %v942
        %v1022 = vunpack.c.l.b16 %v943
        %v1023 = vunpack.c.h.b16 %v943
        %v1024 = vunpack.c.l.b16 %v944
        %v1025 = vunpack.c.h.b16 %v944
        %v1026 = vunpack.c.l.b16 %v945
        %v1027 = vunpack.c.h.b16 %v945
        %v1028 = vunpack.c.l.b16 %v946
        %v1029 = vunpack.c.h.b16 %v946
        %v1030 = vunpack.c.l.b16 %v947
        %v1031 = vunpack.c.h.b16 %v947
        %v1032 = vunpack.c.l.b16 %v948
        %v1033 = vunpack.c.h.b16 %v948
        %v1034 = vunpack.c.l.b16 %v949
        %v1035 = vunpack.c.h.b16 %v949
        %v1036 = vunpack.c.l.b16 %v950
        %v1037 = vunpack.c.h.b16 %v950
        %v1038 = vunpack.c.l.b16 %v951
        %v1039 = vunpack.c.h.b16 %v951
        %v1040 = vunpack.c.l.b16 %v952
        %v1041 = vunpack.c.h.b16 %v952
        %v1042 = vunpack.c.l.b16 %v953
        %v1043 = vunpack.c.h.b16 %v953
        %v1044 = vunpack.c.l.b16 %v954
        %v1045 = vunpack.c.h.b16 %v954
        %v1046 = vunpack.c.l.b16 %v955
        %v1047 = vunpack.c.h.b16 %v955
        %v1048 = vunpack.c.l.b16 %v956
        %v1049 = vunpack.c.h.b16 %v956
        %v1050 = vunpack.c.l.b16 %v957
        %v1051 = vunpack.c.h.b16 %v957
        %v1052 = vunpack.c.l.b16 %v958
        %v1053 = vunpack.c.h.b16 %v958
        %v1054 = vunpack.c.l.b16 %v959
        %v1055 = vunpack.c.h.b16 %v959
        %v1056 = vpack.c.b16 %v996, %v992
        %v1057 = vpack.c.b16 %v997, %v993
        %v1058 = vpack.c.b16 %v998, %v994
        %v1059 = vpack.c.b16 %v999, %v995
        %v1060 = vpack.c.b16 %v1004, %v1000
        %v1061 = vpack.c.b16 %v1005, %v1001
        %v1062 = vpack.c.b16 %v1006, %v1002
        %v1063 = vpack.c.b16 %v1007, %v1003
        %v1064 = vpack.c.b16 %v1012, %v1008
        %v1065 = vpack.c.b16 %v1013, %v1009
        %v1066 = vpack.c.b16 %v1014, %v1010
        %v1067 = vpack.c.b16 %v1015, %v1011
        %v1068 = vpack.c.b16 %v1020, %v1016
        %v1069 = vpack.c.b16 %v1021, %v1017
        %v1070 = vpack.c.b16 %v1022, %v1018
        %v1071 = vpack.c.b16 %v1023, %v1019
        %v1072 = vpack.c.b16 %v1028, %v1024
        %v1073 = vpack.c.b16 %v1029, %v1025
        %v1074 = vpack.c.b16 %v1030, %v1026
        %v1075 = vpack.c.b16 %v1031, %v1027
        %v1076 = vpack.c.b16 %v1036, %v1032
        %v1077 = vpack.c.b16 %v1037, %v1033
        %v1078 = vpack.c.b16 %v1038, %v1034
        %v1079 = vpack.c.b16 %v1039, %v1035
        %v1080 = vpack.c.b16 %v1044, %v1040
        %v1081 = vpack.c.b16 %v1045, %v1041
        %v1082 = vpack.c.b16 %v1046, %v1042
        %v1083 = vpack.c.b16 %v1047, %v1043
        %v1084 = vpack.c.b16 %v1052, %v1048
        %v1085 = vpack.c.b16 %v1053, %v1049
        %v1086 = vpack.c.b16 %v1054, %v1050
        %v1087 = vpack.c.b16 %v1055, %v1051
        %1120 = vmatprep.subr.bf16.mxu0 %v1057
        %1121 = vmatpush1.bf16.msra.mxu0 %v1056
        %1122 = vmatprep.subr.bf16.mxu0 %v1061
        %1123 = vmatpush1.bf16.msra.mxu0 %v1060
        %1124 = vmatprep.subr.bf16.mxu0 %v1065
        %1125 = vmatpush1.bf16.msra.mxu0 %v1064
        %1126 = vmatprep.subr.bf16.mxu0 %v1069
        %1127 = vmatpush1.bf16.msra.mxu0 %v1068
        %1128 = vmatprep.subr.bf16.mxu0 %v1073
        %1129 = vmatpush1.bf16.msra.mxu0 %v1072
        %1130 = vmatprep.subr.bf16.mxu0 %v1077
        %1131 = vmatpush1.bf16.msra.mxu0 %v1076
        %1132 = vmatprep.subr.bf16.mxu0 %v1081
        %1133 = vmatpush1.bf16.msra.mxu0 %v1080
        %1134 = vmatprep.subr.bf16.mxu0 %v1085
        %1135 = vmatpush1.bf16.msra.mxu0 %v1084
        %1136 = vmatprep.subr.bf16.mxu0 0
        %1137 = vmatpush1.bf16.msra.mxu0 0
        %1138 = vmatprep.subr.bf16.mxu0 0
        %1139 = vmatpush1.bf16.msra.mxu0 0
        %1140 = vmatprep.subr.bf16.mxu0 0
        %1141 = vmatpush1.bf16.msra.mxu0 0
        %1142 = vmatprep.subr.bf16.mxu0 0
        %1143 = vmatpush1.bf16.msra.mxu0 0
        %1144 = vmatprep.subr.bf16.mxu0 0
        %1145 = vmatpush1.bf16.msra.mxu0 0
        %1146 = vmatprep.subr.bf16.mxu0 0
        %1147 = vmatpush1.bf16.msra.mxu0 0
        %1148 = vmatprep.subr.bf16.mxu0 0
        %1149 = vmatpush1.bf16.msra.mxu0 0
        %1150 = vmatprep.subr.bf16.mxu0 0
        %1151 = vmatpush1.bf16.msra.mxu0 0
        %1152 = vmatprep.mubr.bf16.mxu0 0
        %1153 = vmatmul.mubr.bf16.gmra.mrb[0].mxu0 %v927
        %v1154 = vpop.f32.mrb[0].mxu0
        %v1155 = vadd.f32 0.0, %v1154
        %v1156 = vpop.f32.mrb[0].mxu0
        %v1157 = vadd.f32 0.0, %v1156
        %v1158 = vpop.f32.mrb[0].mxu0
        %v1159 = vpop.f32.mrb[0].mxu0
        %1160 = vdwg.mxu0
        %1161 = vmatprep.subr.bf16.mxu0 %v1059
        %1162 = vmatpush1.bf16.msra.mxu0 %v1058
        %1163 = vmatprep.subr.bf16.mxu0 %v1063
        %1164 = vmatpush1.bf16.msra.mxu0 %v1062
        %1165 = vmatprep.subr.bf16.mxu0 %v1067
        %1166 = vmatpush1.bf16.msra.mxu0 %v1066
        %1167 = vmatprep.subr.bf16.mxu0 %v1071
        %1168 = vmatpush1.bf16.msra.mxu0 %v1070
        %1169 = vmatprep.subr.bf16.mxu0 %v1075
        %1170 = vmatpush1.bf16.msra.mxu0 %v1074
        %1171 = vmatprep.subr.bf16.mxu0 %v1079
        %1172 = vmatpush1.bf16.msra.mxu0 %v1078
        %1173 = vmatprep.subr.bf16.mxu0 %v1083
        %1174 = vmatpush1.bf16.msra.mxu0 %v1082
        %1175 = vmatprep.subr.bf16.mxu0 %v1087
        %1176 = vmatpush1.bf16.msra.mxu0 %v1086
        %1177 = vmatprep.subr.bf16.mxu0 0
        %1178 = vmatpush1.bf16.msra.mxu0 0
        %1179 = vmatprep.subr.bf16.mxu0 0
        %1180 = vmatpush1.bf16.msra.mxu0 0
        %1181 = vmatprep.subr.bf16.mxu0 0
        %1182 = vmatpush1.bf16.msra.mxu0 0
        %1183 = vmatprep.subr.bf16.mxu0 0
        %1184 = vmatpush1.bf16.msra.mxu0 0
        %1185 = vmatprep.subr.bf16.mxu0 0
        %1186 = vmatpush1.bf16.msra.mxu0 0
        %1187 = vmatprep.subr.bf16.mxu0 0
        %1188 = vmatpush1.bf16.msra.mxu0 0
        %1189 = vmatprep.subr.bf16.mxu0 0
        %1190 = vmatpush1.bf16.msra.mxu0 0
        %1191 = vmatprep.subr.bf16.mxu0 0
        %1192 = vmatpush1.bf16.msra.mxu0 0
        %1193 = vmatprep.mubr.bf16.mxu0 0
        %1194 = vmatmul.mubr.bf16.gmra.mrb[0].mxu0 %v927
        %v1195 = vpop.f32.mrb[0].mxu0
        %v1196 = vadd.f32 0.0, %v1195
        %v1197 = vpop.f32.mrb[0].mxu0
        %v1198 = vadd.f32 0.0, %v1197
        %v1199 = vpop.f32.mrb[0].mxu0
        %v1200 = vpop.f32.mrb[0].mxu0
        %1201 = vdwg.mxu0
        %v1202 = vadd.f32 %v922, %v1155
        %v1203 = vadd.f32 %v923, %v1157
        %v1204 = vadd.f32 %v924, %v1196
        %v1205 = vadd.f32 %v925, %v1198
        %v1206 = vmul.f32 %v1202, 0.5
        %v1207 = vmul.f32 %v1203, 0.5
        %v1208 = vmul.f32 %v1204, 0.5
        %v1209 = vtanh.pop %v1206
        %v1210 = vtanh.pop %v1207
        %v1211 = vtanh.pop %v1208
        %v1212 = vmul.f32 %v1209, 0.5
        %v1213 = vmul.f32 %v1210, 0.5
        %v1214 = vmul.f32 %v1211, 0.5
        %v1215 = vadd.f32 %v1212, 0.5
        %v1216 = vadd.f32 %v1213, 0.5
        %v1217 = vadd.f32 %v1214, 0.5
        %v1218 = vtanh.pop %v1205
        %v1219 = vld [vmem:[#allocation3] sm:$0xff]
        %v1220 = vmul.f32 %v1216, %v1219
        %v1221 = vmul.f32 %v1215, %v1218
        %v1222 = vadd.f32 %v1220, %v1221
        %v1223 = vtanh.pop %v1222
        %v1224 = vmul.f32 %v1217, %v1223
        %1225 = vst [vmem:[#allocation3] sm:$0xff] %v1222
        %1226 = vst [vmem:[#allocation2] sm:$0xff] %v1224
        %v1227 = vpack.c.bf16 %v1224, %v1224
        %s1228 = smul.addr %s916, 4
        %s1229 = scalar_lea.vmem %s259, %s1228 [#allocation5]
        %1230 = vst [vmem:[%s1229] sm:$0xf] %v1227
        %s1231 = scalar_select %p279, 4, 3
        %s1232 = smul.u32 %s1231, 4
        %s1233 = smul.addr %s1232, 4
        %s1234 = scalar_lea.vmem %s237, %s1233 [#allocation4]
        %v1235 = vld [vmem:[%s1234] sm:$0xff]
        %v1236 = vld [vmem:[%s1234 + $0x8] sm:$0xff]
        %v1237 = vunpack.c.l.bf16 %v1235
        %v1238 = vunpack.c.h.bf16 %v1235
        %v1239 = vunpack.c.l.bf16 %v1236
        %v1240 = vunpack.c.h.bf16 %v1236
        %v1241 = vld [vmem:[#allocation2] sm:$0xff]
        %v1242 = vpack.c.bf16 %v1241, %v1241
        %v1243 = vld [vmem:[%s271] sm:$0xff]
        %v1244 = vld [vmem:[%s271 + $0x8] sm:$0xff]
        %v1245 = vld [vmem:[%s271 + $0x10] sm:$0xff]
        %v1246 = vld [vmem:[%s271 + $0x18] sm:$0xff]
        %v1247 = vld [vmem:[%s271 + $0x20] sm:$0xff]
        %v1248 = vld [vmem:[%s271 + $0x28] sm:$0xff]
        %v1249 = vld [vmem:[%s271 + $0x30] sm:$0xff]
        %v1250 = vld [vmem:[%s271 + $0x38] sm:$0xff]
        %v1251 = vld [vmem:[%s271 + $0x40] sm:$0xff]
        %v1252 = vld [vmem:[%s271 + $0x48] sm:$0xff]
        %v1253 = vld [vmem:[%s271 + $0x50] sm:$0xff]
        %v1254 = vld [vmem:[%s271 + $0x58] sm:$0xff]
        %v1255 = vld [vmem:[%s271 + $0x60] sm:$0xff]
        %v1256 = vld [vmem:[%s271 + $0x68] sm:$0xff]
        %v1257 = vld [vmem:[%s271 + $0x70] sm:$0xff]
        %v1258 = vld [vmem:[%s271 + $0x78] sm:$0xff]
        %v1259 = vld [vmem:[%s271 + $0x80] sm:$0xff]
        %v1260 = vld [vmem:[%s271 + $0x88] sm:$0xff]
        %v1261 = vld [vmem:[%s271 + $0x90] sm:$0xff]
        %v1262 = vld [vmem:[%s271 + $0x98] sm:$0xff]
        %v1263 = vld [vmem:[%s271 + $0xa0] sm:$0xff]
        %v1264 = vld [vmem:[%s271 + $0xa8] sm:$0xff]
        %v1265 = vld [vmem:[%s271 + $0xb0] sm:$0xff]
        %v1266 = vld [vmem:[%s271 + $0xb8] sm:$0xff]
        %v1267 = vld [vmem:[%s271 + $0xc0] sm:$0xff]
        %v1268 = vld [vmem:[%s271 + $0xc8] sm:$0xff]
        %v1269 = vld [vmem:[%s271 + $0xd0] sm:$0xff]
        %v1270 = vld [vmem:[%s271 + $0xd8] sm:$0xff]
        %v1271 = vld [vmem:[%s271 + $0xe0] sm:$0xff]
        %v1272 = vld [vmem:[%s271 + $0xe8] sm:$0xff]
        %v1273 = vld [vmem:[%s271 + $0xf0] sm:$0xff]
        %v1274 = vld [vmem:[%s271 + $0xf8] sm:$0xff]
        %v1307 = vunpack.c.l.b16 %v1243
        %v1308 = vunpack.c.h.b16 %v1243
        %v1309 = vunpack.c.l.b16 %v1244
        %v1310 = vunpack.c.h.b16 %v1244
        %v1311 = vunpack.c.l.b16 %v1245
        %v1312 = vunpack.c.h.b16 %v1245
        %v1313 = vunpack.c.l.b16 %v1246
        %v1314 = vunpack.c.h.b16 %v1246
        %v1315 = vunpack.c.l.b16 %v1247
        %v1316 = vunpack.c.h.b16 %v1247
        %v1317 = vunpack.c.l.b16 %v1248
        %v1318 = vunpack.c.h.b16 %v1248
        %v1319 = vunpack.c.l.b16 %v1249
        %v1320 = vunpack.c.h.b16 %v1249
        %v1321 = vunpack.c.l.b16 %v1250
        %v1322 = vunpack.c.h.b16 %v1250
        %v1323 = vunpack.c.l.b16 %v1251
        %v1324 = vunpack.c.h.b16 %v1251
        %v1325 = vunpack.c.l.b16 %v1252
        %v1326 = vunpack.c.h.b16 %v1252
        %v1327 = vunpack.c.l.b16 %v1253
        %v1328 = vunpack.c.h.b16 %v1253
        %v1329 = vunpack.c.l.b16 %v1254
        %v1330 = vunpack.c.h.b16 %v1254
        %v1331 = vunpack.c.l.b16 %v1255
        %v1332 = vunpack.c.h.b16 %v1255
        %v1333 = vunpack.c.l.b16 %v1256
        %v1334 = vunpack.c.h.b16 %v1256
        %v1335 = vunpack.c.l.b16 %v1257
        %v1336 = vunpack.c.h.b16 %v1257
        %v1337 = vunpack.c.l.b16 %v1258
        %v1338 = vunpack.c.h.b16 %v1258
        %v1339 = vunpack.c.l.b16 %v1259
        %v1340 = vunpack.c.h.b16 %v1259
        %v1341 = vunpack.c.l.b16 %v1260
        %v1342 = vunpack.c.h.b16 %v1260
        %v1343 = vunpack.c.l.b16 %v1261
        %v1344 = vunpack.c.h.b16 %v1261
        %v1345 = vunpack.c.l.b16 %v1262
        %v1346 = vunpack.c.h.b16 %v1262
        %v1347 = vunpack.c.l.b16 %v1263
        %v1348 = vunpack.c.h.b16 %v1263
        %v1349 = vunpack.c.l.b16 %v1264
        %v1350 = vunpack.c.h.b16 %v1264
        %v1351 = vunpack.c.l.b16 %v1265
        %v1352 = vunpack.c.h.b16 %v1265
        %v1353 = vunpack.c.l.b16 %v1266
        %v1354 = vunpack.c.h.b16 %v1266
        %v1355 = vunpack.c.l.b16 %v1267
        %v1356 = vunpack.c.h.b16 %v1267
        %v1357 = vunpack.c.l.b16 %v1268
        %v1358 = vunpack.c.h.b16 %v1268
        %v1359 = vunpack.c.l.b16 %v1269
        %v1360 = vunpack.c.h.b16 %v1269
        %v1361 = vunpack.c.l.b16 %v1270
        %v1362 = vunpack.c.h.b16 %v1270
        %v1363 = vunpack.c.l.b16 %v1271
        %v1364 = vunpack.c.h.b16 %v1271
        %v1365 = vunpack.c.l.b16 %v1272
        %v1366 = vunpack.c.h.b16 %v1272
        %v1367 = vunpack.c.l.b16 %v1273
        %v1368 = vunpack.c.h.b16 %v1273
        %v1369 = vunpack.c.l.b16 %v1274
        %v1370 = vunpack.c.h.b16 %v1274
        %v1371 = vpack.c.b16 %v1311, %v1307
        %v1372 = vpack.c.b16 %v1312, %v1308
        %v1373 = vpack.c.b16 %v1313, %v1309
        %v1374 = vpack.c.b16 %v1314, %v1310
        %v1375 = vpack.c.b16 %v1319, %v1315
        %v1376 = vpack.c.b16 %v1320, %v1316
        %v1377 = vpack.c.b16 %v1321, %v1317
        %v1378 = vpack.c.b16 %v1322, %v1318
        %v1379 = vpack.c.b16 %v1327, %v1323
        %v1380 = vpack.c.b16 %v1328, %v1324
        %v1381 = vpack.c.b16 %v1329, %v1325
        %v1382 = vpack.c.b16 %v1330, %v1326
        %v1383 = vpack.c.b16 %v1335, %v1331
        %v1384 = vpack.c.b16 %v1336, %v1332
        %v1385 = vpack.c.b16 %v1337, %v1333
        %v1386 = vpack.c.b16 %v1338, %v1334
        %v1387 = vpack.c.b16 %v1343, %v1339
        %v1388 = vpack.c.b16 %v1344, %v1340
        %v1389 = vpack.c.b16 %v1345, %v1341
        %v1390 = vpack.c.b16 %v1346, %v1342
        %v1391 = vpack.c.b16 %v1351, %v1347
        %v1392 = vpack.c.b16 %v1352, %v1348
        %v1393 = vpack.c.b16 %v1353, %v1349
        %v1394 = vpack.c.b16 %v1354, %v1350
        %v1395 = vpack.c.b16 %v1359, %v1355
        %v1396 = vpack.c.b16 %v1360, %v1356
        %v1397 = vpack.c.b16 %v1361, %v1357
        %v1398 = vpack.c.b16 %v1362, %v1358
        %v1399 = vpack.c.b16 %v1367, %v1363
        %v1400 = vpack.c.b16 %v1368, %v1364
        %v1401 = vpack.c.b16 %v1369, %v1365
        %v1402 = vpack.c.b16 %v1370, %v1366
        %1435 = vmatprep.subr.bf16.mxu0 %v1372
        %1436 = vmatpush1.bf16.msra.mxu0 %v1371
        %1437 = vmatprep.subr.bf16.mxu0 %v1376
        %1438 = vmatpush1.bf16.msra.mxu0 %v1375
        %1439 = vmatprep.subr.bf16.mxu0 %v1380
        %1440 = vmatpush1.bf16.msra.mxu0 %v1379
        %1441 = vmatprep.subr.bf16.mxu0 %v1384
        %1442 = vmatpush1.bf16.msra.mxu0 %v1383
        %1443 = vmatprep.subr.bf16.mxu0 %v1388
        %1444 = vmatpush1.bf16.msra.mxu0 %v1387
        %1445 = vmatprep.subr.bf16.mxu0 %v1392
        %1446 = vmatpush1.bf16.msra.mxu0 %v1391
        %1447 = vmatprep.subr.bf16.mxu0 %v1396
        %1448 = vmatpush1.bf16.msra.mxu0 %v1395
        %1449 = vmatprep.subr.bf16.mxu0 %v1400
        %1450 = vmatpush1.bf16.msra.mxu0 %v1399
        %1451 = vmatprep.subr.bf16.mxu0 0
        %1452 = vmatpush1.bf16.msra.mxu0 0
        %1453 = vmatprep.subr.bf16.mxu0 0
        %1454 = vmatpush1.bf16.msra.mxu0 0
        %1455 = vmatprep.subr.bf16.mxu0 0
        %1456 = vmatpush1.bf16.msra.mxu0 0
        %1457 = vmatprep.subr.bf16.mxu0 0
        %1458 = vmatpush1.bf16.msra.mxu0 0
        %1459 = vmatprep.subr.bf16.mxu0 0
        %1460 = vmatpush1.bf16.msra.mxu0 0
        %1461 = vmatprep.subr.bf16.mxu0 0
        %1462 = vmatpush1.bf16.msra.mxu0 0
        %1463 = vmatprep.subr.bf16.mxu0 0
        %1464 = vmatpush1.bf16.msra.mxu0 0
        %1465 = vmatprep.subr.bf16.mxu0 0
        %1466 = vmatpush1.bf16.msra.mxu0 0
        %1467 = vmatprep.mubr.bf16.mxu0 0
        %1468 = vmatmul.mubr.bf16.gmra.mrb[0].mxu0 %v1242
        %v1469 = vpop.f32.mrb[0].mxu0
        %v1470 = vadd.f32 0.0, %v1469
        %v1471 = vpop.f32.mrb[0].mxu0
        %v1472 = vadd.f32 0.0, %v1471
        %v1473 = vpop.f32.mrb[0].mxu0
        %v1474 = vpop.f32.mrb[0].mxu0
        %1475 = vdwg.mxu0
        %1476 = vmatprep.subr.bf16.mxu0 %v1374
        %1477 = vmatpush1.bf16.msra.mxu0 %v1373
        %1478 = vmatprep.subr.bf16.mxu0 %v1378
        %1479 = vmatpush1.bf16.msra.mxu0 %v1377
        %1480 = vmatprep.subr.bf16.mxu0 %v1382
        %1481 = vmatpush1.bf16.msra.mxu0 %v1381
        %1482 = vmatprep.subr.bf16.mxu0 %v1386
        %1483 = vmatpush1.bf16.msra.mxu0 %v1385
        %1484 = vmatprep.subr.bf16.mxu0 %v1390
        %1485 = vmatpush1.bf16.msra.mxu0 %v1389
        %1486 = vmatprep.subr.bf16.mxu0 %v1394
        %1487 = vmatpush1.bf16.msra.mxu0 %v1393
        %1488 = vmatprep.subr.bf16.mxu0 %v1398
        %1489 = vmatpush1.bf16.msra.mxu0 %v1397
        %1490 = vmatprep.subr.bf16.mxu0 %v1402
        %1491 = vmatpush1.bf16.msra.mxu0 %v1401
        %1492 = vmatprep.subr.bf16.mxu0 0
        %1493 = vmatpush1.bf16.msra.mxu0 0
        %1494 = vmatprep.subr.bf16.mxu0 0
        %1495 = vmatpush1.bf16.msra.mxu0 0
        %1496 = vmatprep.subr.bf16.mxu0 0
        %1497 = vmatpush1.bf16.msra.mxu0 0
        %1498 = vmatprep.subr.bf16.mxu0 0
        %1499 = vmatpush1.bf16.msra.mxu0 0
        %1500 = vmatprep.subr.bf16.mxu0 0
        %1501 = vmatpush1.bf16.msra.mxu0 0
        %1502 = vmatprep.subr.bf16.mxu0 0
        %1503 = vmatpush1.bf16.msra.mxu0 0
        %1504 = vmatprep.subr.bf16.mxu0 0
        %1505 = vmatpush1.bf16.msra.mxu0 0
        %1506 = vmatprep.subr.bf16.mxu0 0
        %1507 = vmatpush1.bf16.msra.mxu0 0
        %1508 = vmatprep.mubr.bf16.mxu0 0
        %1509 = vmatmul.mubr.bf16.gmra.mrb[0].mxu0 %v1242
        %v1510 = vpop.f32.mrb[0].mxu0
        %v1511 = vadd.f32 0.0, %v1510
        %v1512 = vpop.f32.mrb[0].mxu0
        %v1513 = vadd.f32 0.0, %v1512
        %v1514 = vpop.f32.mrb[0].mxu0
        %v1515 = vpop.f32.mrb[0].mxu0
        %1516 = vdwg.mxu0
        %v1517 = vadd.f32 %v1237, %v1470
        %v1518 = vadd.f32 %v1238, %v1472
        %v1519 = vadd.f32 %v1239, %v1511
        %v1520 = vadd.f32 %v1240, %v1513
        %v1521 = vmul.f32 %v1517, 0.5
        %v1522 = vmul.f32 %v1518, 0.5
        %v1523 = vmul.f32 %v1519, 0.5
        %v1524 = vtanh.pop %v1521
        %v1525 = vtanh.pop %v1522
        %v1526 = vtanh.pop %v1523
        %v1527 = vmul.f32 %v1524, 0.5
        %v1528 = vmul.f32 %v1525, 0.5
        %v1529 = vmul.f32 %v1526, 0.5
        %v1530 = vadd.f32 %v1527, 0.5
        %v1531 = vadd.f32 %v1528, 0.5
        %v1532 = vadd.f32 %v1529, 0.5
        %v1533 = vtanh.pop %v1520
        %v1534 = vld [vmem:[#allocation3] sm:$0xff]
        %v1535 = vmul.f32 %v1531, %v1534
        %v1536 = vmul.f32 %v1530, %v1533
        %v1537 = vadd.f32 %v1535, %v1536
        %v1538 = vtanh.pop %v1537
        %v1539 = vmul.f32 %v1532, %v1538
        %1540 = vst [vmem:[#allocation3] sm:$0xff] %v1537
        %1541 = vst [vmem:[#allocation2] sm:$0xff] %v1539
        %v1542 = vpack.c.bf16 %v1539, %v1539
        %s1543 = smul.addr %s1231, 4
        %s1544 = scalar_lea.vmem %s259, %s1543 [#allocation5]
        %1545 = vst [vmem:[%s1544] sm:$0xf] %v1542
        %s1546 = scalar_select %p279, 3, 4
        %s1547 = smul.u32 %s1546, 4
        %s1548 = smul.addr %s1547, 4
        %s1549 = scalar_lea.vmem %s237, %s1548 [#allocation4]
        %v1550 = vld [vmem:[%s1549] sm:$0xff]
        %v1551 = vld [vmem:[%s1549 + $0x8] sm:$0xff]
        %v1552 = vunpack.c.l.bf16 %v1550
        %v1553 = vunpack.c.h.bf16 %v1550
        %v1554 = vunpack.c.l.bf16 %v1551
        %v1555 = vunpack.c.h.bf16 %v1551
        %v1556 = vld [vmem:[#allocation2] sm:$0xff]
        %v1557 = vpack.c.bf16 %v1556, %v1556
        %v1558 = vld [vmem:[%s271] sm:$0xff]
        %v1559 = vld [vmem:[%s271 + $0x8] sm:$0xff]
        %v1560 = vld [vmem:[%s271 + $0x10] sm:$0xff]
        %v1561 = vld [vmem:[%s271 + $0x18] sm:$0xff]
        %v1562 = vld [vmem:[%s271 + $0x20] sm:$0xff]
        %v1563 = vld [vmem:[%s271 + $0x28] sm:$0xff]
        %v1564 = vld [vmem:[%s271 + $0x30] sm:$0xff]
        %v1565 = vld [vmem:[%s271 + $0x38] sm:$0xff]
        %v1566 = vld [vmem:[%s271 + $0x40] sm:$0xff]
        %v1567 = vld [vmem:[%s271 + $0x48] sm:$0xff]
        %v1568 = vld [vmem:[%s271 + $0x50] sm:$0xff]
        %v1569 = vld [vmem:[%s271 + $0x58] sm:$0xff]
        %v1570 = vld [vmem:[%s271 + $0x60] sm:$0xff]
        %v1571 = vld [vmem:[%s271 + $0x68] sm:$0xff]
        %v1572 = vld [vmem:[%s271 + $0x70] sm:$0xff]
        %v1573 = vld [vmem:[%s271 + $0x78] sm:$0xff]
        %v1574 = vld [vmem:[%s271 + $0x80] sm:$0xff]
        %v1575 = vld [vmem:[%s271 + $0x88] sm:$0xff]
        %v1576 = vld [vmem:[%s271 + $0x90] sm:$0xff]
        %v1577 = vld [vmem:[%s271 + $0x98] sm:$0xff]
        %v1578 = vld [vmem:[%s271 + $0xa0] sm:$0xff]
        %v1579 = vld [vmem:[%s271 + $0xa8] sm:$0xff]
        %v1580 = vld [vmem:[%s271 + $0xb0] sm:$0xff]
        %v1581 = vld [vmem:[%s271 + $0xb8] sm:$0xff]
        %v1582 = vld [vmem:[%s271 + $0xc0] sm:$0xff]
        %v1583 = vld [vmem:[%s271 + $0xc8] sm:$0xff]
        %v1584 = vld [vmem:[%s271 + $0xd0] sm:$0xff]
        %v1585 = vld [vmem:[%s271 + $0xd8] sm:$0xff]
        %v1586 = vld [vmem:[%s271 + $0xe0] sm:$0xff]
        %v1587 = vld [vmem:[%s271 + $0xe8] sm:$0xff]
        %v1588 = vld [vmem:[%s271 + $0xf0] sm:$0xff]
        %v1589 = vld [vmem:[%s271 + $0xf8] sm:$0xff]
        %v1622 = vunpack.c.l.b16 %v1558
        %v1623 = vunpack.c.h.b16 %v1558
        %v1624 = vunpack.c.l.b16 %v1559
        %v1625 = vunpack.c.h.b16 %v1559
        %v1626 = vunpack.c.l.b16 %v1560
        %v1627 = vunpack.c.h.b16 %v1560
        %v1628 = vunpack.c.l.b16 %v1561
        %v1629 = vunpack.c.h.b16 %v1561
        %v1630 = vunpack.c.l.b16 %v1562
        %v1631 = vunpack.c.h.b16 %v1562
        %v1632 = vunpack.c.l.b16 %v1563
        %v1633 = vunpack.c.h.b16 %v1563
        %v1634 = vunpack.c.l.b16 %v1564
        %v1635 = vunpack.c.h.b16 %v1564
        %v1636 = vunpack.c.l.b16 %v1565
        %v1637 = vunpack.c.h.b16 %v1565
        %v1638 = vunpack.c.l.b16 %v1566
        %v1639 = vunpack.c.h.b16 %v1566
        %v1640 = vunpack.c.l.b16 %v1567
        %v1641 = vunpack.c.h.b16 %v1567
        %v1642 = vunpack.c.l.b16 %v1568
        %v1643 = vunpack.c.h.b16 %v1568
        %v1644 = vunpack.c.l.b16 %v1569
        %v1645 = vunpack.c.h.b16 %v1569
        %v1646 = vunpack.c.l.b16 %v1570
        %v1647 = vunpack.c.h.b16 %v1570
        %v1648 = vunpack.c.l.b16 %v1571
        %v1649 = vunpack.c.h.b16 %v1571
        %v1650 = vunpack.c.l.b16 %v1572
        %v1651 = vunpack.c.h.b16 %v1572
        %v1652 = vunpack.c.l.b16 %v1573
        %v1653 = vunpack.c.h.b16 %v1573
        %v1654 = vunpack.c.l.b16 %v1574
        %v1655 = vunpack.c.h.b16 %v1574
        %v1656 = vunpack.c.l.b16 %v1575
        %v1657 = vunpack.c.h.b16 %v1575
        %v1658 = vunpack.c.l.b16 %v1576
        %v1659 = vunpack.c.h.b16 %v1576
        %v1660 = vunpack.c.l.b16 %v1577
        %v1661 = vunpack.c.h.b16 %v1577
        %v1662 = vunpack.c.l.b16 %v1578
        %v1663 = vunpack.c.h.b16 %v1578
        %v1664 = vunpack.c.l.b16 %v1579
        %v1665 = vunpack.c.h.b16 %v1579
        %v1666 = vunpack.c.l.b16 %v1580
        %v1667 = vunpack.c.h.b16 %v1580
        %v1668 = vunpack.c.l.b16 %v1581
        %v1669 = vunpack.c.h.b16 %v1581
        %v1670 = vunpack.c.l.b16 %v1582
        %v1671 = vunpack.c.h.b16 %v1582
        %v1672 = vunpack.c.l.b16 %v1583
        %v1673 = vunpack.c.h.b16 %v1583
        %v1674 = vunpack.c.l.b16 %v1584
        %v1675 = vunpack.c.h.b16 %v1584
        %v1676 = vunpack.c.l.b16 %v1585
        %v1677 = vunpack.c.h.b16 %v1585
        %v1678 = vunpack.c.l.b16 %v1586
        %v1679 = vunpack.c.h.b16 %v1586
        %v1680 = vunpack.c.l.b16 %v1587
        %v1681 = vunpack.c.h.b16 %v1587
        %v1682 = vunpack.c.l.b16 %v1588
        %v1683 = vunpack.c.h.b16 %v1588
        %v1684 = vunpack.c.l.b16 %v1589
        %v1685 = vunpack.c.h.b16 %v1589
        %v1686 = vpack.c.b16 %v1626, %v1622
        %v1687 = vpack.c.b16 %v1627, %v1623
        %v1688 = vpack.c.b16 %v1628, %v1624
        %v1689 = vpack.c.b16 %v1629, %v1625
        %v1690 = vpack.c.b16 %v1634, %v1630
        %v1691 = vpack.c.b16 %v1635, %v1631
        %v1692 = vpack.c.b16 %v1636, %v1632
        %v1693 = vpack.c.b16 %v1637, %v1633
        %v1694 = vpack.c.b16 %v1642, %v1638
        %v1695 = vpack.c.b16 %v1643, %v1639
        %v1696 = vpack.c.b16 %v1644, %v1640
        %v1697 = vpack.c.b16 %v1645, %v1641
        %v1698 = vpack.c.b16 %v1650, %v1646
        %v1699 = vpack.c.b16 %v1651, %v1647
        %v1700 = vpack.c.b16 %v1652, %v1648
        %v1701 = vpack.c.b16 %v1653, %v1649
        %v1702 = vpack.c.b16 %v1658, %v1654
        %v1703 = vpack.c.b16 %v1659, %v1655
        %v1704 = vpack.c.b16 %v1660, %v1656
        %v1705 = vpack.c.b16 %v1661, %v1657
        %v1706 = vpack.c.b16 %v1666, %v1662
        %v1707 = vpack.c.b16 %v1667, %v1663
        %v1708 = vpack.c.b16 %v1668, %v1664
        %v1709 = vpack.c.b16 %v1669, %v1665
        %v1710 = vpack.c.b16 %v1674, %v1670
        %v1711 = vpack.c.b16 %v1675, %v1671
        %v1712 = vpack.c.b16 %v1676, %v1672
        %v1713 = vpack.c.b16 %v1677, %v1673
        %v1714 = vpack.c.b16 %v1682, %v1678
        %v1715 = vpack.c.b16 %v1683, %v1679
        %v1716 = vpack.c.b16 %v1684, %v1680
        %v1717 = vpack.c.b16 %v1685, %v1681
        %1750 = vmatprep.subr.bf16.mxu0 %v1687
        %1751 = vmatpush1.bf16.msra.mxu0 %v1686
        %1752 = vmatprep.subr.bf16.mxu0 %v1691
        %1753 = vmatpush1.bf16.msra.mxu0 %v1690
        %1754 = vmatprep.subr.bf16.mxu0 %v1695
        %1755 = vmatpush1.bf16.msra.mxu0 %v1694
        %1756 = vmatprep.subr.bf16.mxu0 %v1699
        %1757 = vmatpush1.bf16.msra.mxu0 %v1698
        %1758 = vmatprep.subr.bf16.mxu0 %v1703
        %1759 = vmatpush1.bf16.msra.mxu0 %v1702
        %1760 = vmatprep.subr.bf16.mxu0 %v1707
        %1761 = vmatpush1.bf16.msra.mxu0 %v1706
        %1762 = vmatprep.subr.bf16.mxu0 %v1711
        %1763 = vmatpush1.bf16.msra.mxu0 %v1710
        %1764 = vmatprep.subr.bf16.mxu0 %v1715
        %1765 = vmatpush1.bf16.msra.mxu0 %v1714
        %1766 = vmatprep.subr.bf16.mxu0 0
        %1767 = vmatpush1.bf16.msra.mxu0 0
        %1768 = vmatprep.subr.bf16.mxu0 0
        %1769 = vmatpush1.bf16.msra.mxu0 0
        %1770 = vmatprep.subr.bf16.mxu0 0
        %1771 = vmatpush1.bf16.msra.mxu0 0
        %1772 = vmatprep.subr.bf16.mxu0 0
        %1773 = vmatpush1.bf16.msra.mxu0 0
        %1774 = vmatprep.subr.bf16.mxu0 0
        %1775 = vmatpush1.bf16.msra.mxu0 0
        %1776 = vmatprep.subr.bf16.mxu0 0
        %1777 = vmatpush1.bf16.msra.mxu0 0
        %1778 = vmatprep.subr.bf16.mxu0 0
        %1779 = vmatpush1.bf16.msra.mxu0 0
        %1780 = vmatprep.subr.bf16.mxu0 0
        %1781 = vmatpush1.bf16.msra.mxu0 0
        %1782 = vmatprep.mubr.bf16.mxu0 0
        %1783 = vmatmul.mubr.bf16.gmra.mrb[0].mxu0 %v1557
        %v1784 = vpop.f32.mrb[0].mxu0
        %v1785 = vadd.f32 0.0, %v1784
        %v1786 = vpop.f32.mrb[0].mxu0
        %v1787 = vadd.f32 0.0, %v1786
        %v1788 = vpop.f32.mrb[0].mxu0
        %v1789 = vpop.f32.mrb[0].mxu0
        %1790 = vdwg.mxu0
        %1791 = vmatprep.subr.bf16.mxu0 %v1689
        %1792 = vmatpush1.bf16.msra.mxu0 %v1688
        %1793 = vmatprep.subr.bf16.mxu0 %v1693
        %1794 = vmatpush1.bf16.msra.mxu0 %v1692
        %1795 = vmatprep.subr.bf16.mxu0 %v1697
        %1796 = vmatpush1.bf16.msra.mxu0 %v1696
        %1797 = vmatprep.subr.bf16.mxu0 %v1701
        %1798 = vmatpush1.bf16.msra.mxu0 %v1700
        %1799 = vmatprep.subr.bf16.mxu0 %v1705
        %1800 = vmatpush1.bf16.msra.mxu0 %v1704
        %1801 = vmatprep.subr.bf16.mxu0 %v1709
        %1802 = vmatpush1.bf16.msra.mxu0 %v1708
        %1803 = vmatprep.subr.bf16.mxu0 %v1713
        %1804 = vmatpush1.bf16.msra.mxu0 %v1712
        %1805 = vmatprep.subr.bf16.mxu0 %v1717
        %1806 = vmatpush1.bf16.msra.mxu0 %v1716
        %1807 = vmatprep.subr.bf16.mxu0 0
        %1808 = vmatpush1.bf16.msra.mxu0 0
        %1809 = vmatprep.subr.bf16.mxu0 0
        %1810 = vmatpush1.bf16.msra.mxu0 0
        %1811 = vmatprep.subr.bf16.mxu0 0
        %1812 = vmatpush1.bf16.msra.mxu0 0
        %1813 = vmatprep.subr.bf16.mxu0 0
        %1814 = vmatpush1.bf16.msra.mxu0 0
        %1815 = vmatprep.subr.bf16.mxu0 0
        %1816 = vmatpush1.bf16.msra.mxu0 0
        %1817 = vmatprep.subr.bf16.mxu0 0
        %1818 = vmatpush1.bf16.msra.mxu0 0
        %1819 = vmatprep.subr.bf16.mxu0 0
        %1820 = vmatpush1.bf16.msra.mxu0 0
        %1821 = vmatprep.subr.bf16.mxu0 0
        %1822 = vmatpush1.bf16.msra.mxu0 0
        %1823 = vmatprep.mubr.bf16.mxu0 0
        %1824 = vmatmul.mubr.bf16.gmra.mrb[0].mxu0 %v1557
        %v1825 = vpop.f32.mrb[0].mxu0
        %v1826 = vadd.f32 0.0, %v1825
        %v1827 = vpop.f32.mrb[0].mxu0
        %v1828 = vadd.f32 0.0, %v1827
        %v1829 = vpop.f32.mrb[0].mxu0
        %v1830 = vpop.f32.mrb[0].mxu0
        %1831 = vdwg.mxu0
        %v1832 = vadd.f32 %v1552, %v1785
        %v1833 = vadd.f32 %v1553, %v1787
        %v1834 = vadd.f32 %v1554, %v1826
        %v1835 = vadd.f32 %v1555, %v1828
        %v1836 = vmul.f32 %v1832, 0.5
        %v1837 = vmul.f32 %v1833, 0.5
        %v1838 = vmul.f32 %v1834, 0.5
        %v1839 = vtanh.pop %v1836
        %v1840 = vtanh.pop %v1837
        %v1841 = vtanh.pop %v1838
        %v1842 = vmul.f32 %v1839, 0.5
        %v1843 = vmul.f32 %v1840, 0.5
        %v1844 = vmul.f32 %v1841, 0.5
        %v1845 = vadd.f32 %v1842, 0.5
        %v1846 = vadd.f32 %v1843, 0.5
        %v1847 = vadd.f32 %v1844, 0.5
        %v1848 = vtanh.pop %v1835
        %v1849 = vld [vmem:[#allocation3] sm:$0xff]
        %v1850 = vmul.f32 %v1846, %v1849
        %v1851 = vmul.f32 %v1845, %v1848
        %v1852 = vadd.f32 %v1850, %v1851
        %v1853 = vtanh.pop %v1852
        %v1854 = vmul.f32 %v1847, %v1853
        %1855 = vst [vmem:[#allocation3] sm:$0xff] %v1852
        %1856 = vst [vmem:[#allocation2] sm:$0xff] %v1854
        %v1857 = vpack.c.bf16 %v1854, %v1854
        %s1858 = smul.addr %s1546, 4
        %s1859 = scalar_lea.vmem %s259, %s1858 [#allocation5]
        %1860 = vst [vmem:[%s1859] sm:$0xf] %v1857
        %s1861 = scalar_select %p279, 2, 5
        %s1862 = smul.u32 %s1861, 4
        %s1863 = smul.addr %s1862, 4
        %s1864 = scalar_lea.vmem %s237, %s1863 [#allocation4]
        %v1865 = vld [vmem:[%s1864] sm:$0xff]
        %v1866 = vld [vmem:[%s1864 + $0x8] sm:$0xff]
        %v1867 = vunpack.c.l.bf16 %v1865
        %v1868 = vunpack.c.h.bf16 %v1865
        %v1869 = vunpack.c.l.bf16 %v1866
        %v1870 = vunpack.c.h.bf16 %v1866
        %v1871 = vld [vmem:[#allocation2] sm:$0xff]
        %v1872 = vpack.c.bf16 %v1871, %v1871
        %v1873 = vld [vmem:[%s271] sm:$0xff]
        %v1874 = vld [vmem:[%s271 + $0x8] sm:$0xff]
        %v1875 = vld [vmem:[%s271 + $0x10] sm:$0xff]
        %v1876 = vld [vmem:[%s271 + $0x18] sm:$0xff]
        %v1877 = vld [vmem:[%s271 + $0x20] sm:$0xff]
        %v1878 = vld [vmem:[%s271 + $0x28] sm:$0xff]
        %v1879 = vld [vmem:[%s271 + $0x30] sm:$0xff]
        %v1880 = vld [vmem:[%s271 + $0x38] sm:$0xff]
        %v1881 = vld [vmem:[%s271 + $0x40] sm:$0xff]
        %v1882 = vld [vmem:[%s271 + $0x48] sm:$0xff]
        %v1883 = vld [vmem:[%s271 + $0x50] sm:$0xff]
        %v1884 = vld [vmem:[%s271 + $0x58] sm:$0xff]
        %v1885 = vld [vmem:[%s271 + $0x60] sm:$0xff]
        %v1886 = vld [vmem:[%s271 + $0x68] sm:$0xff]
        %v1887 = vld [vmem:[%s271 + $0x70] sm:$0xff]
        %v1888 = vld [vmem:[%s271 + $0x78] sm:$0xff]
        %v1889 = vld [vmem:[%s271 + $0x80] sm:$0xff]
        %v1890 = vld [vmem:[%s271 + $0x88] sm:$0xff]
        %v1891 = vld [vmem:[%s271 + $0x90] sm:$0xff]
        %v1892 = vld [vmem:[%s271 + $0x98] sm:$0xff]
        %v1893 = vld [vmem:[%s271 + $0xa0] sm:$0xff]
        %v1894 = vld [vmem:[%s271 + $0xa8] sm:$0xff]
        %v1895 = vld [vmem:[%s271 + $0xb0] sm:$0xff]
        %v1896 = vld [vmem:[%s271 + $0xb8] sm:$0xff]
        %v1897 = vld [vmem:[%s271 + $0xc0] sm:$0xff]
        %v1898 = vld [vmem:[%s271 + $0xc8] sm:$0xff]
        %v1899 = vld [vmem:[%s271 + $0xd0] sm:$0xff]
        %v1900 = vld [vmem:[%s271 + $0xd8] sm:$0xff]
        %v1901 = vld [vmem:[%s271 + $0xe0] sm:$0xff]
        %v1902 = vld [vmem:[%s271 + $0xe8] sm:$0xff]
        %v1903 = vld [vmem:[%s271 + $0xf0] sm:$0xff]
        %v1904 = vld [vmem:[%s271 + $0xf8] sm:$0xff]
        %v1937 = vunpack.c.l.b16 %v1873
        %v1938 = vunpack.c.h.b16 %v1873
        %v1939 = vunpack.c.l.b16 %v1874
        %v1940 = vunpack.c.h.b16 %v1874
        %v1941 = vunpack.c.l.b16 %v1875
        %v1942 = vunpack.c.h.b16 %v1875
        %v1943 = vunpack.c.l.b16 %v1876
        %v1944 = vunpack.c.h.b16 %v1876
        %v1945 = vunpack.c.l.b16 %v1877
        %v1946 = vunpack.c.h.b16 %v1877
        %v1947 = vunpack.c.l.b16 %v1878
        %v1948 = vunpack.c.h.b16 %v1878
        %v1949 = vunpack.c.l.b16 %v1879
        %v1950 = vunpack.c.h.b16 %v1879
        %v1951 = vunpack.c.l.b16 %v1880
        %v1952 = vunpack.c.h.b16 %v1880
        %v1953 = vunpack.c.l.b16 %v1881
        %v1954 = vunpack.c.h.b16 %v1881
        %v1955 = vunpack.c.l.b16 %v1882
        %v1956 = vunpack.c.h.b16 %v1882
        %v1957 = vunpack.c.l.b16 %v1883
        %v1958 = vunpack.c.h.b16 %v1883
        %v1959 = vunpack.c.l.b16 %v1884
        %v1960 = vunpack.c.h.b16 %v1884
        %v1961 = vunpack.c.l.b16 %v1885
        %v1962 = vunpack.c.h.b16 %v1885
        %v1963 = vunpack.c.l.b16 %v1886
        %v1964 = vunpack.c.h.b16 %v1886
        %v1965 = vunpack.c.l.b16 %v1887
        %v1966 = vunpack.c.h.b16 %v1887
        %v1967 = vunpack.c.l.b16 %v1888
        %v1968 = vunpack.c.h.b16 %v1888
        %v1969 = vunpack.c.l.b16 %v1889
        %v1970 = vunpack.c.h.b16 %v1889
        %v1971 = vunpack.c.l.b16 %v1890
        %v1972 = vunpack.c.h.b16 %v1890
        %v1973 = vunpack.c.l.b16 %v1891
        %v1974 = vunpack.c.h.b16 %v1891
        %v1975 = vunpack.c.l.b16 %v1892
        %v1976 = vunpack.c.h.b16 %v1892
        %v1977 = vunpack.c.l.b16 %v1893
        %v1978 = vunpack.c.h.b16 %v1893
        %v1979 = vunpack.c.l.b16 %v1894
        %v1980 = vunpack.c.h.b16 %v1894
        %v1981 = vunpack.c.l.b16 %v1895
        %v1982 = vunpack.c.h.b16 %v1895
        %v1983 = vunpack.c.l.b16 %v1896
        %v1984 = vunpack.c.h.b16 %v1896
        %v1985 = vunpack.c.l.b16 %v1897
        %v1986 = vunpack.c.h.b16 %v1897
        %v1987 = vunpack.c.l.b16 %v1898
        %v1988 = vunpack.c.h.b16 %v1898
        %v1989 = vunpack.c.l.b16 %v1899
        %v1990 = vunpack.c.h.b16 %v1899
        %v1991 = vunpack.c.l.b16 %v1900
        %v1992 = vunpack.c.h.b16 %v1900
        %v1993 = vunpack.c.l.b16 %v1901
        %v1994 = vunpack.c.h.b16 %v1901
        %v1995 = vunpack.c.l.b16 %v1902
        %v1996 = vunpack.c.h.b16 %v1902
        %v1997 = vunpack.c.l.b16 %v1903
        %v1998 = vunpack.c.h.b16 %v1903
        %v1999 = vunpack.c.l.b16 %v1904
        %v2000 = vunpack.c.h.b16 %v1904
        %v2001 = vpack.c.b16 %v1941, %v1937
        %v2002 = vpack.c.b16 %v1942, %v1938
        %v2003 = vpack.c.b16 %v1943, %v1939
        %v2004 = vpack.c.b16 %v1944, %v1940
        %v2005 = vpack.c.b16 %v1949, %v1945
        %v2006 = vpack.c.b16 %v1950, %v1946
        %v2007 = vpack.c.b16 %v1951, %v1947
        %v2008 = vpack.c.b16 %v1952, %v1948
        %v2009 = vpack.c.b16 %v1957, %v1953
        %v2010 = vpack.c.b16 %v1958, %v1954
        %v2011 = vpack.c.b16 %v1959, %v1955
        %v2012 = vpack.c.b16 %v1960, %v1956
        %v2013 = vpack.c.b16 %v1965, %v1961
        %v2014 = vpack.c.b16 %v1966, %v1962
        %v2015 = vpack.c.b16 %v1967, %v1963
        %v2016 = vpack.c.b16 %v1968, %v1964
        %v2017 = vpack.c.b16 %v1973, %v1969
        %v2018 = vpack.c.b16 %v1974, %v1970
        %v2019 = vpack.c.b16 %v1975, %v1971
        %v2020 = vpack.c.b16 %v1976, %v1972
        %v2021 = vpack.c.b16 %v1981, %v1977
        %v2022 = vpack.c.b16 %v1982, %v1978
        %v2023 = vpack.c.b16 %v1983, %v1979
        %v2024 = vpack.c.b16 %v1984, %v1980
        %v2025 = vpack.c.b16 %v1989, %v1985
        %v2026 = vpack.c.b16 %v1990, %v1986
        %v2027 = vpack.c.b16 %v1991, %v1987
        %v2028 = vpack.c.b16 %v1992, %v1988
        %v2029 = vpack.c.b16 %v1997, %v1993
        %v2030 = vpack.c.b16 %v1998, %v1994
        %v2031 = vpack.c.b16 %v1999, %v1995
        %v2032 = vpack.c.b16 %v2000, %v1996
        %2065 = vmatprep.subr.bf16.mxu0 %v2002
        %2066 = vmatpush1.bf16.msra.mxu0 %v2001
        %2067 = vmatprep.subr.bf16.mxu0 %v2006
        %2068 = vmatpush1.bf16.msra.mxu0 %v2005
        %2069 = vmatprep.subr.bf16.mxu0 %v2010
        %2070 = vmatpush1.bf16.msra.mxu0 %v2009
        %2071 = vmatprep.subr.bf16.mxu0 %v2014
        %2072 = vmatpush1.bf16.msra.mxu0 %v2013
        %2073 = vmatprep.subr.bf16.mxu0 %v2018
        %2074 = vmatpush1.bf16.msra.mxu0 %v2017
        %2075 = vmatprep.subr.bf16.mxu0 %v2022
        %2076 = vmatpush1.bf16.msra.mxu0 %v2021
        %2077 = vmatprep.subr.bf16.mxu0 %v2026
        %2078 = vmatpush1.bf16.msra.mxu0 %v2025
        %2079 = vmatprep.subr.bf16.mxu0 %v2030
        %2080 = vmatpush1.bf16.msra.mxu0 %v2029
        %2081 = vmatprep.subr.bf16.mxu0 0
        %2082 = vmatpush1.bf16.msra.mxu0 0
        %2083 = vmatprep.subr.bf16.mxu0 0
        %2084 = vmatpush1.bf16.msra.mxu0 0
        %2085 = vmatprep.subr.bf16.mxu0 0
        %2086 = vmatpush1.bf16.msra.mxu0 0
        %2087 = vmatprep.subr.bf16.mxu0 0
        %2088 = vmatpush1.bf16.msra.mxu0 0
        %2089 = vmatprep.subr.bf16.mxu0 0
        %2090 = vmatpush1.bf16.msra.mxu0 0
        %2091 = vmatprep.subr.bf16.mxu0 0
        %2092 = vmatpush1.bf16.msra.mxu0 0
        %2093 = vmatprep.subr.bf16.mxu0 0
        %2094 = vmatpush1.bf16.msra.mxu0 0
        %2095 = vmatprep.subr.bf16.mxu0 0
        %2096 = vmatpush1.bf16.msra.mxu0 0
        %2097 = vmatprep.mubr.bf16.mxu0 0
        %2098 = vmatmul.mubr.bf16.gmra.mrb[0].mxu0 %v1872
        %v2099 = vpop.f32.mrb[0].mxu0
        %v2100 = vadd.f32 0.0, %v2099
        %v2101 = vpop.f32.mrb[0].mxu0
        %v2102 = vadd.f32 0.0, %v2101
        %v2103 = vpop.f32.mrb[0].mxu0
        %v2104 = vpop.f32.mrb[0].mxu0
        %2105 = vdwg.mxu0
        %2106 = vmatprep.subr.bf16.mxu0 %v2004
        %2107 = vmatpush1.bf16.msra.mxu0 %v2003
        %2108 = vmatprep.subr.bf16.mxu0 %v2008
        %2109 = vmatpush1.bf16.msra.mxu0 %v2007
        %2110 = vmatprep.subr.bf16.mxu0 %v2012
        %2111 = vmatpush1.bf16.msra.mxu0 %v2011
        %2112 = vmatprep.subr.bf16.mxu0 %v2016
        %2113 = vmatpush1.bf16.msra.mxu0 %v2015
        %2114 = vmatprep.subr.bf16.mxu0 %v2020
        %2115 = vmatpush1.bf16.msra.mxu0 %v2019
        %2116 = vmatprep.subr.bf16.mxu0 %v2024
        %2117 = vmatpush1.bf16.msra.mxu0 %v2023
        %2118 = vmatprep.subr.bf16.mxu0 %v2028
        %2119 = vmatpush1.bf16.msra.mxu0 %v2027
        %2120 = vmatprep.subr.bf16.mxu0 %v2032
        %2121 = vmatpush1.bf16.msra.mxu0 %v2031
        %2122 = vmatprep.subr.bf16.mxu0 0
        %2123 = vmatpush1.bf16.msra.mxu0 0
        %2124 = vmatprep.subr.bf16.mxu0 0
        %2125 = vmatpush1.bf16.msra.mxu0 0
        %2126 = vmatprep.subr.bf16.mxu0 0
        %2127 = vmatpush1.bf16.msra.mxu0 0
        %2128 = vmatprep.subr.bf16.mxu0 0
        %2129 = vmatpush1.bf16.msra.mxu0 0
        %2130 = vmatprep.subr.bf16.mxu0 0
        %2131 = vmatpush1.bf16.msra.mxu0 0
        %2132 = vmatprep.subr.bf16.mxu0 0
        %2133 = vmatpush1.bf16.msra.mxu0 0
        %2134 = vmatprep.subr.bf16.mxu0 0
        %2135 = vmatpush1.bf16.msra.mxu0 0
        %2136 = vmatprep.subr.bf16.mxu0 0
        %2137 = vmatpush1.bf16.msra.mxu0 0
        %2138 = vmatprep.mubr.bf16.mxu0 0
        %2139 = vmatmul.mubr.bf16.gmra.mrb[0].mxu0 %v1872
        %v2140 = vpop.f32.mrb[0].mxu0
        %v2141 = vadd.f32 0.0, %v2140
        %v2142 = vpop.f32.mrb[0].mxu0
        %v2143 = vadd.f32 0.0, %v2142
        %v2144 = vpop.f32.mrb[0].mxu0
        %v2145 = vpop.f32.mrb[0].mxu0
        %2146 = vdwg.mxu0
        %v2147 = vadd.f32 %v1867, %v2100
        %v2148 = vadd.f32 %v1868, %v2102
        %v2149 = vadd.f32 %v1869, %v2141
        %v2150 = vadd.f32 %v1870, %v2143
        %v2151 = vmul.f32 %v2147, 0.5
        %v2152 = vmul.f32 %v2148, 0.5
        %v2153 = vmul.f32 %v2149, 0.5
        %v2154 = vtanh.pop %v2151
        %v2155 = vtanh.pop %v2152
        %v2156 = vtanh.pop %v2153
        %v2157 = vmul.f32 %v2154, 0.5
        %v2158 = vmul.f32 %v2155, 0.5
        %v2159 = vmul.f32 %v2156, 0.5
        %v2160 = vadd.f32 %v2157, 0.5
        %v2161 = vadd.f32 %v2158, 0.5
        %v2162 = vadd.f32 %v2159, 0.5
        %v2163 = vtanh.pop %v2150
        %v2164 = vld [vmem:[#allocation3] sm:$0xff]
        %v2165 = vmul.f32 %v2161, %v2164
        %v2166 = vmul.f32 %v2160, %v2163
        %v2167 = vadd.f32 %v2165, %v2166
        %v2168 = vtanh.pop %v2167
        %v2169 = vmul.f32 %v2162, %v2168
        %2170 = vst [vmem:[#allocation3] sm:$0xff] %v2167
        %2171 = vst [vmem:[#allocation2] sm:$0xff] %v2169
        %v2172 = vpack.c.bf16 %v2169, %v2169
        %s2173 = smul.addr %s1861, 4
        %s2174 = scalar_lea.vmem %s259, %s2173 [#allocation5]
        %2175 = vst [vmem:[%s2174] sm:$0xf] %v2172
        %s2176 = scalar_select %p279, 1, 6
        %s2177 = smul.u32 %s2176, 4
        %s2178 = smul.addr %s2177, 4
        %s2179 = scalar_lea.vmem %s237, %s2178 [#allocation4]
        %v2180 = vld [vmem:[%s2179] sm:$0xff]
        %v2181 = vld [vmem:[%s2179 + $0x8] sm:$0xff]
        %v2182 = vunpack.c.l.bf16 %v2180
        %v2183 = vunpack.c.h.bf16 %v2180
        %v2184 = vunpack.c.l.bf16 %v2181
        %v2185 = vunpack.c.h.bf16 %v2181
        %v2186 = vld [vmem:[#allocation2] sm:$0xff]
        %v2187 = vpack.c.bf16 %v2186, %v2186
        %v2188 = vld [vmem:[%s271] sm:$0xff]
        %v2189 = vld [vmem:[%s271 + $0x8] sm:$0xff]
        %v2190 = vld [vmem:[%s271 + $0x10] sm:$0xff]
        %v2191 = vld [vmem:[%s271 + $0x18] sm:$0xff]
        %v2192 = vld [vmem:[%s271 + $0x20] sm:$0xff]
        %v2193 = vld [vmem:[%s271 + $0x28] sm:$0xff]
        %v2194 = vld [vmem:[%s271 + $0x30] sm:$0xff]
        %v2195 = vld [vmem:[%s271 + $0x38] sm:$0xff]
        %v2196 = vld [vmem:[%s271 + $0x40] sm:$0xff]
        %v2197 = vld [vmem:[%s271 + $0x48] sm:$0xff]
        %v2198 = vld [vmem:[%s271 + $0x50] sm:$0xff]
        %v2199 = vld [vmem:[%s271 + $0x58] sm:$0xff]
        %v2200 = vld [vmem:[%s271 + $0x60] sm:$0xff]
        %v2201 = vld [vmem:[%s271 + $0x68] sm:$0xff]
        %v2202 = vld [vmem:[%s271 + $0x70] sm:$0xff]
        %v2203 = vld [vmem:[%s271 + $0x78] sm:$0xff]
        %v2204 = vld [vmem:[%s271 + $0x80] sm:$0xff]
        %v2205 = vld [vmem:[%s271 + $0x88] sm:$0xff]
        %v2206 = vld [vmem:[%s271 + $0x90] sm:$0xff]
        %v2207 = vld [vmem:[%s271 + $0x98] sm:$0xff]
        %v2208 = vld [vmem:[%s271 + $0xa0] sm:$0xff]
        %v2209 = vld [vmem:[%s271 + $0xa8] sm:$0xff]
        %v2210 = vld [vmem:[%s271 + $0xb0] sm:$0xff]
        %v2211 = vld [vmem:[%s271 + $0xb8] sm:$0xff]
        %v2212 = vld [vmem:[%s271 + $0xc0] sm:$0xff]
        %v2213 = vld [vmem:[%s271 + $0xc8] sm:$0xff]
        %v2214 = vld [vmem:[%s271 + $0xd0] sm:$0xff]
        %v2215 = vld [vmem:[%s271 + $0xd8] sm:$0xff]
        %v2216 = vld [vmem:[%s271 + $0xe0] sm:$0xff]
        %v2217 = vld [vmem:[%s271 + $0xe8] sm:$0xff]
        %v2218 = vld [vmem:[%s271 + $0xf0] sm:$0xff]
        %v2219 = vld [vmem:[%s271 + $0xf8] sm:$0xff]
        %v2252 = vunpack.c.l.b16 %v2188
        %v2253 = vunpack.c.h.b16 %v2188
        %v2254 = vunpack.c.l.b16 %v2189
        %v2255 = vunpack.c.h.b16 %v2189
        %v2256 = vunpack.c.l.b16 %v2190
        %v2257 = vunpack.c.h.b16 %v2190
        %v2258 = vunpack.c.l.b16 %v2191
        %v2259 = vunpack.c.h.b16 %v2191
        %v2260 = vunpack.c.l.b16 %v2192
        %v2261 = vunpack.c.h.b16 %v2192
        %v2262 = vunpack.c.l.b16 %v2193
        %v2263 = vunpack.c.h.b16 %v2193
        %v2264 = vunpack.c.l.b16 %v2194
        %v2265 = vunpack.c.h.b16 %v2194
        %v2266 = vunpack.c.l.b16 %v2195
        %v2267 = vunpack.c.h.b16 %v2195
        %v2268 = vunpack.c.l.b16 %v2196
        %v2269 = vunpack.c.h.b16 %v2196
        %v2270 = vunpack.c.l.b16 %v2197
        %v2271 = vunpack.c.h.b16 %v2197
        %v2272 = vunpack.c.l.b16 %v2198
        %v2273 = vunpack.c.h.b16 %v2198
        %v2274 = vunpack.c.l.b16 %v2199
        %v2275 = vunpack.c.h.b16 %v2199
        %v2276 = vunpack.c.l.b16 %v2200
        %v2277 = vunpack.c.h.b16 %v2200
        %v2278 = vunpack.c.l.b16 %v2201
        %v2279 = vunpack.c.h.b16 %v2201
        %v2280 = vunpack.c.l.b16 %v2202
        %v2281 = vunpack.c.h.b16 %v2202
        %v2282 = vunpack.c.l.b16 %v2203
        %v2283 = vunpack.c.h.b16 %v2203
        %v2284 = vunpack.c.l.b16 %v2204
        %v2285 = vunpack.c.h.b16 %v2204
        %v2286 = vunpack.c.l.b16 %v2205
        %v2287 = vunpack.c.h.b16 %v2205
        %v2288 = vunpack.c.l.b16 %v2206
        %v2289 = vunpack.c.h.b16 %v2206
        %v2290 = vunpack.c.l.b16 %v2207
        %v2291 = vunpack.c.h.b16 %v2207
        %v2292 = vunpack.c.l.b16 %v2208
        %v2293 = vunpack.c.h.b16 %v2208
        %v2294 = vunpack.c.l.b16 %v2209
        %v2295 = vunpack.c.h.b16 %v2209
        %v2296 = vunpack.c.l.b16 %v2210
        %v2297 = vunpack.c.h.b16 %v2210
        %v2298 = vunpack.c.l.b16 %v2211
        %v2299 = vunpack.c.h.b16 %v2211
        %v2300 = vunpack.c.l.b16 %v2212
        %v2301 = vunpack.c.h.b16 %v2212
        %v2302 = vunpack.c.l.b16 %v2213
        %v2303 = vunpack.c.h.b16 %v2213
        %v2304 = vunpack.c.l.b16 %v2214
        %v2305 = vunpack.c.h.b16 %v2214
        %v2306 = vunpack.c.l.b16 %v2215
        %v2307 = vunpack.c.h.b16 %v2215
        %v2308 = vunpack.c.l.b16 %v2216
        %v2309 = vunpack.c.h.b16 %v2216
        %v2310 = vunpack.c.l.b16 %v2217
        %v2311 = vunpack.c.h.b16 %v2217
        %v2312 = vunpack.c.l.b16 %v2218
        %v2313 = vunpack.c.h.b16 %v2218
        %v2314 = vunpack.c.l.b16 %v2219
        %v2315 = vunpack.c.h.b16 %v2219
        %v2316 = vpack.c.b16 %v2256, %v2252
        %v2317 = vpack.c.b16 %v2257, %v2253
        %v2318 = vpack.c.b16 %v2258, %v2254
        %v2319 = vpack.c.b16 %v2259, %v2255
        %v2320 = vpack.c.b16 %v2264, %v2260
        %v2321 = vpack.c.b16 %v2265, %v2261
        %v2322 = vpack.c.b16 %v2266, %v2262
        %v2323 = vpack.c.b16 %v2267, %v2263
        %v2324 = vpack.c.b16 %v2272, %v2268
        %v2325 = vpack.c.b16 %v2273, %v2269
        %v2326 = vpack.c.b16 %v2274, %v2270
        %v2327 = vpack.c.b16 %v2275, %v2271
        %v2328 = vpack.c.b16 %v2280, %v2276
        %v2329 = vpack.c.b16 %v2281, %v2277
        %v2330 = vpack.c.b16 %v2282, %v2278
        %v2331 = vpack.c.b16 %v2283, %v2279
        %v2332 = vpack.c.b16 %v2288, %v2284
        %v2333 = vpack.c.b16 %v2289, %v2285
        %v2334 = vpack.c.b16 %v2290, %v2286
        %v2335 = vpack.c.b16 %v2291, %v2287
        %v2336 = vpack.c.b16 %v2296, %v2292
        %v2337 = vpack.c.b16 %v2297, %v2293
        %v2338 = vpack.c.b16 %v2298, %v2294
        %v2339 = vpack.c.b16 %v2299, %v2295
        %v2340 = vpack.c.b16 %v2304, %v2300
        %v2341 = vpack.c.b16 %v2305, %v2301
        %v2342 = vpack.c.b16 %v2306, %v2302
        %v2343 = vpack.c.b16 %v2307, %v2303
        %v2344 = vpack.c.b16 %v2312, %v2308
        %v2345 = vpack.c.b16 %v2313, %v2309
        %v2346 = vpack.c.b16 %v2314, %v2310
        %v2347 = vpack.c.b16 %v2315, %v2311
        %2380 = vmatprep.subr.bf16.mxu0 %v2317
        %2381 = vmatpush1.bf16.msra.mxu0 %v2316
        %2382 = vmatprep.subr.bf16.mxu0 %v2321
        %2383 = vmatpush1.bf16.msra.mxu0 %v2320
        %2384 = vmatprep.subr.bf16.mxu0 %v2325
        %2385 = vmatpush1.bf16.msra.mxu0 %v2324
        %2386 = vmatprep.subr.bf16.mxu0 %v2329
        %2387 = vmatpush1.bf16.msra.mxu0 %v2328
        %2388 = vmatprep.subr.bf16.mxu0 %v2333
        %2389 = vmatpush1.bf16.msra.mxu0 %v2332
        %2390 = vmatprep.subr.bf16.mxu0 %v2337
        %2391 = vmatpush1.bf16.msra.mxu0 %v2336
        %2392 = vmatprep.subr.bf16.mxu0 %v2341
        %2393 = vmatpush1.bf16.msra.mxu0 %v2340
        %2394 = vmatprep.subr.bf16.mxu0 %v2345
        %2395 = vmatpush1.bf16.msra.mxu0 %v2344
        %2396 = vmatprep.subr.bf16.mxu0 0
        %2397 = vmatpush1.bf16.msra.mxu0 0
        %2398 = vmatprep.subr.bf16.mxu0 0
        %2399 = vmatpush1.bf16.msra.mxu0 0
        %2400 = vmatprep.subr.bf16.mxu0 0
        %2401 = vmatpush1.bf16.msra.mxu0 0
        %2402 = vmatprep.subr.bf16.mxu0 0
        %2403 = vmatpush1.bf16.msra.mxu0 0
        %2404 = vmatprep.subr.bf16.mxu0 0
        %2405 = vmatpush1.bf16.msra.mxu0 0
        %2406 = vmatprep.subr.bf16.mxu0 0
        %2407 = vmatpush1.bf16.msra.mxu0 0
        %2408 = vmatprep.subr.bf16.mxu0 0
        %2409 = vmatpush1.bf16.msra.mxu0 0
        %2410 = vmatprep.subr.bf16.mxu0 0
        %2411 = vmatpush1.bf16.msra.mxu0 0
        %2412 = vmatprep.mubr.bf16.mxu0 0
        %2413 = vmatmul.mubr.bf16.gmra.mrb[0].mxu0 %v2187
        %v2414 = vpop.f32.mrb[0].mxu0
        %v2415 = vadd.f32 0.0, %v2414
        %v2416 = vpop.f32.mrb[0].mxu0
        %v2417 = vadd.f32 0.0, %v2416
        %v2418 = vpop.f32.mrb[0].mxu0
        %v2419 = vpop.f32.mrb[0].mxu0
        %2420 = vdwg.mxu0
        %2421 = vmatprep.subr.bf16.mxu0 %v2319
        %2422 = vmatpush1.bf16.msra.mxu0 %v2318
        %2423 = vmatprep.subr.bf16.mxu0 %v2323
        %2424 = vmatpush1.bf16.msra.mxu0 %v2322
        %2425 = vmatprep.subr.bf16.mxu0 %v2327
        %2426 = vmatpush1.bf16.msra.mxu0 %v2326
        %2427 = vmatprep.subr.bf16.mxu0 %v2331
        %2428 = vmatpush1.bf16.msra.mxu0 %v2330
        %2429 = vmatprep.subr.bf16.mxu0 %v2335
        %2430 = vmatpush1.bf16.msra.mxu0 %v2334
        %2431 = vmatprep.subr.bf16.mxu0 %v2339
        %2432 = vmatpush1.bf16.msra.mxu0 %v2338
        %2433 = vmatprep.subr.bf16.mxu0 %v2343
        %2434 = vmatpush1.bf16.msra.mxu0 %v2342
        %2435 = vmatprep.subr.bf16.mxu0 %v2347
        %2436 = vmatpush1.bf16.msra.mxu0 %v2346
        %2437 = vmatprep.subr.bf16.mxu0 0
        %2438 = vmatpush1.bf16.msra.mxu0 0
        %2439 = vmatprep.subr.bf16.mxu0 0
        %2440 = vmatpush1.bf16.msra.mxu0 0
        %2441 = vmatprep.subr.bf16.mxu0 0
        %2442 = vmatpush1.bf16.msra.mxu0 0
        %2443 = vmatprep.subr.bf16.mxu0 0
        %2444 = vmatpush1.bf16.msra.mxu0 0
        %2445 = vmatprep.subr.bf16.mxu0 0
        %2446 = vmatpush1.bf16.msra.mxu0 0
        %2447 = vmatprep.subr.bf16.mxu0 0
        %2448 = vmatpush1.bf16.msra.mxu0 0
        %2449 = vmatprep.subr.bf16.mxu0 0
        %2450 = vmatpush1.bf16.msra.mxu0 0
        %2451 = vmatprep.subr.bf16.mxu0 0
        %2452 = vmatpush1.bf16.msra.mxu0 0
        %2453 = vmatprep.mubr.bf16.mxu0 0
        %2454 = vmatmul.mubr.bf16.gmra.mrb[0].mxu0 %v2187
        %v2455 = vpop.f32.mrb[0].mxu0
        %v2456 = vadd.f32 0.0, %v2455
        %v2457 = vpop.f32.mrb[0].mxu0
        %v2458 = vadd.f32 0.0, %v2457
        %v2459 = vpop.f32.mrb[0].mxu0
        %v2460 = vpop.f32.mrb[0].mxu0
        %2461 = vdwg.mxu0
        %v2462 = vadd.f32 %v2182, %v2415
        %v2463 = vadd.f32 %v2183, %v2417
        %v2464 = vadd.f32 %v2184, %v2456
        %v2465 = vadd.f32 %v2185, %v2458
        %v2466 = vmul.f32 %v2462, 0.5
        %v2467 = vmul.f32 %v2463, 0.5
        %v2468 = vmul.f32 %v2464, 0.5
        %v2469 = vtanh.pop %v2466
        %v2470 = vtanh.pop %v2467
        %v2471 = vtanh.pop %v2468
        %v2472 = vmul.f32 %v2469, 0.5
        %v2473 = vmul.f32 %v2470, 0.5
        %v2474 = vmul.f32 %v2471, 0.5
        %v2475 = vadd.f32 %v2472, 0.5
        %v2476 = vadd.f32 %v2473, 0.5
        %v2477 = vadd.f32 %v2474, 0.5
        %v2478 = vtanh.pop %v2465
        %v2479 = vld [vmem:[#allocation3] sm:$0xff]
        %v2480 = vmul.f32 %v2476, %v2479
        %v2481 = vmul.f32 %v2475, %v2478
        %v2482 = vadd.f32 %v2480, %v2481
        %v2483 = vtanh.pop %v2482
        %v2484 = vmul.f32 %v2477, %v2483
        %2485 = vst [vmem:[#allocation3] sm:$0xff] %v2482
        %2486 = vst [vmem:[#allocation2] sm:$0xff] %v2484
        %v2487 = vpack.c.bf16 %v2484, %v2484
        %s2488 = smul.addr %s2176, 4
        %s2489 = scalar_lea.vmem %s259, %s2488 [#allocation5]
        %2490 = vst [vmem:[%s2489] sm:$0xf] %v2487
        %s2491 = scalar_select %p279, 0, 7
        %s2492 = smul.u32 %s2491, 4
        %s2493 = smul.addr %s2492, 4
        %s2494 = scalar_lea.vmem %s237, %s2493 [#allocation4]
        %v2495 = vld [vmem:[%s2494] sm:$0xff]
        %v2496 = vld [vmem:[%s2494 + $0x8] sm:$0xff]
        %v2497 = vunpack.c.l.bf16 %v2495
        %v2498 = vunpack.c.h.bf16 %v2495
        %v2499 = vunpack.c.l.bf16 %v2496
        %v2500 = vunpack.c.h.bf16 %v2496
        %v2501 = vld [vmem:[#allocation2] sm:$0xff]
        %v2502 = vpack.c.bf16 %v2501, %v2501
        %v2503 = vld [vmem:[%s271] sm:$0xff]
        %v2504 = vld [vmem:[%s271 + $0x8] sm:$0xff]
        %v2505 = vld [vmem:[%s271 + $0x10] sm:$0xff]
        %v2506 = vld [vmem:[%s271 + $0x18] sm:$0xff]
        %v2507 = vld [vmem:[%s271 + $0x20] sm:$0xff]
        %v2508 = vld [vmem:[%s271 + $0x28] sm:$0xff]
        %v2509 = vld [vmem:[%s271 + $0x30] sm:$0xff]
        %v2510 = vld [vmem:[%s271 + $0x38] sm:$0xff]
        %v2511 = vld [vmem:[%s271 + $0x40] sm:$0xff]
        %v2512 = vld [vmem:[%s271 + $0x48] sm:$0xff]
        %v2513 = vld [vmem:[%s271 + $0x50] sm:$0xff]
        %v2514 = vld [vmem:[%s271 + $0x58] sm:$0xff]
        %v2515 = vld [vmem:[%s271 + $0x60] sm:$0xff]
        %v2516 = vld [vmem:[%s271 + $0x68] sm:$0xff]
        %v2517 = vld [vmem:[%s271 + $0x70] sm:$0xff]
        %v2518 = vld [vmem:[%s271 + $0x78] sm:$0xff]
        %v2519 = vld [vmem:[%s271 + $0x80] sm:$0xff]
        %v2520 = vld [vmem:[%s271 + $0x88] sm:$0xff]
        %v2521 = vld [vmem:[%s271 + $0x90] sm:$0xff]
        %v2522 = vld [vmem:[%s271 + $0x98] sm:$0xff]
        %v2523 = vld [vmem:[%s271 + $0xa0] sm:$0xff]
        %v2524 = vld [vmem:[%s271 + $0xa8] sm:$0xff]
        %v2525 = vld [vmem:[%s271 + $0xb0] sm:$0xff]
        %v2526 = vld [vmem:[%s271 + $0xb8] sm:$0xff]
        %v2527 = vld [vmem:[%s271 + $0xc0] sm:$0xff]
        %v2528 = vld [vmem:[%s271 + $0xc8] sm:$0xff]
        %v2529 = vld [vmem:[%s271 + $0xd0] sm:$0xff]
        %v2530 = vld [vmem:[%s271 + $0xd8] sm:$0xff]
        %v2531 = vld [vmem:[%s271 + $0xe0] sm:$0xff]
        %v2532 = vld [vmem:[%s271 + $0xe8] sm:$0xff]
        %v2533 = vld [vmem:[%s271 + $0xf0] sm:$0xff]
        %v2534 = vld [vmem:[%s271 + $0xf8] sm:$0xff]
        %v2567 = vunpack.c.l.b16 %v2503
        %v2568 = vunpack.c.h.b16 %v2503
        %v2569 = vunpack.c.l.b16 %v2504
        %v2570 = vunpack.c.h.b16 %v2504
        %v2571 = vunpack.c.l.b16 %v2505
        %v2572 = vunpack.c.h.b16 %v2505
        %v2573 = vunpack.c.l.b16 %v2506
        %v2574 = vunpack.c.h.b16 %v2506
        %v2575 = vunpack.c.l.b16 %v2507
        %v2576 = vunpack.c.h.b16 %v2507
        %v2577 = vunpack.c.l.b16 %v2508
        %v2578 = vunpack.c.h.b16 %v2508
        %v2579 = vunpack.c.l.b16 %v2509
        %v2580 = vunpack.c.h.b16 %v2509
        %v2581 = vunpack.c.l.b16 %v2510
        %v2582 = vunpack.c.h.b16 %v2510
        %v2583 = vunpack.c.l.b16 %v2511
        %v2584 = vunpack.c.h.b16 %v2511
        %v2585 = vunpack.c.l.b16 %v2512
        %v2586 = vunpack.c.h.b16 %v2512
        %v2587 = vunpack.c.l.b16 %v2513
        %v2588 = vunpack.c.h.b16 %v2513
        %v2589 = vunpack.c.l.b16 %v2514
        %v2590 = vunpack.c.h.b16 %v2514
        %v2591 = vunpack.c.l.b16 %v2515
        %v2592 = vunpack.c.h.b16 %v2515
        %v2593 = vunpack.c.l.b16 %v2516
        %v2594 = vunpack.c.h.b16 %v2516
        %v2595 = vunpack.c.l.b16 %v2517
        %v2596 = vunpack.c.h.b16 %v2517
        %v2597 = vunpack.c.l.b16 %v2518
        %v2598 = vunpack.c.h.b16 %v2518
        %v2599 = vunpack.c.l.b16 %v2519
        %v2600 = vunpack.c.h.b16 %v2519
        %v2601 = vunpack.c.l.b16 %v2520
        %v2602 = vunpack.c.h.b16 %v2520
        %v2603 = vunpack.c.l.b16 %v2521
        %v2604 = vunpack.c.h.b16 %v2521
        %v2605 = vunpack.c.l.b16 %v2522
        %v2606 = vunpack.c.h.b16 %v2522
        %v2607 = vunpack.c.l.b16 %v2523
        %v2608 = vunpack.c.h.b16 %v2523
        %v2609 = vunpack.c.l.b16 %v2524
        %v2610 = vunpack.c.h.b16 %v2524
        %v2611 = vunpack.c.l.b16 %v2525
        %v2612 = vunpack.c.h.b16 %v2525
        %v2613 = vunpack.c.l.b16 %v2526
        %v2614 = vunpack.c.h.b16 %v2526
        %v2615 = vunpack.c.l.b16 %v2527
        %v2616 = vunpack.c.h.b16 %v2527
        %v2617 = vunpack.c.l.b16 %v2528
        %v2618 = vunpack.c.h.b16 %v2528
        %v2619 = vunpack.c.l.b16 %v2529
        %v2620 = vunpack.c.h.b16 %v2529
        %v2621 = vunpack.c.l.b16 %v2530
        %v2622 = vunpack.c.h.b16 %v2530
        %v2623 = vunpack.c.l.b16 %v2531
        %v2624 = vunpack.c.h.b16 %v2531
        %v2625 = vunpack.c.l.b16 %v2532
        %v2626 = vunpack.c.h.b16 %v2532
        %v2627 = vunpack.c.l.b16 %v2533
        %v2628 = vunpack.c.h.b16 %v2533
        %v2629 = vunpack.c.l.b16 %v2534
        %v2630 = vunpack.c.h.b16 %v2534
        %v2631 = vpack.c.b16 %v2571, %v2567
        %v2632 = vpack.c.b16 %v2572, %v2568
        %v2633 = vpack.c.b16 %v2573, %v2569
        %v2634 = vpack.c.b16 %v2574, %v2570
        %v2635 = vpack.c.b16 %v2579, %v2575
        %v2636 = vpack.c.b16 %v2580, %v2576
        %v2637 = vpack.c.b16 %v2581, %v2577
        %v2638 = vpack.c.b16 %v2582, %v2578
        %v2639 = vpack.c.b16 %v2587, %v2583
        %v2640 = vpack.c.b16 %v2588, %v2584
        %v2641 = vpack.c.b16 %v2589, %v2585
        %v2642 = vpack.c.b16 %v2590, %v2586
        %v2643 = vpack.c.b16 %v2595, %v2591
        %v2644 = vpack.c.b16 %v2596, %v2592
        %v2645 = vpack.c.b16 %v2597, %v2593
        %v2646 = vpack.c.b16 %v2598, %v2594
        %v2647 = vpack.c.b16 %v2603, %v2599
        %v2648 = vpack.c.b16 %v2604, %v2600
        %v2649 = vpack.c.b16 %v2605, %v2601
        %v2650 = vpack.c.b16 %v2606, %v2602
        %v2651 = vpack.c.b16 %v2611, %v2607
        %v2652 = vpack.c.b16 %v2612, %v2608
        %v2653 = vpack.c.b16 %v2613, %v2609
        %v2654 = vpack.c.b16 %v2614, %v2610
        %v2655 = vpack.c.b16 %v2619, %v2615
        %v2656 = vpack.c.b16 %v2620, %v2616
        %v2657 = vpack.c.b16 %v2621, %v2617
        %v2658 = vpack.c.b16 %v2622, %v2618
        %v2659 = vpack.c.b16 %v2627, %v2623
        %v2660 = vpack.c.b16 %v2628, %v2624
        %v2661 = vpack.c.b16 %v2629, %v2625
        %v2662 = vpack.c.b16 %v2630, %v2626
        %2695 = vmatprep.subr.bf16.mxu0 %v2632
        %2696 = vmatpush1.bf16.msra.mxu0 %v2631
        %2697 = vmatprep.subr.bf16.mxu0 %v2636
        %2698 = vmatpush1.bf16.msra.mxu0 %v2635
        %2699 = vmatprep.subr.bf16.mxu0 %v2640
        %2700 = vmatpush1.bf16.msra.mxu0 %v2639
        %2701 = vmatprep.subr.bf16.mxu0 %v2644
        %2702 = vmatpush1.bf16.msra.mxu0 %v2643
        %2703 = vmatprep.subr.bf16.mxu0 %v2648
        %2704 = vmatpush1.bf16.msra.mxu0 %v2647
        %2705 = vmatprep.subr.bf16.mxu0 %v2652
        %2706 = vmatpush1.bf16.msra.mxu0 %v2651
        %2707 = vmatprep.subr.bf16.mxu0 %v2656
        %2708 = vmatpush1.bf16.msra.mxu0 %v2655
        %2709 = vmatprep.subr.bf16.mxu0 %v2660
        %2710 = vmatpush1.bf16.msra.mxu0 %v2659
        %2711 = vmatprep.subr.bf16.mxu0 0
        %2712 = vmatpush1.bf16.msra.mxu0 0
        %2713 = vmatprep.subr.bf16.mxu0 0
        %2714 = vmatpush1.bf16.msra.mxu0 0
        %2715 = vmatprep.subr.bf16.mxu0 0
        %2716 = vmatpush1.bf16.msra.mxu0 0
        %2717 = vmatprep.subr.bf16.mxu0 0
        %2718 = vmatpush1.bf16.msra.mxu0 0
        %2719 = vmatprep.subr.bf16.mxu0 0
        %2720 = vmatpush1.bf16.msra.mxu0 0
        %2721 = vmatprep.subr.bf16.mxu0 0
        %2722 = vmatpush1.bf16.msra.mxu0 0
        %2723 = vmatprep.subr.bf16.mxu0 0
        %2724 = vmatpush1.bf16.msra.mxu0 0
        %2725 = vmatprep.subr.bf16.mxu0 0
        %2726 = vmatpush1.bf16.msra.mxu0 0
        %2727 = vmatprep.mubr.bf16.mxu0 0
        %2728 = vmatmul.mubr.bf16.gmra.mrb[0].mxu0 %v2502
        %v2729 = vpop.f32.mrb[0].mxu0
        %v2730 = vadd.f32 0.0, %v2729
        %v2731 = vpop.f32.mrb[0].mxu0
        %v2732 = vadd.f32 0.0, %v2731
        %v2733 = vpop.f32.mrb[0].mxu0
        %v2734 = vpop.f32.mrb[0].mxu0
        %2735 = vdwg.mxu0
        %2736 = vmatprep.subr.bf16.mxu0 %v2634
        %2737 = vmatpush1.bf16.msra.mxu0 %v2633
        %2738 = vmatprep.subr.bf16.mxu0 %v2638
        %2739 = vmatpush1.bf16.msra.mxu0 %v2637
        %2740 = vmatprep.subr.bf16.mxu0 %v2642
        %2741 = vmatpush1.bf16.msra.mxu0 %v2641
        %2742 = vmatprep.subr.bf16.mxu0 %v2646
        %2743 = vmatpush1.bf16.msra.mxu0 %v2645
        %2744 = vmatprep.subr.bf16.mxu0 %v2650
        %2745 = vmatpush1.bf16.msra.mxu0 %v2649
        %2746 = vmatprep.subr.bf16.mxu0 %v2654
        %2747 = vmatpush1.bf16.msra.mxu0 %v2653
        %2748 = vmatprep.subr.bf16.mxu0 %v2658
        %2749 = vmatpush1.bf16.msra.mxu0 %v2657
        %2750 = vmatprep.subr.bf16.mxu0 %v2662
        %2751 = vmatpush1.bf16.msra.mxu0 %v2661
        %2752 = vmatprep.subr.bf16.mxu0 0
        %2753 = vmatpush1.bf16.msra.mxu0 0
        %2754 = vmatprep.subr.bf16.mxu0 0
        %2755 = vmatpush1.bf16.msra.mxu0 0
        %2756 = vmatprep.subr.bf16.mxu0 0
        %2757 = vmatpush1.bf16.msra.mxu0 0
        %2758 = vmatprep.subr.bf16.mxu0 0
        %2759 = vmatpush1.bf16.msra.mxu0 0
        %2760 = vmatprep.subr.bf16.mxu0 0
        %2761 = vmatpush1.bf16.msra.mxu0 0
        %2762 = vmatprep.subr.bf16.mxu0 0
        %2763 = vmatpush1.bf16.msra.mxu0 0
        %2764 = vmatprep.subr.bf16.mxu0 0
        %2765 = vmatpush1.bf16.msra.mxu0 0
        %2766 = vmatprep.subr.bf16.mxu0 0
        %2767 = vmatpush1.bf16.msra.mxu0 0
        %2768 = vmatprep.mubr.bf16.mxu0 0
        %2769 = vmatmul.mubr.bf16.gmra.mrb[0].mxu0 %v2502
        %v2770 = vpop.f32.mrb[0].mxu0
        %v2771 = vadd.f32 0.0, %v2770
        %v2772 = vpop.f32.mrb[0].mxu0
        %v2773 = vadd.f32 0.0, %v2772
        %v2774 = vpop.f32.mrb[0].mxu0
        %v2775 = vpop.f32.mrb[0].mxu0
        %2776 = vdwg.mxu0
        %v2777 = vadd.f32 %v2497, %v2730
        %v2778 = vadd.f32 %v2498, %v2732
        %v2779 = vadd.f32 %v2499, %v2771
        %v2780 = vadd.f32 %v2500, %v2773
        %v2781 = vmul.f32 %v2777, 0.5
        %v2782 = vmul.f32 %v2778, 0.5
        %v2783 = vmul.f32 %v2779, 0.5
        %v2784 = vtanh.pop %v2781
        %v2785 = vtanh.pop %v2782
        %v2786 = vtanh.pop %v2783
        %v2787 = vmul.f32 %v2784, 0.5
        %v2788 = vmul.f32 %v2785, 0.5
        %v2789 = vmul.f32 %v2786, 0.5
        %v2790 = vadd.f32 %v2787, 0.5
        %v2791 = vadd.f32 %v2788, 0.5
        %v2792 = vadd.f32 %v2789, 0.5
        %v2793 = vtanh.pop %v2780
        %v2794 = vld [vmem:[#allocation3] sm:$0xff]
        %v2795 = vmul.f32 %v2791, %v2794
        %v2796 = vmul.f32 %v2790, %v2793
        %v2797 = vadd.f32 %v2795, %v2796
        %v2798 = vtanh.pop %v2797
        %v2799 = vmul.f32 %v2792, %v2798
        %2800 = vst [vmem:[#allocation3] sm:$0xff] %v2797
        %2801 = vst [vmem:[#allocation2] sm:$0xff] %v2799
        %v2802 = vpack.c.bf16 %v2799, %v2799
        %s2803 = smul.addr %s2491, 4
        %s2804 = scalar_lea.vmem %s259, %s2803 [#allocation5]
        %2805 = vst [vmem:[%s2804] sm:$0xf] %v2802
        %s2806 = sand.u32 %s120, 1
        %s2807 = sand.u32 %s120, 1
        %s2808 = smul.addr %s2807, 32
        %s2809 = scalar_lea.vmem [#allocation5], %s2808
        // Predicated region
        $region56: #{bidirectional_lstm_forward.4} parent=46 // pred_check
          %p2810 = pneg %p130
        $region57: #{bidirectional_lstm_forward.4} parent=46 // pred_check_branch
          %2812 = sbr.rel (%p2810) target = $region59
        $region58: #{bidirectional_lstm_forward.4} parent=46 // pred_region
          %s2813 = ssub.s32 1, %s18
          %s2814 = smul.u32 %s2813, %s20
          %s2815 = ssub.s32 0, %s20
          %s2816 = smul.u32 %s18, %s2815
          %s2817 = sadd.s32 %s2814, %s2816
          %s2818 = smul.u32 8, %s2817
          %s2819 = smul.addr %s19, 2
          %s2820 = sadd.s32 %s18, %s2819
          %s2821 = smul.addr %s2818, 2
          %s2822 = sadd.s32 %s2820, %s2821
          %s2823 = smul.addr %s2822, 4
          %s2824 = scalar_lea.vmem %s2, %s2823
          // Predicated region
          $region60: #{bidirectional_lstm_forward.4} parent=58 // pred_check
            _
          $region61: #{bidirectional_lstm_forward.4} parent=58 // pred_check_branch
            %2826 = sbr.rel (0) target = $region63
          $region62: #{bidirectional_lstm_forward.4} parent=58 // pred_region
            // Predicated region
            $region64: #{bidirectional_lstm_forward.4} parent=62 // pred_check
              _
            $region65: #{bidirectional_lstm_forward.4} parent=62 // pred_check_branch
              %2828 = sbr.rel target = $region67
            $region66: #{bidirectional_lstm_forward.4} parent=62 // pred_region
              // Predicated region
              $region79: #{bidirectional_lstm_forward.4} parent=66 // pred_check
                _
              $region80: #{bidirectional_lstm_forward.4} parent=66 // pred_check_branch
                %2857 = sbr.rel (0) target = $region82
              $region81: #{bidirectional_lstm_forward.4} parent=66 // pred_region
                loop: start=0, step=1, limit=1
                $region83: #{bidirectional_lstm_forward.4} parent=81 // loop_pre_header
                  _
                $region84: #{bidirectional_lstm_forward.4} parent=81 // loop_header
                  %s2859 = sphi 0, %s2863
                  %p2860 = scmp.ge.s32.totalorder %s2859, 1
                  %s2864 = sphi %s2809, %s2809
                  %s2865 = sphi %s2824, %s2824
                $region85: #{bidirectional_lstm_forward.4} parent=81 // loop_header_branch
                  %2862 = sbr.rel (%p2860) target = $region89
                $region86: #{bidirectional_lstm_forward.4} parent=81 // loop_body
                  _
                $region87: #{bidirectional_lstm_forward.4} parent=81 // loop_footer
                  %s2863 = sadd.s32 1, %s2859
                $region88: #{bidirectional_lstm_forward.4} parent=81 // loop_footer_branch
                  %2858 = sbr.rel target = $region84
                $region89: #{bidirectional_lstm_forward.4} parent=81 // loop_exit
                  _
                loop: start=0, step=1, limit=1
                $region90: #{bidirectional_lstm_forward.4} parent=81 // loop_pre_header
                  _
                $region91: #{bidirectional_lstm_forward.4} parent=81 // loop_header
                  %s2868 = sphi 0, %s2872
                  %p2869 = scmp.ge.s32.totalorder %s2868, 1
                  %s2873 = sphi %s2809, %s2809
                  %s2874 = sphi %s2824, %s2824
                $region92: #{bidirectional_lstm_forward.4} parent=81 // loop_header_branch
                  %2871 = sbr.rel (%p2869) target = $region96
                $region93: #{bidirectional_lstm_forward.4} parent=81 // loop_body
                  %v2875 = vld [vmem:[%s2873] sm:$0xf]
                  %2876 = vst [vmem:[%s2874] sm:$0xf] %v2875
                  %v2877 = vld [vmem:[%s2873 + $0x4] sm:$0xf]
                  %2878 = vst [vmem:[%s2874 + $0x8] sm:$0xf] %v2877
                  %v2879 = vld [vmem:[%s2873 + $0x8] sm:$0xf]
                  %2880 = vst [vmem:[%s2874 + $0x10] sm:$0xf] %v2879
                  %v2881 = vld [vmem:[%s2873 + $0xc] sm:$0xf]
                  %2882 = vst [vmem:[%s2874 + $0x18] sm:$0xf] %v2881
                  %v2883 = vld [vmem:[%s2873 + $0x10] sm:$0xf]
                  %2884 = vst [vmem:[%s2874 + $0x20] sm:$0xf] %v2883
                  %v2885 = vld [vmem:[%s2873 + $0x14] sm:$0xf]
                  %2886 = vst [vmem:[%s2874 + $0x28] sm:$0xf] %v2885
                  %v2887 = vld [vmem:[%s2873 + $0x18] sm:$0xf]
                  %2888 = vst [vmem:[%s2874 + $0x30] sm:$0xf] %v2887
                  %v2889 = vld [vmem:[%s2873 + $0x1c] sm:$0xf]
                  %2890 = vst [vmem:[%s2874 + $0x38] sm:$0xf] %v2889
                $region94: #{bidirectional_lstm_forward.4} parent=81 // loop_footer
                  %s2872 = sadd.s32 1, %s2868
                $region95: #{bidirectional_lstm_forward.4} parent=81 // loop_footer_branch
                  %2867 = sbr.rel target = $region91
                $region96: #{bidirectional_lstm_forward.4} parent=81 // loop_exit
                  _
              $region82: #{bidirectional_lstm_forward.4} parent=66 // pred_fallthru
                _
            $region67: #{bidirectional_lstm_forward.4} parent=62 // pred_fallthru
              _
            // Predicated region
            $region68: #{bidirectional_lstm_forward.4} parent=62 // pred_check
              _
            $region69: #{bidirectional_lstm_forward.4} parent=62 // pred_check_branch
              %2830 = sbr.rel (0) target = $region71
            $region70: #{bidirectional_lstm_forward.4} parent=62 // pred_region
              loop: start=0, step=1, limit=1
              $region72: #{bidirectional_lstm_forward.4} parent=70 // loop_pre_header
                _
              $region73: #{bidirectional_lstm_forward.4} parent=70 // loop_header
                %s2833 = sphi 0, %s2837
                %p2834 = scmp.ge.s32.totalorder %s2833, 1
                %s2838 = sphi %s2809, %s2809
                %s2839 = sphi %s2824, %s2824
              $region74: #{bidirectional_lstm_forward.4} parent=70 // loop_header_branch
                %2836 = sbr.rel (%p2834) target = $region78
              $region75: #{bidirectional_lstm_forward.4} parent=70 // loop_body
                %v2840 = vld [vmem:[%s2838] sm:$0xf]
                %2841 = vst [vmem:[%s2839] sm:$0xf] %v2840
                %v2842 = vld [vmem:[%s2838 + $0x4] sm:$0xf]
                %2843 = vst [vmem:[%s2839 + $0x8] sm:$0xf] %v2842
                %v2844 = vld [vmem:[%s2838 + $0x8] sm:$0xf]
                %2845 = vst [vmem:[%s2839 + $0x10] sm:$0xf] %v2844
                %v2846 = vld [vmem:[%s2838 + $0xc] sm:$0xf]
                %2847 = vst [vmem:[%s2839 + $0x18] sm:$0xf] %v2846
                %v2848 = vld [vmem:[%s2838 + $0x10] sm:$0xf]
                %2849 = vst [vmem:[%s2839 + $0x20] sm:$0xf] %v2848
                %v2850 = vld [vmem:[%s2838 + $0x14] sm:$0xf]
                %2851 = vst [vmem:[%s2839 + $0x28] sm:$0xf] %v2850
                %v2852 = vld [vmem:[%s2838 + $0x18] sm:$0xf]
                %2853 = vst [vmem:[%s2839 + $0x30] sm:$0xf] %v2852
                %v2854 = vld [vmem:[%s2838 + $0x1c] sm:$0xf]
                %2855 = vst [vmem:[%s2839 + $0x38] sm:$0xf] %v2854
              $region76: #{bidirectional_lstm_forward.4} parent=70 // loop_footer
                %s2837 = sadd.s32 1, %s2833
              $region77: #{bidirectional_lstm_forward.4} parent=70 // loop_footer_branch
                %2832 = sbr.rel target = $region73
              $region78: #{bidirectional_lstm_forward.4} parent=70 // loop_exit
                _
            $region71: #{bidirectional_lstm_forward.4} parent=62 // pred_fallthru
              _
          $region63: #{bidirectional_lstm_forward.4} parent=58 // pred_fallthru
            _
          %2891 = vnop
        $region59: #{bidirectional_lstm_forward.4} parent=46 // pred_fallthru
          _
      $region47: #{bidirectional_lstm_forward.4} parent=5 // pred_fallthru
        _
      %p2892 = scmp.le.s32.totalorder 2, %s8
      // Predicated region
      $region97: #{bidirectional_lstm_forward.4} parent=5 // pred_check
        %p2893 = pneg %p2892
      $region98: #{bidirectional_lstm_forward.4} parent=5 // pred_check_branch
        %2895 = sbr.rel (%p2893) target = $region100
      $region99: #{bidirectional_lstm_forward.4} parent=5 // pred_region
        %s2896 = ssub.s32 %s8, 2
        // Predicated region
        $region101: #{bidirectional_lstm_forward.4} parent=99 // pred_check
          %p2897 = pneg %p136
        $region102: #{bidirectional_lstm_forward.4} parent=99 // pred_check_branch
          %2899 = sbr.rel (%p2897) target = $region104
        $region103: #{bidirectional_lstm_forward.4} parent=99 // pred_region
          %s2900 = sand.u32 %s121, 1
          %s2901 = sand.u32 %s121, 1
          %s2902 = smul.addr %s2901, 32
          %s2903 = scalar_lea.vmem [#allocation5], %s2902
        $region104: #{bidirectional_lstm_forward.4} parent=99 // pred_fallthru
          _
      $region100: #{bidirectional_lstm_forward.4} parent=5 // pred_fallthru
        _
    $region6: #{bidirectional_lstm_forward.4} parent=1 // loop_footer
      %s12 = sadd.s32 1, %s8
    $region7: #{bidirectional_lstm_forward.4} parent=1 // loop_footer_branch
      %7 = sbr.rel target = $region3
    $region8: #{bidirectional_lstm_forward.4} parent=1 // loop_exit
      _

</llo_original>
